<compile_context>
chip_gen: v7x
topology: tpu7x:2x2x1
jax: 0.10.0
libtpu: 0.0.40
codegen_flags: <defaults>
</compile_context>

<pallas_src>
import functools

import jax
import jax.numpy as jnp
from jax.experimental import pallas as pl
from jax.experimental.pallas import tpu as pltpu


# ----------------------------------------------------------------------------------
# Fused DownBlock kernel (one batch element per grid step).
# ----------------------------------------------------------------------------------
def _downblock_kernel(x_ref, w1_ref, s1_ref, b1_ref, w2_ref, s2_ref, b2_ref,
                      pool_ref, skip_ref, xpad_ref, h1pad_ref, *, H, W):
    # x_ref:    (1, H, W, Cin)      bf16 activation tile (one batch element)
    # w1_ref:   (9*Cin, C1)         bf16 packed im2col weights, conv1
    # s1/b1:    (1, C1)             f32 folded BN scale / bias, conv1
    # w2_ref:   (9*C1, Cout)        bf16 packed im2col weights, conv2
    # s2/b2:    (1, Cout)           f32 folded BN scale / bias, conv2
    # pool_ref: (1, H//2, W//2, Cout) f32 output (MaxPool2d(2) of skip)
    # skip_ref: (1, H, W, Cout)     f32 output (pre-pool activation)
    # xpad_ref: (H+2, W+2, Cin)     bf16 VMEM scratch (halo-padded input)
    # h1pad_ref:(H+2, W+2, C1)      bf16 VMEM scratch (halo-padded conv1 output)
    Cin = x_ref.shape[-1]
    C1 = w1_ref.shape[-1]
    Cout = w2_ref.shape[-1]

    # ---- in-kernel zero padding (no XLA pad op / extra HBM pass) ------------------
    xpad_ref[...] = jnp.zeros_like(xpad_ref)
    xpad_ref[pl.ds(1, H), pl.ds(1, W), :] = x_ref[0].astype(jnp.bfloat16)

    def conv_bn_relu(padded, w, scale, bias, c_in):
        # padded: (H+2, W+2, c_in) bf16 value.  Build im2col (H*W, 9*c_in) and do
        # a single wide-K MXU matmul with f32 accumulation.
        cols = jnp.concatenate(
            [padded[dy:dy + H, dx:dx + W, :].reshape(H * W, c_in)
             for dy in range(3) for dx in range(3)],
            axis=-1)                                                  # (H*W, 9*c_in) bf16
        acc = jnp.dot(cols, w, preferred_element_type=jnp.float32)   # (H*W, c_out) f32
        return jnp.maximum(acc * scale + bias, 0.0)                  # BN + ReLU in f32

    # ---- conv1 + BN + ReLU --------------------------------------------------------
    h1 = conv_bn_relu(xpad_ref[...], w1_ref[...], s1_ref[...], b1_ref[...], Cin)

    h1pad_ref[...] = jnp.zeros_like(h1pad_ref)
    h1pad_ref[pl.ds(1, H), pl.ds(1, W), :] = h1.reshape(H, W, C1).astype(jnp.bfloat16)

    # ---- conv2 + BN + ReLU --------------------------------------------------------
    skip = conv_bn_relu(h1pad_ref[...], w2_ref[...], s2_ref[...], b2_ref[...], C1)
    skip_ref[0] = skip.reshape(H, W, Cout)

    # ---- MaxPool2d(2), fused (no extra HBM roundtrip) -----------------------------
    m_h = jnp.max(skip.reshape(H // 2, 2, W, Cout), axis=1)          # pool rows
    pooled = jnp.max(m_h.reshape(H // 2, W // 2, 2, Cout), axis=2)   # pool cols
    pool_ref[0] = pooled


def downblock_forward(params, x_nchw):
    """DownBlock.forward(x) -> (pooled, skip), NCHW in / NCHW out."""
    B, Cin, H, W = x_nchw.shape
    assert H % 2 == 0 and W % 2 == 0
    C1 = params["c1"]["w"].shape[-1]
    Cout = params["c2"]["w"].shape[-1]

    # NCHW -> NHWC (channels on lanes) and bf16 operands for the MXU.
    x = jnp.transpose(x_nchw, (0, 2, 3, 1)).astype(jnp.bfloat16)

    kernel = functools.partial(_downblock_kernel, H=H, W=W)
    pooled, skip = pl.pallas_call(
        kernel,
        out_shape=(
            jax.ShapeDtypeStruct((B, H // 2, W // 2, Cout), jnp.float32),
            jax.ShapeDtypeStruct((B, H, W, Cout), jnp.float32),
        ),
        grid=(B,),
        in_specs=[
            pl.BlockSpec((1, H, W, Cin), lambda b: (b, 0, 0, 0)),
            pl.BlockSpec((9 * Cin, C1), lambda b: (0, 0)),
            pl.BlockSpec((1, C1), lambda b: (0, 0)),
            pl.BlockSpec((1, C1), lambda b: (0, 0)),
            pl.BlockSpec((9 * C1, Cout), lambda b: (0, 0)),
            pl.BlockSpec((1, Cout), lambda b: (0, 0)),
            pl.BlockSpec((1, Cout), lambda b: (0, 0)),
        ],
        out_specs=(
            pl.BlockSpec((1, H // 2, W // 2, Cout), lambda b: (b, 0, 0, 0)),
            pl.BlockSpec((1, H, W, Cout), lambda b: (b, 0, 0, 0)),
        ),
        scratch_shapes=[
            pltpu.VMEM((H + 2, W + 2, Cin), jnp.bfloat16),
            pltpu.VMEM((H + 2, W + 2, C1), jnp.bfloat16),
        ],
        compiler_params=pltpu.CompilerParams(
            dimension_semantics=("parallel",),          # independent batch steps (megacore on v7x)
            vmem_limit_bytes=32 * 1024 * 1024,          # explicit budget, portable to v7x's 64 MiB VMEM
        ),
    )(x,
      params["c1"]["w"], params["c1"]["scale"], params["c1"]["bias"],
      params["c2"]["w"], params["c2"]["scale"], params["c2"]["bias"])

    return (jnp.transpose(pooled, (0, 3, 1, 2)),   # -> NCHW
            jnp.transpose(skip, (0, 3, 1, 2)))     # -> NCHW


# ----------------------------------------------------------------------------------
# Parameters (deterministic synthetic), BN folded for eval mode.
# ----------------------------------------------------------------------------------
def make_convbnrelu_params(key, in_c, out_c, eps=1e-5):
    k_w, k_g, k_b, k_m = jax.random.split(key, 4)
    # PyTorch Conv2d weight is (out_c, in_c, kh, kw); repack to im2col (9*in_c, out_c).
    w_oihw = 0.1 * jax.random.normal(k_w, (out_c, in_c, 3, 3), jnp.float32)
    w_hwio = jnp.transpose(w_oihw, (2, 3, 1, 0))                    # (3, 3, in_c, out_c)
    gamma = 1.0 + 0.05 * jax.random.normal(k_g, (out_c,), jnp.float32)
    beta = 0.05 * jax.random.normal(k_b, (out_c,), jnp.float32)
    running_mean = 0.05 * jax.random.normal(k_m, (out_c,), jnp.float32)
    running_var = jnp.ones((out_c,), jnp.float32)
    scale = gamma / jnp.sqrt(running_var + eps)
    bias = beta - running_mean * scale
    return {
        "w": w_hwio.reshape(9 * in_c, out_c).astype(jnp.bfloat16),  # packed, bf16 (MXU operand)
        "w_hwio": w_hwio,                                           # f32, reference only
        "scale": scale.reshape(1, out_c).astype(jnp.float32),
        "bias": bias.reshape(1, out_c).astype(jnp.float32),
    }


# ----------------------------------------------------------------------------------
# Plain-JAX reference (same bf16 operand rounding as the kernel, f32 accumulation).
# ----------------------------------------------------------------------------------
def _conv_bn_relu_ref(x_nhwc, w_hwio, scale, bias):
    y = jax.lax.conv_general_dilated(
        x_nhwc, w_hwio, window_strides=(1, 1), padding="SAME",
        dimension_numbers=("NHWC", "HWIO", "NHWC"),
        precision=jax.lax.Precision.HIGHEST)
    return jnp.maximum(y * scale[None, None, None, :] + bias[None, None, None, :], 0.0)


def downblock_ref(params, x_nchw):
    x = jnp.transpose(x_nchw, (0, 2, 3, 1))
    xb = x.astype(jnp.bfloat16).astype(jnp.float32)
    w1 = params["c1"]["w_hwio"].astype(jnp.bfloat16).astype(jnp.float32)
    w2 = params["c2"]["w_hwio"].astype(jnp.bfloat16).astype(jnp.float32)
    h = _conv_bn_relu_ref(xb, w1, params["c1"]["scale"][0], params["c1"]["bias"][0])
    h = h.astype(jnp.bfloat16).astype(jnp.float32)
    skip = _conv_bn_relu_ref(h, w2, params["c2"]["scale"][0], params["c2"]["bias"][0])
    B, H, W, C = skip.shape
    pooled = skip.reshape(B, H // 2, 2, W // 2, 2, C).max(axis=(2, 4))
    return (jnp.transpose(pooled, (0, 3, 1, 2)),
            jnp.transpose(skip, (0, 3, 1, 2)))


if __name__ == "__main__":
    key = jax.random.PRNGKey(0)
    k_x, k_p1, k_p2 = jax.random.split(key, 3)

    B, in_c, out_c, H, W = 2, 4, 8, 16, 16
    x = jax.random.normal(k_x, (B, in_c, H, W), jnp.float32)   # NCHW, like PyTorch

    params = {
        "c1": make_convbnrelu_params(k_p1, in_c, out_c),
        "c2": make_convbnrelu_params(k_p2, out_c, out_c),
    }

    pooled, skip = jax.jit(downblock_forward)(params, x)
    pooled, skip = jax.block_until_ready((pooled, skip))
    assert pooled.shape == (B, out_c, H // 2, W // 2), pooled.shape
    assert skip.shape == (B, out_c, H, W), skip.shape

    pooled_ref, skip_ref = downblock_ref(params, x)
    err_skip = jnp.max(jnp.abs(skip - skip_ref))
    err_pool = jnp.max(jnp.abs(pooled - pooled_ref))
    assert err_skip < 1e-2, err_skip
    assert err_pool < 1e-2, err_pool

    print("KERNEL_OK")
</pallas_src>

<mosaic_0001>
module attributes {stable_mosaic.version = 11 : i64} {
  func.func @_downblock_kernel(%arg0: i32, %arg1: memref<1x16x16x4xbf16, #tpu.memory_space<vmem>>, %arg2: memref<36x8xbf16, #tpu.memory_space<vmem>>, %arg3: memref<1x8xf32, #tpu.memory_space<vmem>>, %arg4: memref<1x8xf32, #tpu.memory_space<vmem>>, %arg5: memref<72x8xbf16, #tpu.memory_space<vmem>>, %arg6: memref<1x8xf32, #tpu.memory_space<vmem>>, %arg7: memref<1x8xf32, #tpu.memory_space<vmem>>, %arg8: memref<1x8x8x8xf32, #tpu.memory_space<vmem>>, %arg9: memref<1x16x16x8xf32, #tpu.memory_space<vmem>>, %arg10: memref<18x18x4xbf16, #tpu.memory_space<vmem>>, %arg11: memref<18x18x8xbf16, #tpu.memory_space<vmem>>) attributes {dimension_semantics = [#tpu.dimension_semantics<parallel>], iteration_bounds = array<i64: 2>, scalar_prefetch = 0 : i64, scratch_operands = 2 : i64, tpu.core_type = #tpu.core_type<tc>, window_params = [{transform_indices = @transform_0, window_bounds = array<i64: 1, 16, 16, 4>}, {pipeline_mode = #tpu.pipeline_mode<synchronous>, transform_indices = @transform_1, window_bounds = array<i64: 36, 8>}, {pipeline_mode = #tpu.pipeline_mode<synchronous>, transform_indices = @transform_2, window_bounds = array<i64: 1, 8>}, {pipeline_mode = #tpu.pipeline_mode<synchronous>, transform_indices = @transform_3, window_bounds = array<i64: 1, 8>}, {pipeline_mode = #tpu.pipeline_mode<synchronous>, transform_indices = @transform_4, window_bounds = array<i64: 72, 8>}, {pipeline_mode = #tpu.pipeline_mode<synchronous>, transform_indices = @transform_5, window_bounds = array<i64: 1, 8>}, {pipeline_mode = #tpu.pipeline_mode<synchronous>, transform_indices = @transform_6, window_bounds = array<i64: 1, 8>}, {transform_indices = @transform_7, window_bounds = array<i64: 1, 8, 8, 8>}, {transform_indices = @transform_8, window_bounds = array<i64: 1, 16, 16, 8>}]} {
    %cst = arith.constant 0.000000e+00 : bf16
    %0 = vector.broadcast %cst : bf16 to vector<18x18x4xbf16>
    %c0 = arith.constant 0 : index
    %c0_0 = arith.constant 0 : index
    %c0_1 = arith.constant 0 : index
    %1 = vector.load %arg10[%c0, %c0_0, %c0_1] : memref<18x18x4xbf16, #tpu.memory_space<vmem>>, vector<18x18x4xbf16>
    tpu.vector_store %arg10[%c0, %c0_0, %c0_1], %0 {strides = array<i32>} : memref<18x18x4xbf16, #tpu.memory_space<vmem>>, vector<18x18x4xbf16>,
    %c0_2 = arith.constant 0 : index
    %c0_3 = arith.constant 0 : index
    %c0_4 = arith.constant 0 : index
    %c0_5 = arith.constant 0 : index
    %2 = vector.load %arg1[%c0_2, %c0_3, %c0_4, %c0_5] : memref<1x16x16x4xbf16, #tpu.memory_space<vmem>>, vector<1x16x16x4xbf16>
    %3 = vector.shape_cast %2 : vector<1x16x16x4xbf16> to vector<16x16x4xbf16>
    %c1 = arith.constant 1 : index
    %c1_6 = arith.constant 1 : index
    %c0_7 = arith.constant 0 : index
    %4 = vector.load %arg10[%c1, %c1_6, %c0_7] : memref<18x18x4xbf16, #tpu.memory_space<vmem>>, vector<16x16x4xbf16>
    tpu.vector_store %arg10[%c1, %c1_6, %c0_7], %3 {strides = array<i32>} : memref<18x18x4xbf16, #tpu.memory_space<vmem>>, vector<16x16x4xbf16>,
    %c0_8 = arith.constant 0 : index
    %c0_9 = arith.constant 0 : index
    %c0_10 = arith.constant 0 : index
    %5 = vector.load %arg10[%c0_8, %c0_9, %c0_10] : memref<18x18x4xbf16, #tpu.memory_space<vmem>>, vector<18x18x4xbf16>
    %c0_11 = arith.constant 0 : index
    %c0_12 = arith.constant 0 : index
    %6 = vector.load %arg2[%c0_11, %c0_12] : memref<36x8xbf16, #tpu.memory_space<vmem>>, vector<36x8xbf16>
    %c0_13 = arith.constant 0 : index
    %c0_14 = arith.constant 0 : index
    %7 = vector.load %arg3[%c0_13, %c0_14] : memref<1x8xf32, #tpu.memory_space<vmem>>, vector<1x8xf32>
    %c0_15 = arith.constant 0 : index
    %c0_16 = arith.constant 0 : index
    %8 = vector.load %arg4[%c0_15, %c0_16] : memref<1x8xf32, #tpu.memory_space<vmem>>, vector<1x8xf32>
    %9 = vector.extract_strided_slice %5 {offsets = [0, 0, 0], sizes = [16, 16, 4], strides = [1, 1, 1]} : vector<18x18x4xbf16> to vector<16x16x4xbf16>
    %10 = vector.shape_cast %9 : vector<16x16x4xbf16> to vector<256x4xbf16>
    %11 = vector.extract_strided_slice %5 {offsets = [0, 1, 0], sizes = [16, 16, 4], strides = [1, 1, 1]} : vector<18x18x4xbf16> to vector<16x16x4xbf16>
    %12 = vector.shape_cast %11 : vector<16x16x4xbf16> to vector<256x4xbf16>
    %13 = vector.extract_strided_slice %5 {offsets = [0, 2, 0], sizes = [16, 16, 4], strides = [1, 1, 1]} : vector<18x18x4xbf16> to vector<16x16x4xbf16>
    %14 = vector.shape_cast %13 : vector<16x16x4xbf16> to vector<256x4xbf16>
    %15 = vector.extract_strided_slice %5 {offsets = [1, 0, 0], sizes = [16, 16, 4], strides = [1, 1, 1]} : vector<18x18x4xbf16> to vector<16x16x4xbf16>
    %16 = vector.shape_cast %15 : vector<16x16x4xbf16> to vector<256x4xbf16>
    %17 = vector.extract_strided_slice %5 {offsets = [1, 1, 0], sizes = [16, 16, 4], strides = [1, 1, 1]} : vector<18x18x4xbf16> to vector<16x16x4xbf16>
    %18 = vector.shape_cast %17 : vector<16x16x4xbf16> to vector<256x4xbf16>
    %19 = vector.extract_strided_slice %5 {offsets = [1, 2, 0], sizes = [16, 16, 4], strides = [1, 1, 1]} : vector<18x18x4xbf16> to vector<16x16x4xbf16>
    %20 = vector.shape_cast %19 : vector<16x16x4xbf16> to vector<256x4xbf16>
    %21 = vector.extract_strided_slice %5 {offsets = [2, 0, 0], sizes = [16, 16, 4], strides = [1, 1, 1]} : vector<18x18x4xbf16> to vector<16x16x4xbf16>
    %22 = vector.shape_cast %21 : vector<16x16x4xbf16> to vector<256x4xbf16>
    %23 = vector.extract_strided_slice %5 {offsets = [2, 1, 0], sizes = [16, 16, 4], strides = [1, 1, 1]} : vector<18x18x4xbf16> to vector<16x16x4xbf16>
    %24 = vector.shape_cast %23 : vector<16x16x4xbf16> to vector<256x4xbf16>
    %25 = vector.extract_strided_slice %5 {offsets = [2, 2, 0], sizes = [16, 16, 4], strides = [1, 1, 1]} : vector<18x18x4xbf16> to vector<16x16x4xbf16>
    %26 = vector.shape_cast %25 : vector<16x16x4xbf16> to vector<256x4xbf16>
    %27 = tpu.concatenate %10, %12, %14, %16, %18, %20, %22, %24, %26 in 1 : vector<256x4xbf16>, vector<256x4xbf16>, vector<256x4xbf16>, vector<256x4xbf16>, vector<256x4xbf16>, vector<256x4xbf16>, vector<256x4xbf16>, vector<256x4xbf16>, vector<256x4xbf16> -> vector<256x36xbf16>
    %cst_17 = arith.constant dense<0.000000e+00> : vector<256x8xf32>
    %28 = tpu.matmul %27, %6, %cst_17 {dimension_numbers = #tpu.dot_dimension_numbers<[1], [0], [0], [1], [0, 0, 1, 1], [], []>} : vector<256x36xbf16>, vector<36x8xbf16>, vector<256x8xf32> -> vector<256x8xf32>
    %29 = vector.broadcast %7 : vector<1x8xf32> to vector<256x8xf32>
    %30 = arith.mulf %28, %29 : vector<256x8xf32>
    %31 = vector.broadcast %8 : vector<1x8xf32> to vector<256x8xf32>
    %32 = arith.addf %30, %31 : vector<256x8xf32>
    %cst_18 = arith.constant 0.000000e+00 : f32
    %33 = vector.broadcast %cst_18 : f32 to vector<256x8xf32>
    %34 = arith.maximumf %32, %33 : vector<256x8xf32>
    %cst_19 = arith.constant 0.000000e+00 : bf16
    %35 = vector.broadcast %cst_19 : bf16 to vector<18x18x8xbf16>
    %c0_20 = arith.constant 0 : index
    %c0_21 = arith.constant 0 : index
    %c0_22 = arith.constant 0 : index
    %36 = vector.load %arg11[%c0_20, %c0_21, %c0_22] : memref<18x18x8xbf16, #tpu.memory_space<vmem>>, vector<18x18x8xbf16>
    tpu.vector_store %arg11[%c0_20, %c0_21, %c0_22], %35 {strides = array<i32>} : memref<18x18x8xbf16, #tpu.memory_space<vmem>>, vector<18x18x8xbf16>,
    %37 = vector.shape_cast %34 : vector<256x8xf32> to vector<16x16x8xf32>
    %38 = arith.truncf %37 : vector<16x16x8xf32> to vector<16x16x8xbf16>
    %c1_23 = arith.constant 1 : index
    %c1_24 = arith.constant 1 : index
    %c0_25 = arith.constant 0 : index
    %39 = vector.load %arg11[%c1_23, %c1_24, %c0_25] : memref<18x18x8xbf16, #tpu.memory_space<vmem>>, vector<16x16x8xbf16>
    tpu.vector_store %arg11[%c1_23, %c1_24, %c0_25], %38 {strides = array<i32>} : memref<18x18x8xbf16, #tpu.memory_space<vmem>>, vector<16x16x8xbf16>,
    %c0_26 = arith.constant 0 : index
    %c0_27 = arith.constant 0 : index
    %c0_28 = arith.constant 0 : index
    %40 = vector.load %arg11[%c0_26, %c0_27, %c0_28] : memref<18x18x8xbf16, #tpu.memory_space<vmem>>, vector<18x18x8xbf16>
    %c0_29 = arith.constant 0 : index
    %c0_30 = arith.constant 0 : index
    %41 = vector.load %arg5[%c0_29, %c0_30] : memref<72x8xbf16, #tpu.memory_space<vmem>>, vector<72x8xbf16>
    %c0_31 = arith.constant 0 : index
    %c0_32 = arith.constant 0 : index
    %42 = vector.load %arg6[%c0_31, %c0_32] : memref<1x8xf32, #tpu.memory_space<vmem>>, vector<1x8xf32>
    %c0_33 = arith.constant 0 : index
    %c0_34 = arith.constant 0 : index
    %43 = vector.load %arg7[%c0_33, %c0_34] : memref<1x8xf32, #tpu.memory_space<vmem>>, vector<1x8xf32>
    %44 = vector.extract_strided_slice %40 {offsets = [0, 0, 0], sizes = [16, 16, 8], strides = [1, 1, 1]} : vector<18x18x8xbf16> to vector<16x16x8xbf16>
    %45 = vector.shape_cast %44 : vector<16x16x8xbf16> to vector<256x8xbf16>
    %46 = vector.extract_strided_slice %40 {offsets = [0, 1, 0], sizes = [16, 16, 8], strides = [1, 1, 1]} : vector<18x18x8xbf16> to vector<16x16x8xbf16>
    %47 = vector.shape_cast %46 : vector<16x16x8xbf16> to vector<256x8xbf16>
    %48 = vector.extract_strided_slice %40 {offsets = [0, 2, 0], sizes = [16, 16, 8], strides = [1, 1, 1]} : vector<18x18x8xbf16> to vector<16x16x8xbf16>
    %49 = vector.shape_cast %48 : vector<16x16x8xbf16> to vector<256x8xbf16>
    %50 = vector.extract_strided_slice %40 {offsets = [1, 0, 0], sizes = [16, 16, 8], strides = [1, 1, 1]} : vector<18x18x8xbf16> to vector<16x16x8xbf16>
    %51 = vector.shape_cast %50 : vector<16x16x8xbf16> to vector<256x8xbf16>
    %52 = vector.extract_strided_slice %40 {offsets = [1, 1, 0], sizes = [16, 16, 8], strides = [1, 1, 1]} : vector<18x18x8xbf16> to vector<16x16x8xbf16>
    %53 = vector.shape_cast %52 : vector<16x16x8xbf16> to vector<256x8xbf16>
    %54 = vector.extract_strided_slice %40 {offsets = [1, 2, 0], sizes = [16, 16, 8], strides = [1, 1, 1]} : vector<18x18x8xbf16> to vector<16x16x8xbf16>
    %55 = vector.shape_cast %54 : vector<16x16x8xbf16> to vector<256x8xbf16>
    %56 = vector.extract_strided_slice %40 {offsets = [2, 0, 0], sizes = [16, 16, 8], strides = [1, 1, 1]} : vector<18x18x8xbf16> to vector<16x16x8xbf16>
    %57 = vector.shape_cast %56 : vector<16x16x8xbf16> to vector<256x8xbf16>
    %58 = vector.extract_strided_slice %40 {offsets = [2, 1, 0], sizes = [16, 16, 8], strides = [1, 1, 1]} : vector<18x18x8xbf16> to vector<16x16x8xbf16>
    %59 = vector.shape_cast %58 : vector<16x16x8xbf16> to vector<256x8xbf16>
    %60 = vector.extract_strided_slice %40 {offsets = [2, 2, 0], sizes = [16, 16, 8], strides = [1, 1, 1]} : vector<18x18x8xbf16> to vector<16x16x8xbf16>
    %61 = vector.shape_cast %60 : vector<16x16x8xbf16> to vector<256x8xbf16>
    %62 = tpu.concatenate %45, %47, %49, %51, %53, %55, %57, %59, %61 in 1 : vector<256x8xbf16>, vector<256x8xbf16>, vector<256x8xbf16>, vector<256x8xbf16>, vector<256x8xbf16>, vector<256x8xbf16>, vector<256x8xbf16>, vector<256x8xbf16>, vector<256x8xbf16> -> vector<256x72xbf16>
    %cst_35 = arith.constant dense<0.000000e+00> : vector<256x8xf32>
    %63 = tpu.matmul %62, %41, %cst_35 {dimension_numbers = #tpu.dot_dimension_numbers<[1], [0], [0], [1], [0, 0, 1, 1], [], []>} : vector<256x72xbf16>, vector<72x8xbf16>, vector<256x8xf32> -> vector<256x8xf32>
    %64 = vector.broadcast %42 : vector<1x8xf32> to vector<256x8xf32>
    %65 = arith.mulf %63, %64 : vector<256x8xf32>
    %66 = vector.broadcast %43 : vector<1x8xf32> to vector<256x8xf32>
    %67 = arith.addf %65, %66 : vector<256x8xf32>
    %cst_36 = arith.constant 0.000000e+00 : f32
    %68 = vector.broadcast %cst_36 : f32 to vector<256x8xf32>
    %69 = arith.maximumf %67, %68 : vector<256x8xf32>
    %70 = vector.shape_cast %69 : vector<256x8xf32> to vector<16x16x8xf32>
    %c0_37 = arith.constant 0 : index
    %c0_38 = arith.constant 0 : index
    %c0_39 = arith.constant 0 : index
    %c0_40 = arith.constant 0 : index
    %71 = vector.load %arg9[%c0_37, %c0_38, %c0_39, %c0_40] : memref<1x16x16x8xf32, #tpu.memory_space<vmem>>, vector<1x16x16x8xf32>
    %72 = vector.shape_cast %71 : vector<1x16x16x8xf32> to vector<16x16x8xf32>
    %73 = vector.shape_cast %70 : vector<16x16x8xf32> to vector<1x16x16x8xf32>
    tpu.vector_store %arg9[%c0_37, %c0_38, %c0_39, %c0_40], %73 {strides = array<i32>} : memref<1x16x16x8xf32, #tpu.memory_space<vmem>>, vector<1x16x16x8xf32>,
    %74 = vector.shape_cast %69 : vector<256x8xf32> to vector<8x2x16x8xf32>
    %cst_41 = arith.constant dense<0xFF800000> : vector<8x16x8xf32>
    %75 = vector.multi_reduction <maximumf>, %74, %cst_41 [1] : vector<8x2x16x8xf32> to vector<8x16x8xf32>
    %76 = vector.shape_cast %75 : vector<8x16x8xf32> to vector<8x8x2x8xf32>
    %cst_42 = arith.constant dense<0xFF800000> : vector<8x8x8xf32>
    %77 = vector.multi_reduction <maximumf>, %76, %cst_42 [2] : vector<8x8x2x8xf32> to vector<8x8x8xf32>
    %c0_43 = arith.constant 0 : index
    %c0_44 = arith.constant 0 : index
    %c0_45 = arith.constant 0 : index
    %c0_46 = arith.constant 0 : index
    %78 = vector.load %arg8[%c0_43, %c0_44, %c0_45, %c0_46] : memref<1x8x8x8xf32, #tpu.memory_space<vmem>>, vector<1x8x8x8xf32>
    %79 = vector.shape_cast %78 : vector<1x8x8x8xf32> to vector<8x8x8xf32>
    %80 = vector.shape_cast %77 : vector<8x8x8xf32> to vector<1x8x8x8xf32>
    tpu.vector_store %arg8[%c0_43, %c0_44, %c0_45, %c0_46], %80 {strides = array<i32>} : memref<1x8x8x8xf32, #tpu.memory_space<vmem>>, vector<1x8x8x8xf32>,
    return
  }
  func.func @transform_0(%arg0: i32) -> (i32, i32, i32, i32) {
    %c0_i32 = arith.constant 0 : i32
    %c0_i32_0 = arith.constant 0 : i32
    %c0_i32_1 = arith.constant 0 : i32
    %c0_i32_2 = arith.constant 0 : i32
    return %arg0, %c0_i32, %c0_i32_0, %c0_i32_1 : i32, i32, i32, i32
  }
  func.func @transform_1(%arg0: i32) -> (i32, i32) {
    %c0_i32 = arith.constant 0 : i32
    %c0_i32_0 = arith.constant 0 : i32
    %c0_i32_1 = arith.constant 0 : i32
    return %c0_i32, %c0_i32_0 : i32, i32
  }
  func.func @transform_2(%arg0: i32) -> (i32, i32) {
    %c0_i32 = arith.constant 0 : i32
    %c0_i32_0 = arith.constant 0 : i32
    %c0_i32_1 = arith.constant 0 : i32
    return %c0_i32, %c0_i32_0 : i32, i32
  }
  func.func @transform_3(%arg0: i32) -> (i32, i32) {
    %c0_i32 = arith.constant 0 : i32
    %c0_i32_0 = arith.constant 0 : i32
    %c0_i32_1 = arith.constant 0 : i32
    return %c0_i32, %c0_i32_0 : i32, i32
  }
  func.func @transform_4(%arg0: i32) -> (i32, i32) {
    %c0_i32 = arith.constant 0 : i32
    %c0_i32_0 = arith.constant 0 : i32
    %c0_i32_1 = arith.constant 0 : i32
    return %c0_i32, %c0_i32_0 : i32, i32
  }
  func.func @transform_5(%arg0: i32) -> (i32, i32) {
    %c0_i32 = arith.constant 0 : i32
    %c0_i32_0 = arith.constant 0 : i32
    %c0_i32_1 = arith.constant 0 : i32
    return %c0_i32, %c0_i32_0 : i32, i32
  }
  func.func @transform_6(%arg0: i32) -> (i32, i32) {
    %c0_i32 = arith.constant 0 : i32
    %c0_i32_0 = arith.constant 0 : i32
    %c0_i32_1 = arith.constant 0 : i32
    return %c0_i32, %c0_i32_0 : i32, i32
  }
  func.func @transform_7(%arg0: i32) -> (i32, i32, i32, i32) {
    %c0_i32 = arith.constant 0 : i32
    %c0_i32_0 = arith.constant 0 : i32
    %c0_i32_1 = arith.constant 0 : i32
    %c0_i32_2 = arith.constant 0 : i32
    return %arg0, %c0_i32, %c0_i32_0, %c0_i32_1 : i32, i32, i32, i32
  }
  func.func @transform_8(%arg0: i32) -> (i32, i32, i32, i32) {
    %c0_i32 = arith.constant 0 : i32
    %c0_i32_0 = arith.constant 0 : i32
    %c0_i32_1 = arith.constant 0 : i32
    %c0_i32_2 = arith.constant 0 : i32
    return %arg0, %c0_i32, %c0_i32_0, %c0_i32_1 : i32, i32, i32, i32
  }
}

</mosaic_0001>

<llo_original>
// kernel: downblock_forward.1
$region0: #{downblock_forward.1}
  #allocation0 [shape = 'u32[]', space=smem, size = 0x4, offset = 0x4, fixed_abs, tag = 'smem constant byte address 0x4 - core index']
  #allocation1 [shape = 'u32[144,128]{1,0:T(1,128)}', space=vmem, size = 0x12000, scoped, tag = 'internal scratch']
  #allocation2 [shape = 'bf16[18,18,4]{2,1,0:T(8,128)(2,1)}', space=vmem, size = 0x1b000, scoped, tag = 'scratch operand']
  #allocation3 [shape = 'bf16[18,18,8]{2,1,0:T(8,128)(2,1)}', space=vmem, size = 0x1b000, scoped, tag = 'scratch operand']
  %s0 = inlined_call_operand.vmem [shape: bf16[2,16,16,4], index: 0, kind: input, shape index: {}]
  %s1 = inlined_call_operand.vmem [shape: bf16[36,8], index: 1, kind: input, shape index: {}]
  %s2 = inlined_call_operand.vmem [shape: f32[1,8], index: 2, kind: input, shape index: {}]
  %s3 = inlined_call_operand.vmem [shape: f32[1,8], index: 3, kind: input, shape index: {}]
  %s4 = inlined_call_operand.vmem [shape: bf16[72,8], index: 4, kind: input, shape index: {}]
  %s5 = inlined_call_operand.vmem [shape: f32[1,8], index: 5, kind: input, shape index: {}]
  %s6 = inlined_call_operand.vmem [shape: f32[1,8], index: 6, kind: input, shape index: {}]
  %s7 = inlined_call_operand.vmem [shape: f32[2,8,8,8], index: 7, kind: output, shape index: {0}]
  %s8 = inlined_call_operand.vmem [shape: f32[2,16,16,8], index: 8, kind: output, shape index: {1}]
  %9 = xla_tuple %s7, %s8
  %s10 = sld [smem:[#allocation0]]
  $region69: #{downblock_forward.1} parent=0
    _
  %s12 = ssub.s32 1, %s10
  %s13 = scalar_select 0, %s12, %s10
  loop: start=0, step=1, limit=4
  $region2: #{downblock_forward.1} parent=0 // loop_pre_header
    _
  $region3: #{downblock_forward.1} parent=0 // loop_header
    %s15 = sphi 0, %s19
    %p16 = scmp.ge.s32.totalorder %s15, 4
    %s25 = sphi 0, %s27
    %s28 = sphi 0, %s25
    %s29 = sphi 0, %s28
    %s45 = sphi 0, %s29
    %s49 = sphi 0, %s49
    %s51 = sphi 0, %s49
    %s52 = sphi 0, %s51
    %s66 = sphi 0, %s52
    %s70 = sphi 0, %s70
    %s72 = sphi 0, %s70
    %s73 = sphi 0, %s72
    %s87 = sphi 0, %s73
    %s91 = sphi 0, %s91
    %s93 = sphi 0, %s91
    %s94 = sphi 0, %s93
    %s108 = sphi 0, %s94
    %s112 = sphi 0, %s112
    %s114 = sphi 0, %s112
    %s115 = sphi 0, %s114
    %s129 = sphi 0, %s115
    %s133 = sphi 0, %s133
    %s135 = sphi 0, %s133
    %s136 = sphi 0, %s135
    %s150 = sphi 0, %s136
    %s154 = sphi 0, %s154
    %s156 = sphi 0, %s154
    %s157 = sphi 0, %s156
    %s171 = sphi 0, %s157
    %s177 = sphi 0, %s179
    %s180 = sphi 0, %s177
    %s181 = sphi 0, %s180
    %s197 = sphi 0, %s181
    %s203 = sphi 0, %s205
    %s206 = sphi 0, %s203
    %s207 = sphi 0, %s206
    %s223 = sphi 0, %s207
  $region4: #{downblock_forward.1} parent=0 // loop_header_branch
    %18 = sbr.rel (%p16) target = $region8
  $region5: #{downblock_forward.1} parent=0 // loop_body
    %s20 = ssub.s32 %s15, 1
    %s21 = ssub.s32 %s15, 2
    %s22 = sadd.s32 %s15, 1
    %s23 = ssub.s32 %s15, %s22
    %p24 = scmp.eq.s32.totalorder %s23, 0
    %s26 = sadd.s32 %s25, 1
    %s27 = scalar_select %p24, %s25, %s26
    %p30 = pneg %p24
    %p31 = scmp.eq.s32.totalorder %s15, 1
    %p32 = por %p30, %p31
    %p33 = scmp.ne.s32.totalorder %s25, %s28
    %p34 = scmp.eq.s32.totalorder %s15, 0
    %p35 = por %p33, %p34
    %p36 = scmp.ne.s32.totalorder %s25, %s28
    %p37 = scmp.eq.s32.totalorder %s20, 1
    %p38 = por %p36, %p37
    %p39 = scmp.ne.s32.totalorder %s28, %s29
    %p40 = scmp.eq.s32.totalorder %s20, 0
    %p41 = por %p39, %p40
    %p42 = scmp.ne.s32.totalorder %s28, %s29
    %p43 = scmp.eq.s32.totalorder %s21, 1
    %p44 = por %p42, %p43
    %p46 = scmp.ne.s32.totalorder %s29, %s45
    %p47 = scmp.eq.s32.totalorder %s21, 0
    %p48 = por %p46, %p47
    %s50 = sadd.s32 %s49, 1
    %p53 = scmp.eq.s32.totalorder %s15, 1
    %p54 = scmp.ne.s32.totalorder %s49, %s51
    %p55 = scmp.eq.s32.totalorder %s15, 0
    %p56 = por %p54, %p55
    %p57 = scmp.ne.s32.totalorder %s49, %s51
    %p58 = scmp.eq.s32.totalorder %s20, 1
    %p59 = por %p57, %p58
    %p60 = scmp.ne.s32.totalorder %s51, %s52
    %p61 = scmp.eq.s32.totalorder %s20, 0
    %p62 = por %p60, %p61
    %p63 = scmp.ne.s32.totalorder %s51, %s52
    %p64 = scmp.eq.s32.totalorder %s21, 1
    %p65 = por %p63, %p64
    %p67 = scmp.ne.s32.totalorder %s52, %s66
    %p68 = scmp.eq.s32.totalorder %s21, 0
    %p69 = por %p67, %p68
    %s71 = sadd.s32 %s70, 1
    %p74 = scmp.eq.s32.totalorder %s15, 1
    %p75 = scmp.ne.s32.totalorder %s70, %s72
    %p76 = scmp.eq.s32.totalorder %s15, 0
    %p77 = por %p75, %p76
    %p78 = scmp.ne.s32.totalorder %s70, %s72
    %p79 = scmp.eq.s32.totalorder %s20, 1
    %p80 = por %p78, %p79
    %p81 = scmp.ne.s32.totalorder %s72, %s73
    %p82 = scmp.eq.s32.totalorder %s20, 0
    %p83 = por %p81, %p82
    %p84 = scmp.ne.s32.totalorder %s72, %s73
    %p85 = scmp.eq.s32.totalorder %s21, 1
    %p86 = por %p84, %p85
    %p88 = scmp.ne.s32.totalorder %s73, %s87
    %p89 = scmp.eq.s32.totalorder %s21, 0
    %p90 = por %p88, %p89
    %s92 = sadd.s32 %s91, 1
    %p95 = scmp.eq.s32.totalorder %s15, 1
    %p96 = scmp.ne.s32.totalorder %s91, %s93
    %p97 = scmp.eq.s32.totalorder %s15, 0
    %p98 = por %p96, %p97
    %p99 = scmp.ne.s32.totalorder %s91, %s93
    %p100 = scmp.eq.s32.totalorder %s20, 1
    %p101 = por %p99, %p100
    %p102 = scmp.ne.s32.totalorder %s93, %s94
    %p103 = scmp.eq.s32.totalorder %s20, 0
    %p104 = por %p102, %p103
    %p105 = scmp.ne.s32.totalorder %s93, %s94
    %p106 = scmp.eq.s32.totalorder %s21, 1
    %p107 = por %p105, %p106
    %p109 = scmp.ne.s32.totalorder %s94, %s108
    %p110 = scmp.eq.s32.totalorder %s21, 0
    %p111 = por %p109, %p110
    %s113 = sadd.s32 %s112, 1
    %p116 = scmp.eq.s32.totalorder %s15, 1
    %p117 = scmp.ne.s32.totalorder %s112, %s114
    %p118 = scmp.eq.s32.totalorder %s15, 0
    %p119 = por %p117, %p118
    %p120 = scmp.ne.s32.totalorder %s112, %s114
    %p121 = scmp.eq.s32.totalorder %s20, 1
    %p122 = por %p120, %p121
    %p123 = scmp.ne.s32.totalorder %s114, %s115
    %p124 = scmp.eq.s32.totalorder %s20, 0
    %p125 = por %p123, %p124
    %p126 = scmp.ne.s32.totalorder %s114, %s115
    %p127 = scmp.eq.s32.totalorder %s21, 1
    %p128 = por %p126, %p127
    %p130 = scmp.ne.s32.totalorder %s115, %s129
    %p131 = scmp.eq.s32.totalorder %s21, 0
    %p132 = por %p130, %p131
    %s134 = sadd.s32 %s133, 1
    %p137 = scmp.eq.s32.totalorder %s15, 1
    %p138 = scmp.ne.s32.totalorder %s133, %s135
    %p139 = scmp.eq.s32.totalorder %s15, 0
    %p140 = por %p138, %p139
    %p141 = scmp.ne.s32.totalorder %s133, %s135
    %p142 = scmp.eq.s32.totalorder %s20, 1
    %p143 = por %p141, %p142
    %p144 = scmp.ne.s32.totalorder %s135, %s136
    %p145 = scmp.eq.s32.totalorder %s20, 0
    %p146 = por %p144, %p145
    %p147 = scmp.ne.s32.totalorder %s135, %s136
    %p148 = scmp.eq.s32.totalorder %s21, 1
    %p149 = por %p147, %p148
    %p151 = scmp.ne.s32.totalorder %s136, %s150
    %p152 = scmp.eq.s32.totalorder %s21, 0
    %p153 = por %p151, %p152
    %s155 = sadd.s32 %s154, 1
    %p158 = scmp.eq.s32.totalorder %s15, 1
    %p159 = scmp.ne.s32.totalorder %s154, %s156
    %p160 = scmp.eq.s32.totalorder %s15, 0
    %p161 = por %p159, %p160
    %p162 = scmp.ne.s32.totalorder %s154, %s156
    %p163 = scmp.eq.s32.totalorder %s20, 1
    %p164 = por %p162, %p163
    %p165 = scmp.ne.s32.totalorder %s156, %s157
    %p166 = scmp.eq.s32.totalorder %s20, 0
    %p167 = por %p165, %p166
    %p168 = scmp.ne.s32.totalorder %s156, %s157
    %p169 = scmp.eq.s32.totalorder %s21, 1
    %p170 = por %p168, %p169
    %p172 = scmp.ne.s32.totalorder %s157, %s171
    %p173 = scmp.eq.s32.totalorder %s21, 0
    %p174 = por %p172, %p173
    %s175 = ssub.s32 %s15, %s22
    %p176 = scmp.eq.s32.totalorder %s175, 0
    %s178 = sadd.s32 %s177, 1
    %s179 = scalar_select %p176, %s177, %s178
    %p182 = pneg %p176
    %p183 = scmp.eq.s32.totalorder %s15, 1
    %p184 = por %p182, %p183
    %p185 = scmp.ne.s32.totalorder %s177, %s180
    %p186 = scmp.eq.s32.totalorder %s15, 0
    %p187 = por %p185, %p186
    %p188 = scmp.ne.s32.totalorder %s177, %s180
    %p189 = scmp.eq.s32.totalorder %s20, 1
    %p190 = por %p188, %p189
    %p191 = scmp.ne.s32.totalorder %s180, %s181
    %p192 = scmp.eq.s32.totalorder %s20, 0
    %p193 = por %p191, %p192
    %p194 = scmp.ne.s32.totalorder %s180, %s181
    %p195 = scmp.eq.s32.totalorder %s21, 1
    %p196 = por %p194, %p195
    %p198 = scmp.ne.s32.totalorder %s181, %s197
    %p199 = scmp.eq.s32.totalorder %s21, 0
    %p200 = por %p198, %p199
    %s201 = ssub.s32 %s15, %s22
    %p202 = scmp.eq.s32.totalorder %s201, 0
    %s204 = sadd.s32 %s203, 1
    %s205 = scalar_select %p202, %s203, %s204
    %p208 = pneg %p202
    %p209 = scmp.eq.s32.totalorder %s15, 1
    %p210 = por %p208, %p209
    %p211 = scmp.ne.s32.totalorder %s203, %s206
    %p212 = scmp.eq.s32.totalorder %s15, 0
    %p213 = por %p211, %p212
    %p214 = scmp.ne.s32.totalorder %s203, %s206
    %p215 = scmp.eq.s32.totalorder %s20, 1
    %p216 = por %p214, %p215
    %p217 = scmp.ne.s32.totalorder %s206, %s207
    %p218 = scmp.eq.s32.totalorder %s20, 0
    %p219 = por %p217, %p218
    %p220 = scmp.ne.s32.totalorder %s206, %s207
    %p221 = scmp.eq.s32.totalorder %s21, 1
    %p222 = por %p220, %p221
    %p224 = scmp.ne.s32.totalorder %s207, %s223
    %p225 = scmp.eq.s32.totalorder %s21, 0
    %p226 = por %p224, %p225
    %p227 = scmp.le.s32.totalorder 1, %s15
    %p228 = scmp.lt.s32.totalorder %s15, 3
    %p229 = pnand %p227, %p228
    %p230 = pneg %p229
    // Predicated region
    $region9: #{downblock_forward.1} parent=5 // pred_check
      _
    $region10: #{downblock_forward.1} parent=5 // pred_check_branch
      %232 = sbr.rel (%p229) target = $region12
    $region11: #{downblock_forward.1} parent=5 // pred_region
      %s233 = ssub.s32 %s15, 1
      // Predicated region
      $region13: #{downblock_forward.1} parent=11 // pred_check
        %p234 = pneg %p62
      $region14: #{downblock_forward.1} parent=11 // pred_check_branch
        %236 = sbr.rel (%p234) target = $region16
      $region15: #{downblock_forward.1} parent=11 // pred_region
        _
      $region16: #{downblock_forward.1} parent=11 // pred_fallthru
        _
      // Predicated region
      $region17: #{downblock_forward.1} parent=11 // pred_check
        %p237 = pneg %p83
      $region18: #{downblock_forward.1} parent=11 // pred_check_branch
        %239 = sbr.rel (%p237) target = $region20
      $region19: #{downblock_forward.1} parent=11 // pred_region
        _
      $region20: #{downblock_forward.1} parent=11 // pred_fallthru
        _
      // Predicated region
      $region21: #{downblock_forward.1} parent=11 // pred_check
        %p240 = pneg %p104
      $region22: #{downblock_forward.1} parent=11 // pred_check_branch
        %242 = sbr.rel (%p240) target = $region24
      $region23: #{downblock_forward.1} parent=11 // pred_region
        _
      $region24: #{downblock_forward.1} parent=11 // pred_fallthru
        _
      // Predicated region
      $region25: #{downblock_forward.1} parent=11 // pred_check
        %p243 = pneg %p125
      $region26: #{downblock_forward.1} parent=11 // pred_check_branch
        %245 = sbr.rel (%p243) target = $region28
      $region27: #{downblock_forward.1} parent=11 // pred_region
        _
      $region28: #{downblock_forward.1} parent=11 // pred_fallthru
        _
      // Predicated region
      $region29: #{downblock_forward.1} parent=11 // pred_check
        %p246 = pneg %p146
      $region30: #{downblock_forward.1} parent=11 // pred_check_branch
        %248 = sbr.rel (%p246) target = $region32
      $region31: #{downblock_forward.1} parent=11 // pred_region
        _
      $region32: #{downblock_forward.1} parent=11 // pred_fallthru
        _
      // Predicated region
      $region33: #{downblock_forward.1} parent=11 // pred_check
        %p249 = pneg %p167
      $region34: #{downblock_forward.1} parent=11 // pred_check_branch
        %251 = sbr.rel (%p249) target = $region36
      $region35: #{downblock_forward.1} parent=11 // pred_region
        _
      $region36: #{downblock_forward.1} parent=11 // pred_fallthru
        _
    $region12: #{downblock_forward.1} parent=5 // pred_fallthru
      _
    %p252 = scmp.lt.s32.totalorder %s15, 2
    // Predicated region
    $region37: #{downblock_forward.1} parent=5 // pred_check
      %p253 = pneg %p252
    $region38: #{downblock_forward.1} parent=5 // pred_check_branch
      %255 = sbr.rel (%p253) target = $region40
    $region39: #{downblock_forward.1} parent=5 // pred_region
      // Predicated region
      $region41: #{downblock_forward.1} parent=39 // pred_check
        %p256 = pneg %p35
      $region42: #{downblock_forward.1} parent=39 // pred_check_branch
        %258 = sbr.rel (%p256) target = $region44
      $region43: #{downblock_forward.1} parent=39 // pred_region
        %p259 = scmp.lt.s32.totalorder %s15, 1
        %s260 = scalar_select %p259, %s15, 1
        %s261 = smul.addr %s260, 32
        %s262 = smul.addr %s261, 4
        %s263 = scalar_lea.vmem %s0, %s262
      $region44: #{downblock_forward.1} parent=39 // pred_fallthru
        _
    $region40: #{downblock_forward.1} parent=5 // pred_fallthru
      _
    %p264 = scmp.le.s32.totalorder 1, %s15
    %p265 = scmp.lt.s32.totalorder %s15, 3
    %p266 = pnand %p264, %p265
    %p267 = pneg %p266
    // Predicated region
    $region45: #{downblock_forward.1} parent=5 // pred_check
      _
    $region46: #{downblock_forward.1} parent=5 // pred_check_branch
      %269 = sbr.rel (%p266) target = $region48
    $region47: #{downblock_forward.1} parent=5 // pred_region
      %s270 = ssub.s32 %s15, 1
      %p271 = scmp.lt.s32.totalorder %s20, 1
      %s272 = scalar_select %p271, %s20, 1
      %s273 = smul.addr %s272, 32
      %s274 = smul.addr %s273, 4
      %s275 = scalar_lea.vmem %s0, %s274
      %p276 = pneg %p41
      %p277 = pneg %p38
      %p278 = pneg %p62
      %p279 = pneg %p59
      %p280 = pneg %p83
      %p281 = pneg %p80
      %p282 = pneg %p104
      %p283 = pneg %p101
      %p284 = pneg %p125
      %p285 = pneg %p122
      %p286 = pneg %p146
      %p287 = pneg %p143
      %p288 = pneg %p167
      %p289 = pneg %p164
      %p290 = pneg %p193
      %p291 = pneg %p190
      %p292 = scmp.lt.s32.totalorder %s20, 1
      %s293 = scalar_select %p292, %s20, 1
      %s294 = smul.addr %s293, 8
      %s295 = smul.addr %s294, 8
      %s296 = scalar_lea.vmem %s7, %s295
      %p297 = pneg %p219
      %p298 = pneg %p216
      %p299 = scmp.lt.s32.totalorder %s20, 1
      %s300 = scalar_select %p299, %s20, 1
      %s301 = smul.addr %s300, 32
      %s302 = smul.addr %s301, 8
      %s303 = scalar_lea.vmem %s8, %s302
      %p304 = scmp.lt.s32.totalorder %s20, 1
      %s305 = scalar_select %p304, %s20, 1
      %s306 = smul.addr %s305, 32
      %s307 = smul.addr %s306, 4
      %s308 = scalar_lea.vmem %s0, %s307
      %p309 = scmp.lt.s32.totalorder %s20, 1
      %s310 = scalar_select %p309, %s20, 1
      %s311 = smul.addr %s310, 8
      %s312 = smul.addr %s311, 8
      %s313 = scalar_lea.vmem %s7, %s312
      %p314 = scmp.lt.s32.totalorder %s20, 1
      %s315 = scalar_select %p314, %s20, 1
      %s316 = smul.addr %s315, 32
      %s317 = smul.addr %s316, 8
      %s318 = scalar_lea.vmem %s8, %s317
      %vm320 = vcmask 27648
      %321 = vst.msk [vmem:[#allocation2] sm:$0xf] %vm320, 0
      %322 = vst.msk [vmem:[#allocation2 + $0x4] sm:$0xf] %vm320, 0
      %vm323 = vcmask 24576
      %324 = vst.msk [vmem:[#allocation2 + $0x8] sm:$0x1] %vm323, 0
      %325 = vst.msk [vmem:[#allocation2 + $0xc] sm:$0xf] %vm320, 0
      %326 = vst.msk [vmem:[#allocation2 + $0x10] sm:$0xf] %vm320, 0
      %327 = vst.msk [vmem:[#allocation2 + $0x14] sm:$0x1] %vm323, 0
      %328 = vst.msk [vmem:[#allocation2 + $0x18] sm:$0xf] %vm320, 0
      %329 = vst.msk [vmem:[#allocation2 + $0x1c] sm:$0xf] %vm320, 0
      %330 = vst.msk [vmem:[#allocation2 + $0x20] sm:$0x1] %vm323, 0
      %331 = vst.msk [vmem:[#allocation2 + $0x24] sm:$0xf] %vm320, 0
      %332 = vst.msk [vmem:[#allocation2 + $0x28] sm:$0xf] %vm320, 0
      %333 = vst.msk [vmem:[#allocation2 + $0x2c] sm:$0x1] %vm323, 0
      %334 = vst.msk [vmem:[#allocation2 + $0x30] sm:$0xf] %vm320, 0
      %335 = vst.msk [vmem:[#allocation2 + $0x34] sm:$0xf] %vm320, 0
      %336 = vst.msk [vmem:[#allocation2 + $0x38] sm:$0x1] %vm323, 0
      %337 = vst.msk [vmem:[#allocation2 + $0x3c] sm:$0xf] %vm320, 0
      %338 = vst.msk [vmem:[#allocation2 + $0x40] sm:$0xf] %vm320, 0
      %339 = vst.msk [vmem:[#allocation2 + $0x44] sm:$0x1] %vm323, 0
      %340 = vst.msk [vmem:[#allocation2 + $0x48] sm:$0xf] %vm320, 0
      %341 = vst.msk [vmem:[#allocation2 + $0x4c] sm:$0xf] %vm320, 0
      %342 = vst.msk [vmem:[#allocation2 + $0x50] sm:$0x1] %vm323, 0
      %343 = vst.msk [vmem:[#allocation2 + $0x54] sm:$0xf] %vm320, 0
      %344 = vst.msk [vmem:[#allocation2 + $0x58] sm:$0xf] %vm320, 0
      %345 = vst.msk [vmem:[#allocation2 + $0x5c] sm:$0x1] %vm323, 0
      %346 = vst.msk [vmem:[#allocation2 + $0x60] sm:$0xf] %vm320, 0
      %347 = vst.msk [vmem:[#allocation2 + $0x64] sm:$0xf] %vm320, 0
      %348 = vst.msk [vmem:[#allocation2 + $0x68] sm:$0x1] %vm323, 0
      %349 = vst.msk [vmem:[#allocation2 + $0x6c] sm:$0xf] %vm320, 0
      %350 = vst.msk [vmem:[#allocation2 + $0x70] sm:$0xf] %vm320, 0
      %351 = vst.msk [vmem:[#allocation2 + $0x74] sm:$0x1] %vm323, 0
      %352 = vst.msk [vmem:[#allocation2 + $0x78] sm:$0xf] %vm320, 0
      %353 = vst.msk [vmem:[#allocation2 + $0x7c] sm:$0xf] %vm320, 0
      %354 = vst.msk [vmem:[#allocation2 + $0x80] sm:$0x1] %vm323, 0
      %355 = vst.msk [vmem:[#allocation2 + $0x84] sm:$0xf] %vm320, 0
      %356 = vst.msk [vmem:[#allocation2 + $0x88] sm:$0xf] %vm320, 0
      %357 = vst.msk [vmem:[#allocation2 + $0x8c] sm:$0x1] %vm323, 0
      %358 = vst.msk [vmem:[#allocation2 + $0x90] sm:$0xf] %vm320, 0
      %359 = vst.msk [vmem:[#allocation2 + $0x94] sm:$0xf] %vm320, 0
      %360 = vst.msk [vmem:[#allocation2 + $0x98] sm:$0x1] %vm323, 0
      %361 = vst.msk [vmem:[#allocation2 + $0x9c] sm:$0xf] %vm320, 0
      %362 = vst.msk [vmem:[#allocation2 + $0xa0] sm:$0xf] %vm320, 0
      %363 = vst.msk [vmem:[#allocation2 + $0xa4] sm:$0x1] %vm323, 0
      %364 = vst.msk [vmem:[#allocation2 + $0xa8] sm:$0xf] %vm320, 0
      %365 = vst.msk [vmem:[#allocation2 + $0xac] sm:$0xf] %vm320, 0
      %366 = vst.msk [vmem:[#allocation2 + $0xb0] sm:$0x1] %vm323, 0
      %367 = vst.msk [vmem:[#allocation2 + $0xb4] sm:$0xf] %vm320, 0
      %368 = vst.msk [vmem:[#allocation2 + $0xb8] sm:$0xf] %vm320, 0
      %369 = vst.msk [vmem:[#allocation2 + $0xbc] sm:$0x1] %vm323, 0
      %370 = vst.msk [vmem:[#allocation2 + $0xc0] sm:$0xf] %vm320, 0
      %371 = vst.msk [vmem:[#allocation2 + $0xc4] sm:$0xf] %vm320, 0
      %372 = vst.msk [vmem:[#allocation2 + $0xc8] sm:$0x1] %vm323, 0
      %373 = vst.msk [vmem:[#allocation2 + $0xcc] sm:$0xf] %vm320, 0
      %374 = vst.msk [vmem:[#allocation2 + $0xd0] sm:$0xf] %vm320, 0
      %375 = vst.msk [vmem:[#allocation2 + $0xd4] sm:$0x1] %vm323, 0
      %v376 = vld [vmem:[%s308] sm:$0xf]
      %v377 = vld [vmem:[%s308 + $0x4] sm:$0xf]
      %v378 = vld [vmem:[%s308 + $0x8] sm:$0xf]
      %v379 = vld [vmem:[%s308 + $0xc] sm:$0xf]
      %v380 = vld [vmem:[%s308 + $0x10] sm:$0xf]
      %v381 = vld [vmem:[%s308 + $0x14] sm:$0xf]
      %v382 = vld [vmem:[%s308 + $0x18] sm:$0xf]
      %v383 = vld [vmem:[%s308 + $0x1c] sm:$0xf]
      %v384 = vld [vmem:[%s308 + $0x20] sm:$0xf]
      %v385 = vld [vmem:[%s308 + $0x24] sm:$0xf]
      %v386 = vld [vmem:[%s308 + $0x28] sm:$0xf]
      %v387 = vld [vmem:[%s308 + $0x2c] sm:$0xf]
      %v388 = vld [vmem:[%s308 + $0x30] sm:$0xf]
      %v389 = vld [vmem:[%s308 + $0x34] sm:$0xf]
      %v390 = vld [vmem:[%s308 + $0x38] sm:$0xf]
      %v391 = vld [vmem:[%s308 + $0x3c] sm:$0xf]
      %v392 = vld [vmem:[%s308 + $0x40] sm:$0xf]
      %v393 = vld [vmem:[%s308 + $0x44] sm:$0xf]
      %v394 = vld [vmem:[%s308 + $0x48] sm:$0xf]
      %v395 = vld [vmem:[%s308 + $0x4c] sm:$0xf]
      %v396 = vld [vmem:[%s308 + $0x50] sm:$0xf]
      %v397 = vld [vmem:[%s308 + $0x54] sm:$0xf]
      %v398 = vld [vmem:[%s308 + $0x58] sm:$0xf]
      %v399 = vld [vmem:[%s308 + $0x5c] sm:$0xf]
      %v400 = vld [vmem:[%s308 + $0x60] sm:$0xf]
      %v401 = vld [vmem:[%s308 + $0x64] sm:$0xf]
      %v402 = vld [vmem:[%s308 + $0x68] sm:$0xf]
      %v403 = vld [vmem:[%s308 + $0x6c] sm:$0xf]
      %v404 = vld [vmem:[%s308 + $0x70] sm:$0xf]
      %v405 = vld [vmem:[%s308 + $0x74] sm:$0xf]
      %v406 = vld [vmem:[%s308 + $0x78] sm:$0xf]
      %v407 = vld [vmem:[%s308 + $0x7c] sm:$0xf]
      %vm408 = vsmask.f32 256
      %vm409 = vsmask.f32 4368
      %vm410 = vmor %vm408, %vm409
      %v412 = vshrl.u32 %v376, 16
      %v414 = vrot.slane %v412, 7
      %v415 = vshll.u32 %v376, 16
      %v417 = vor.u32 %v414, %v415
      %v418 = vrot.slane %v414, 4
      %v420 = vshrl.u32 %v377, 16
      %v422 = vrot.slane %v420, 7
      %v423 = vshll.u32 %v377, 16
      %v425 = vor.u32 %v422, %v423
      %v426 = vsel %vm410, %v418, %v425
      %v427 = vrot.slane %v422, 4
      %v429 = vshrl.u32 %v378, 16
      %v431 = vrot.slane %v429, 7
      %v432 = vshll.u32 %v378, 16
      %v434 = vor.u32 %v431, %v432
      %v435 = vrot.slane %v431, 4
      %v437 = vshrl.u32 %v379, 16
      %v439 = vrot.slane %v437, 7
      %v440 = vshll.u32 %v379, 16
      %v442 = vor.u32 %v439, %v440
      %v443 = vsel %vm410, %v435, %v442
      %v444 = vrot.slane %v439, 4
      %v446 = vshrl.u32 %v380, 16
      %v448 = vrot.slane %v446, 7
      %v449 = vshll.u32 %v380, 16
      %v451 = vor.u32 %v448, %v449
      %v452 = vrot.slane %v448, 4
      %v454 = vshrl.u32 %v381, 16
      %v456 = vrot.slane %v454, 7
      %v457 = vshll.u32 %v381, 16
      %v459 = vor.u32 %v456, %v457
      %v460 = vsel %vm410, %v452, %v459
      %v461 = vrot.slane %v456, 4
      %v463 = vshrl.u32 %v382, 16
      %v465 = vrot.slane %v463, 7
      %v466 = vshll.u32 %v382, 16
      %v468 = vor.u32 %v465, %v466
      %v469 = vrot.slane %v465, 4
      %v471 = vshrl.u32 %v383, 16
      %v473 = vrot.slane %v471, 7
      %v474 = vshll.u32 %v383, 16
      %v476 = vor.u32 %v473, %v474
      %v477 = vsel %vm410, %v469, %v476
      %v478 = vrot.slane %v473, 4
      %v480 = vshrl.u32 %v384, 16
      %v482 = vrot.slane %v480, 7
      %v483 = vshll.u32 %v384, 16
      %v485 = vor.u32 %v482, %v483
      %v486 = vrot.slane %v482, 4
      %v488 = vshrl.u32 %v385, 16
      %v490 = vrot.slane %v488, 7
      %v491 = vshll.u32 %v385, 16
      %v493 = vor.u32 %v490, %v491
      %v494 = vsel %vm410, %v486, %v493
      %v495 = vrot.slane %v490, 4
      %v497 = vshrl.u32 %v386, 16
      %v499 = vrot.slane %v497, 7
      %v500 = vshll.u32 %v386, 16
      %v502 = vor.u32 %v499, %v500
      %v503 = vrot.slane %v499, 4
      %v505 = vshrl.u32 %v387, 16
      %v507 = vrot.slane %v505, 7
      %v508 = vshll.u32 %v387, 16
      %v510 = vor.u32 %v507, %v508
      %v511 = vsel %vm410, %v503, %v510
      %v512 = vrot.slane %v507, 4
      %v514 = vshrl.u32 %v388, 16
      %v516 = vrot.slane %v514, 7
      %v517 = vshll.u32 %v388, 16
      %v519 = vor.u32 %v516, %v517
      %v520 = vrot.slane %v516, 4
      %v522 = vshrl.u32 %v389, 16
      %v524 = vrot.slane %v522, 7
      %v525 = vshll.u32 %v389, 16
      %v527 = vor.u32 %v524, %v525
      %v528 = vsel %vm410, %v520, %v527
      %v529 = vrot.slane %v524, 4
      %v531 = vshrl.u32 %v390, 16
      %v533 = vrot.slane %v531, 7
      %v534 = vshll.u32 %v390, 16
      %v536 = vor.u32 %v533, %v534
      %v537 = vrot.slane %v533, 4
      %v539 = vshrl.u32 %v391, 16
      %v541 = vrot.slane %v539, 7
      %v542 = vshll.u32 %v391, 16
      %v544 = vor.u32 %v541, %v542
      %v545 = vsel %vm410, %v537, %v544
      %v546 = vrot.slane %v541, 4
      %v548 = vshrl.u32 %v392, 16
      %v550 = vrot.slane %v548, 7
      %v551 = vshll.u32 %v392, 16
      %v553 = vor.u32 %v550, %v551
      %v554 = vrot.slane %v550, 4
      %v556 = vshrl.u32 %v393, 16
      %v558 = vrot.slane %v556, 7
      %v559 = vshll.u32 %v393, 16
      %v561 = vor.u32 %v558, %v559
      %v562 = vsel %vm410, %v554, %v561
      %v563 = vrot.slane %v558, 4
      %v565 = vshrl.u32 %v394, 16
      %v567 = vrot.slane %v565, 7
      %v568 = vshll.u32 %v394, 16
      %v570 = vor.u32 %v567, %v568
      %v571 = vrot.slane %v567, 4
      %v573 = vshrl.u32 %v395, 16
      %v575 = vrot.slane %v573, 7
      %v576 = vshll.u32 %v395, 16
      %v578 = vor.u32 %v575, %v576
      %v579 = vsel %vm410, %v571, %v578
      %v580 = vrot.slane %v575, 4
      %v582 = vshrl.u32 %v396, 16
      %v584 = vrot.slane %v582, 7
      %v585 = vshll.u32 %v396, 16
      %v587 = vor.u32 %v584, %v585
      %v588 = vrot.slane %v584, 4
      %v590 = vshrl.u32 %v397, 16
      %v592 = vrot.slane %v590, 7
      %v593 = vshll.u32 %v397, 16
      %v595 = vor.u32 %v592, %v593
      %v596 = vsel %vm410, %v588, %v595
      %v597 = vrot.slane %v592, 4
      %v599 = vshrl.u32 %v398, 16
      %v601 = vrot.slane %v599, 7
      %v602 = vshll.u32 %v398, 16
      %v604 = vor.u32 %v601, %v602
      %v605 = vrot.slane %v601, 4
      %v607 = vshrl.u32 %v399, 16
      %v609 = vrot.slane %v607, 7
      %v610 = vshll.u32 %v399, 16
      %v612 = vor.u32 %v609, %v610
      %v613 = vsel %vm410, %v605, %v612
      %v614 = vrot.slane %v609, 4
      %v616 = vshrl.u32 %v400, 16
      %v618 = vrot.slane %v616, 7
      %v619 = vshll.u32 %v400, 16
      %v621 = vor.u32 %v618, %v619
      %v622 = vrot.slane %v618, 4
      %v624 = vshrl.u32 %v401, 16
      %v626 = vrot.slane %v624, 7
      %v627 = vshll.u32 %v401, 16
      %v629 = vor.u32 %v626, %v627
      %v630 = vsel %vm410, %v622, %v629
      %v631 = vrot.slane %v626, 4
      %v633 = vshrl.u32 %v402, 16
      %v635 = vrot.slane %v633, 7
      %v636 = vshll.u32 %v402, 16
      %v638 = vor.u32 %v635, %v636
      %v639 = vrot.slane %v635, 4
      %v641 = vshrl.u32 %v403, 16
      %v643 = vrot.slane %v641, 7
      %v644 = vshll.u32 %v403, 16
      %v646 = vor.u32 %v643, %v644
      %v647 = vsel %vm410, %v639, %v646
      %v648 = vrot.slane %v643, 4
      %v650 = vshrl.u32 %v404, 16
      %v652 = vrot.slane %v650, 7
      %v653 = vshll.u32 %v404, 16
      %v655 = vor.u32 %v652, %v653
      %v656 = vrot.slane %v652, 4
      %v658 = vshrl.u32 %v405, 16
      %v660 = vrot.slane %v658, 7
      %v661 = vshll.u32 %v405, 16
      %v663 = vor.u32 %v660, %v661
      %v664 = vsel %vm410, %v656, %v663
      %v665 = vrot.slane %v660, 4
      %v667 = vshrl.u32 %v406, 16
      %v669 = vrot.slane %v667, 7
      %v670 = vshll.u32 %v406, 16
      %v672 = vor.u32 %v669, %v670
      %v673 = vrot.slane %v669, 4
      %v675 = vshrl.u32 %v407, 16
      %v677 = vrot.slane %v675, 7
      %v678 = vshll.u32 %v407, 16
      %v680 = vor.u32 %v677, %v678
      %v681 = vsel %vm410, %v673, %v680
      %v682 = vrot.slane %v677, 4
      %s731 = scalar_lea.vmem [#allocation2], 12
      %vm732 = vcmask 27648
      %vm733 = vsmask.f32 7938
      %vm734 = vmand %vm732, %vm733
      %v735 = vld [vmem:[%s731] sm:$0xf]
      %v736 = vsel %vm734, %v417, %v735
      %737 = vst [vmem:[%s731] sm:$0xf] %v736
      %738 = vst.msk [vmem:[%s731 + $0x4] sm:$0xf] %vm320, %v426
      %vm739 = vcmask 24576
      %vm740 = vmand %vm739, %vm408
      %v741 = vld [vmem:[%s731 + $0x8] sm:$0x1]
      %v742 = vsel %vm740, %v427, %v741
      %743 = vst [vmem:[%s731 + $0x8] sm:$0x1] %v742
      %v744 = vld [vmem:[%s731 + $0xc] sm:$0xf]
      %v745 = vsel %vm734, %v434, %v744
      %746 = vst [vmem:[%s731 + $0xc] sm:$0xf] %v745
      %747 = vst.msk [vmem:[%s731 + $0x10] sm:$0xf] %vm320, %v443
      %v748 = vld [vmem:[%s731 + $0x14] sm:$0x1]
      %v749 = vsel %vm740, %v444, %v748
      %750 = vst [vmem:[%s731 + $0x14] sm:$0x1] %v749
      %v751 = vld [vmem:[%s731 + $0x18] sm:$0xf]
      %v752 = vsel %vm734, %v451, %v751
      %753 = vst [vmem:[%s731 + $0x18] sm:$0xf] %v752
      %754 = vst.msk [vmem:[%s731 + $0x1c] sm:$0xf] %vm320, %v460
      %v755 = vld [vmem:[%s731 + $0x20] sm:$0x1]
      %v756 = vsel %vm740, %v461, %v755
      %757 = vst [vmem:[%s731 + $0x20] sm:$0x1] %v756
      %v758 = vld [vmem:[%s731 + $0x24] sm:$0xf]
      %v759 = vsel %vm734, %v468, %v758
      %760 = vst [vmem:[%s731 + $0x24] sm:$0xf] %v759
      %761 = vst.msk [vmem:[%s731 + $0x28] sm:$0xf] %vm320, %v477
      %v762 = vld [vmem:[%s731 + $0x2c] sm:$0x1]
      %v763 = vsel %vm740, %v478, %v762
      %764 = vst [vmem:[%s731 + $0x2c] sm:$0x1] %v763
      %v765 = vld [vmem:[%s731 + $0x30] sm:$0xf]
      %v766 = vsel %vm734, %v485, %v765
      %767 = vst [vmem:[%s731 + $0x30] sm:$0xf] %v766
      %768 = vst.msk [vmem:[%s731 + $0x34] sm:$0xf] %vm320, %v494
      %v769 = vld [vmem:[%s731 + $0x38] sm:$0x1]
      %v770 = vsel %vm740, %v495, %v769
      %771 = vst [vmem:[%s731 + $0x38] sm:$0x1] %v770
      %v772 = vld [vmem:[%s731 + $0x3c] sm:$0xf]
      %v773 = vsel %vm734, %v502, %v772
      %774 = vst [vmem:[%s731 + $0x3c] sm:$0xf] %v773
      %775 = vst.msk [vmem:[%s731 + $0x40] sm:$0xf] %vm320, %v511
      %v776 = vld [vmem:[%s731 + $0x44] sm:$0x1]
      %v777 = vsel %vm740, %v512, %v776
      %778 = vst [vmem:[%s731 + $0x44] sm:$0x1] %v777
      %v779 = vld [vmem:[%s731 + $0x48] sm:$0xf]
      %v780 = vsel %vm734, %v519, %v779
      %781 = vst [vmem:[%s731 + $0x48] sm:$0xf] %v780
      %782 = vst.msk [vmem:[%s731 + $0x4c] sm:$0xf] %vm320, %v528
      %v783 = vld [vmem:[%s731 + $0x50] sm:$0x1]
      %v784 = vsel %vm740, %v529, %v783
      %785 = vst [vmem:[%s731 + $0x50] sm:$0x1] %v784
      %v786 = vld [vmem:[%s731 + $0x54] sm:$0xf]
      %v787 = vsel %vm734, %v536, %v786
      %788 = vst [vmem:[%s731 + $0x54] sm:$0xf] %v787
      %789 = vst.msk [vmem:[%s731 + $0x58] sm:$0xf] %vm320, %v545
      %v790 = vld [vmem:[%s731 + $0x5c] sm:$0x1]
      %v791 = vsel %vm740, %v546, %v790
      %792 = vst [vmem:[%s731 + $0x5c] sm:$0x1] %v791
      %v793 = vld [vmem:[%s731 + $0x60] sm:$0xf]
      %v794 = vsel %vm734, %v553, %v793
      %795 = vst [vmem:[%s731 + $0x60] sm:$0xf] %v794
      %796 = vst.msk [vmem:[%s731 + $0x64] sm:$0xf] %vm320, %v562
      %v797 = vld [vmem:[%s731 + $0x68] sm:$0x1]
      %v798 = vsel %vm740, %v563, %v797
      %799 = vst [vmem:[%s731 + $0x68] sm:$0x1] %v798
      %v800 = vld [vmem:[%s731 + $0x6c] sm:$0xf]
      %v801 = vsel %vm734, %v570, %v800
      %802 = vst [vmem:[%s731 + $0x6c] sm:$0xf] %v801
      %803 = vst.msk [vmem:[%s731 + $0x70] sm:$0xf] %vm320, %v579
      %v804 = vld [vmem:[%s731 + $0x74] sm:$0x1]
      %v805 = vsel %vm740, %v580, %v804
      %806 = vst [vmem:[%s731 + $0x74] sm:$0x1] %v805
      %v807 = vld [vmem:[%s731 + $0x78] sm:$0xf]
      %v808 = vsel %vm734, %v587, %v807
      %809 = vst [vmem:[%s731 + $0x78] sm:$0xf] %v808
      %810 = vst.msk [vmem:[%s731 + $0x7c] sm:$0xf] %vm320, %v596
      %v811 = vld [vmem:[%s731 + $0x80] sm:$0x1]
      %v812 = vsel %vm740, %v597, %v811
      %813 = vst [vmem:[%s731 + $0x80] sm:$0x1] %v812
      %v814 = vld [vmem:[%s731 + $0x84] sm:$0xf]
      %v815 = vsel %vm734, %v604, %v814
      %816 = vst [vmem:[%s731 + $0x84] sm:$0xf] %v815
      %817 = vst.msk [vmem:[%s731 + $0x88] sm:$0xf] %vm320, %v613
      %v818 = vld [vmem:[%s731 + $0x8c] sm:$0x1]
      %v819 = vsel %vm740, %v614, %v818
      %820 = vst [vmem:[%s731 + $0x8c] sm:$0x1] %v819
      %v821 = vld [vmem:[%s731 + $0x90] sm:$0xf]
      %v822 = vsel %vm734, %v621, %v821
      %823 = vst [vmem:[%s731 + $0x90] sm:$0xf] %v822
      %824 = vst.msk [vmem:[%s731 + $0x94] sm:$0xf] %vm320, %v630
      %v825 = vld [vmem:[%s731 + $0x98] sm:$0x1]
      %v826 = vsel %vm740, %v631, %v825
      %827 = vst [vmem:[%s731 + $0x98] sm:$0x1] %v826
      %v828 = vld [vmem:[%s731 + $0x9c] sm:$0xf]
      %v829 = vsel %vm734, %v638, %v828
      %830 = vst [vmem:[%s731 + $0x9c] sm:$0xf] %v829
      %831 = vst.msk [vmem:[%s731 + $0xa0] sm:$0xf] %vm320, %v647
      %v832 = vld [vmem:[%s731 + $0xa4] sm:$0x1]
      %v833 = vsel %vm740, %v648, %v832
      %834 = vst [vmem:[%s731 + $0xa4] sm:$0x1] %v833
      %v835 = vld [vmem:[%s731 + $0xa8] sm:$0xf]
      %v836 = vsel %vm734, %v655, %v835
      %837 = vst [vmem:[%s731 + $0xa8] sm:$0xf] %v836
      %838 = vst.msk [vmem:[%s731 + $0xac] sm:$0xf] %vm320, %v664
      %v839 = vld [vmem:[%s731 + $0xb0] sm:$0x1]
      %v840 = vsel %vm740, %v665, %v839
      %841 = vst [vmem:[%s731 + $0xb0] sm:$0x1] %v840
      %v842 = vld [vmem:[%s731 + $0xb4] sm:$0xf]
      %v843 = vsel %vm734, %v672, %v842
      %844 = vst [vmem:[%s731 + $0xb4] sm:$0xf] %v843
      %845 = vst.msk [vmem:[%s731 + $0xb8] sm:$0xf] %vm320, %v681
      %v846 = vld [vmem:[%s731 + $0xbc] sm:$0x1]
      %v847 = vsel %vm740, %v682, %v846
      %848 = vst [vmem:[%s731 + $0xbc] sm:$0x1] %v847
      %v849 = vld [vmem:[#allocation2] sm:$0xf]
      %v850 = vld [vmem:[#allocation2 + $0x4] sm:$0xf]
      %v851 = vld [vmem:[#allocation2 + $0x8] sm:$0x1]
      %v852 = vld [vmem:[#allocation2 + $0xc] sm:$0xf]
      %v853 = vld [vmem:[#allocation2 + $0x10] sm:$0xf]
      %v854 = vld [vmem:[#allocation2 + $0x14] sm:$0x1]
      %v855 = vld [vmem:[#allocation2 + $0x18] sm:$0xf]
      %v856 = vld [vmem:[#allocation2 + $0x1c] sm:$0xf]
      %v857 = vld [vmem:[#allocation2 + $0x20] sm:$0x1]
      %v858 = vld [vmem:[#allocation2 + $0x24] sm:$0xf]
      %v859 = vld [vmem:[#allocation2 + $0x28] sm:$0xf]
      %v860 = vld [vmem:[#allocation2 + $0x2c] sm:$0x1]
      %v861 = vld [vmem:[#allocation2 + $0x30] sm:$0xf]
      %v862 = vld [vmem:[#allocation2 + $0x34] sm:$0xf]
      %v863 = vld [vmem:[#allocation2 + $0x38] sm:$0x1]
      %v864 = vld [vmem:[#allocation2 + $0x3c] sm:$0xf]
      %v865 = vld [vmem:[#allocation2 + $0x40] sm:$0xf]
      %v866 = vld [vmem:[#allocation2 + $0x44] sm:$0x1]
      %v867 = vld [vmem:[#allocation2 + $0x48] sm:$0xf]
      %v868 = vld [vmem:[#allocation2 + $0x4c] sm:$0xf]
      %v869 = vld [vmem:[#allocation2 + $0x50] sm:$0x1]
      %v870 = vld [vmem:[#allocation2 + $0x54] sm:$0xf]
      %v871 = vld [vmem:[#allocation2 + $0x58] sm:$0xf]
      %v872 = vld [vmem:[#allocation2 + $0x5c] sm:$0x1]
      %v873 = vld [vmem:[#allocation2 + $0x60] sm:$0xf]
      %v874 = vld [vmem:[#allocation2 + $0x64] sm:$0xf]
      %v875 = vld [vmem:[#allocation2 + $0x68] sm:$0x1]
      %v876 = vld [vmem:[#allocation2 + $0x6c] sm:$0xf]
      %v877 = vld [vmem:[#allocation2 + $0x70] sm:$0xf]
      %v878 = vld [vmem:[#allocation2 + $0x74] sm:$0x1]
      %v879 = vld [vmem:[#allocation2 + $0x78] sm:$0xf]
      %v880 = vld [vmem:[#allocation2 + $0x7c] sm:$0xf]
      %v881 = vld [vmem:[#allocation2 + $0x80] sm:$0x1]
      %v882 = vld [vmem:[#allocation2 + $0x84] sm:$0xf]
      %v883 = vld [vmem:[#allocation2 + $0x88] sm:$0xf]
      %v884 = vld [vmem:[#allocation2 + $0x8c] sm:$0x1]
      %v885 = vld [vmem:[#allocation2 + $0x90] sm:$0xf]
      %v886 = vld [vmem:[#allocation2 + $0x94] sm:$0xf]
      %v887 = vld [vmem:[#allocation2 + $0x98] sm:$0x1]
      %v888 = vld [vmem:[#allocation2 + $0x9c] sm:$0xf]
      %v889 = vld [vmem:[#allocation2 + $0xa0] sm:$0xf]
      %v890 = vld [vmem:[#allocation2 + $0xa4] sm:$0x1]
      %v891 = vld [vmem:[#allocation2 + $0xa8] sm:$0xf]
      %v892 = vld [vmem:[#allocation2 + $0xac] sm:$0xf]
      %v893 = vld [vmem:[#allocation2 + $0xb0] sm:$0x1]
      %v894 = vld [vmem:[#allocation2 + $0xb4] sm:$0xf]
      %v895 = vld [vmem:[#allocation2 + $0xb8] sm:$0xf]
      %v896 = vld [vmem:[#allocation2 + $0xbc] sm:$0x1]
      %v897 = vld [vmem:[#allocation2 + $0xc0] sm:$0xf]
      %v898 = vld [vmem:[#allocation2 + $0xc4] sm:$0xf]
      %v899 = vld [vmem:[#allocation2 + $0xc8] sm:$0x1]
      %v900 = vld [vmem:[#allocation2 + $0xcc] sm:$0xf]
      %v901 = vld [vmem:[#allocation2 + $0xd0] sm:$0xf]
      %v902 = vld [vmem:[#allocation2 + $0xd4] sm:$0x1]
      %v903 = vld [vmem:[%s1] sm:$0xf]
      %v904 = vld [vmem:[%s1 + $0x4] sm:$0xf]
      %v905 = vld [vmem:[%s1 + $0x8] sm:$0xf]
      %v906 = vld [vmem:[%s1 + $0xc] sm:$0xf]
      %v907 = vld [vmem:[%s1 + $0x10] sm:$0x3]
      %v908 = vld [vmem:[%s2] sm:$0x1]
      %v909 = vld [vmem:[%s3] sm:$0x1]
      %vm910 = vsmask.f32 3328
      %vm911 = vsmask.f32 7440
      %vm912 = vmor %vm910, %vm911
      %v914 = vshrl.u32 %v849, 16
      %v916 = vrot.slane %v914, 4
      %v917 = vshll.u32 %v849, 16
      %v919 = vrot.slane %v917, 5
      %v920 = vor.u32 %v916, %v919
      %v921 = vrot.slane %v920, 4
      %v923 = vshll.u32 %v850, 16
      %v925 = vrot.slane %v923, 5
      %v926 = vsel %vm912, %v921, %v925
      %v927 = vshrl.u32 %v850, 16
      %v929 = vrot.slane %v927, 4
      %v930 = vor.u32 %v929, %v925
      %v931 = vrot.slane %v930, 4
      %v933 = vshll.u32 %v851, 16
      %v935 = vrot.slane %v933, 5
      %v936 = vsel %vm912, %v931, %v935
      %v938 = vshrl.u32 %v852, 16
      %v940 = vrot.slane %v938, 4
      %v941 = vshll.u32 %v852, 16
      %v943 = vrot.slane %v941, 5
      %v944 = vor.u32 %v940, %v943
      %v945 = vrot.slane %v944, 4
      %v947 = vshll.u32 %v853, 16
      %v949 = vrot.slane %v947, 5
      %v950 = vsel %vm912, %v945, %v949
      %v951 = vshrl.u32 %v853, 16
      %v953 = vrot.slane %v951, 4
      %v954 = vor.u32 %v953, %v949
      %v955 = vrot.slane %v954, 4
      %v957 = vshll.u32 %v854, 16
      %v959 = vrot.slane %v957, 5
      %v960 = vsel %vm912, %v955, %v959
      %v962 = vshrl.u32 %v855, 16
      %v964 = vrot.slane %v962, 4
      %v965 = vshll.u32 %v855, 16
      %v967 = vrot.slane %v965, 5
      %v968 = vor.u32 %v964, %v967
      %v969 = vrot.slane %v968, 4
      %v971 = vshll.u32 %v856, 16
      %v973 = vrot.slane %v971, 5
      %v974 = vsel %vm912, %v969, %v973
      %v975 = vshrl.u32 %v856, 16
      %v977 = vrot.slane %v975, 4
      %v978 = vor.u32 %v977, %v973
      %v979 = vrot.slane %v978, 4
      %v981 = vshll.u32 %v857, 16
      %v983 = vrot.slane %v981, 5
      %v984 = vsel %vm912, %v979, %v983
      %v986 = vshrl.u32 %v858, 16
      %v988 = vrot.slane %v986, 4
      %v989 = vshll.u32 %v858, 16
      %v991 = vrot.slane %v989, 5
      %v992 = vor.u32 %v988, %v991
      %v993 = vrot.slane %v992, 4
      %v995 = vshll.u32 %v859, 16
      %v997 = vrot.slane %v995, 5
      %v998 = vsel %vm912, %v993, %v997
      %v999 = vshrl.u32 %v859, 16
      %v1001 = vrot.slane %v999, 4
      %v1002 = vor.u32 %v1001, %v997
      %v1003 = vrot.slane %v1002, 4
      %v1005 = vshll.u32 %v860, 16
      %v1007 = vrot.slane %v1005, 5
      %v1008 = vsel %vm912, %v1003, %v1007
      %v1010 = vshrl.u32 %v861, 16
      %v1012 = vrot.slane %v1010, 4
      %v1013 = vshll.u32 %v861, 16
      %v1015 = vrot.slane %v1013, 5
      %v1016 = vor.u32 %v1012, %v1015
      %v1017 = vrot.slane %v1016, 4
      %v1019 = vshll.u32 %v862, 16
      %v1021 = vrot.slane %v1019, 5
      %v1022 = vsel %vm912, %v1017, %v1021
      %v1023 = vshrl.u32 %v862, 16
      %v1025 = vrot.slane %v1023, 4
      %v1026 = vor.u32 %v1025, %v1021
      %v1027 = vrot.slane %v1026, 4
      %v1029 = vshll.u32 %v863, 16
      %v1031 = vrot.slane %v1029, 5
      %v1032 = vsel %vm912, %v1027, %v1031
      %v1034 = vshrl.u32 %v864, 16
      %v1036 = vrot.slane %v1034, 4
      %v1037 = vshll.u32 %v864, 16
      %v1039 = vrot.slane %v1037, 5
      %v1040 = vor.u32 %v1036, %v1039
      %v1041 = vrot.slane %v1040, 4
      %v1043 = vshll.u32 %v865, 16
      %v1045 = vrot.slane %v1043, 5
      %v1046 = vsel %vm912, %v1041, %v1045
      %v1047 = vshrl.u32 %v865, 16
      %v1049 = vrot.slane %v1047, 4
      %v1050 = vor.u32 %v1049, %v1045
      %v1051 = vrot.slane %v1050, 4
      %v1053 = vshll.u32 %v866, 16
      %v1055 = vrot.slane %v1053, 5
      %v1056 = vsel %vm912, %v1051, %v1055
      %v1058 = vshrl.u32 %v867, 16
      %v1060 = vrot.slane %v1058, 4
      %v1061 = vshll.u32 %v867, 16
      %v1063 = vrot.slane %v1061, 5
      %v1064 = vor.u32 %v1060, %v1063
      %v1065 = vrot.slane %v1064, 4
      %v1067 = vshll.u32 %v868, 16
      %v1069 = vrot.slane %v1067, 5
      %v1070 = vsel %vm912, %v1065, %v1069
      %v1071 = vshrl.u32 %v868, 16
      %v1073 = vrot.slane %v1071, 4
      %v1074 = vor.u32 %v1073, %v1069
      %v1075 = vrot.slane %v1074, 4
      %v1077 = vshll.u32 %v869, 16
      %v1079 = vrot.slane %v1077, 5
      %v1080 = vsel %vm912, %v1075, %v1079
      %v1082 = vshrl.u32 %v870, 16
      %v1084 = vrot.slane %v1082, 4
      %v1085 = vshll.u32 %v870, 16
      %v1087 = vrot.slane %v1085, 5
      %v1088 = vor.u32 %v1084, %v1087
      %v1089 = vrot.slane %v1088, 4
      %v1091 = vshll.u32 %v871, 16
      %v1093 = vrot.slane %v1091, 5
      %v1094 = vsel %vm912, %v1089, %v1093
      %v1095 = vshrl.u32 %v871, 16
      %v1097 = vrot.slane %v1095, 4
      %v1098 = vor.u32 %v1097, %v1093
      %v1099 = vrot.slane %v1098, 4
      %v1101 = vshll.u32 %v872, 16
      %v1103 = vrot.slane %v1101, 5
      %v1104 = vsel %vm912, %v1099, %v1103
      %v1106 = vshrl.u32 %v873, 16
      %v1108 = vrot.slane %v1106, 4
      %v1109 = vshll.u32 %v873, 16
      %v1111 = vrot.slane %v1109, 5
      %v1112 = vor.u32 %v1108, %v1111
      %v1113 = vrot.slane %v1112, 4
      %v1115 = vshll.u32 %v874, 16
      %v1117 = vrot.slane %v1115, 5
      %v1118 = vsel %vm912, %v1113, %v1117
      %v1119 = vshrl.u32 %v874, 16
      %v1121 = vrot.slane %v1119, 4
      %v1122 = vor.u32 %v1121, %v1117
      %v1123 = vrot.slane %v1122, 4
      %v1125 = vshll.u32 %v875, 16
      %v1127 = vrot.slane %v1125, 5
      %v1128 = vsel %vm912, %v1123, %v1127
      %v1130 = vshrl.u32 %v876, 16
      %v1132 = vrot.slane %v1130, 4
      %v1133 = vshll.u32 %v876, 16
      %v1135 = vrot.slane %v1133, 5
      %v1136 = vor.u32 %v1132, %v1135
      %v1137 = vrot.slane %v1136, 4
      %v1139 = vshll.u32 %v877, 16
      %v1141 = vrot.slane %v1139, 5
      %v1142 = vsel %vm912, %v1137, %v1141
      %v1143 = vshrl.u32 %v877, 16
      %v1145 = vrot.slane %v1143, 4
      %v1146 = vor.u32 %v1145, %v1141
      %v1147 = vrot.slane %v1146, 4
      %v1149 = vshll.u32 %v878, 16
      %v1151 = vrot.slane %v1149, 5
      %v1152 = vsel %vm912, %v1147, %v1151
      %v1154 = vshrl.u32 %v879, 16
      %v1156 = vrot.slane %v1154, 4
      %v1157 = vshll.u32 %v879, 16
      %v1159 = vrot.slane %v1157, 5
      %v1160 = vor.u32 %v1156, %v1159
      %v1161 = vrot.slane %v1160, 4
      %v1163 = vshll.u32 %v880, 16
      %v1165 = vrot.slane %v1163, 5
      %v1166 = vsel %vm912, %v1161, %v1165
      %v1167 = vshrl.u32 %v880, 16
      %v1169 = vrot.slane %v1167, 4
      %v1170 = vor.u32 %v1169, %v1165
      %v1171 = vrot.slane %v1170, 4
      %v1173 = vshll.u32 %v881, 16
      %v1175 = vrot.slane %v1173, 5
      %v1176 = vsel %vm912, %v1171, %v1175
      %v1178 = vshrl.u32 %v882, 16
      %v1180 = vrot.slane %v1178, 4
      %v1181 = vshll.u32 %v882, 16
      %v1183 = vrot.slane %v1181, 5
      %v1184 = vor.u32 %v1180, %v1183
      %v1185 = vrot.slane %v1184, 4
      %v1187 = vshll.u32 %v883, 16
      %v1189 = vrot.slane %v1187, 5
      %v1190 = vsel %vm912, %v1185, %v1189
      %v1191 = vshrl.u32 %v883, 16
      %v1193 = vrot.slane %v1191, 4
      %v1194 = vor.u32 %v1193, %v1189
      %v1195 = vrot.slane %v1194, 4
      %v1197 = vshll.u32 %v884, 16
      %v1199 = vrot.slane %v1197, 5
      %v1200 = vsel %vm912, %v1195, %v1199
      %v1202 = vshrl.u32 %v885, 16
      %v1204 = vrot.slane %v1202, 4
      %v1205 = vshll.u32 %v885, 16
      %v1207 = vrot.slane %v1205, 5
      %v1208 = vor.u32 %v1204, %v1207
      %v1209 = vrot.slane %v1208, 4
      %v1211 = vshll.u32 %v886, 16
      %v1213 = vrot.slane %v1211, 5
      %v1214 = vsel %vm912, %v1209, %v1213
      %v1215 = vshrl.u32 %v886, 16
      %v1217 = vrot.slane %v1215, 4
      %v1218 = vor.u32 %v1217, %v1213
      %v1219 = vrot.slane %v1218, 4
      %v1221 = vshll.u32 %v887, 16
      %v1223 = vrot.slane %v1221, 5
      %v1224 = vsel %vm912, %v1219, %v1223
      %v1226 = vshrl.u32 %v888, 16
      %v1228 = vrot.slane %v1226, 4
      %v1229 = vshll.u32 %v888, 16
      %v1231 = vrot.slane %v1229, 5
      %v1232 = vor.u32 %v1228, %v1231
      %v1233 = vrot.slane %v1232, 4
      %v1235 = vshll.u32 %v889, 16
      %v1237 = vrot.slane %v1235, 5
      %v1238 = vsel %vm912, %v1233, %v1237
      %v1239 = vshrl.u32 %v889, 16
      %v1241 = vrot.slane %v1239, 4
      %v1242 = vor.u32 %v1241, %v1237
      %v1243 = vrot.slane %v1242, 4
      %v1245 = vshll.u32 %v890, 16
      %v1247 = vrot.slane %v1245, 5
      %v1248 = vsel %vm912, %v1243, %v1247
      %v1250 = vshrl.u32 %v891, 16
      %v1252 = vrot.slane %v1250, 4
      %v1253 = vshll.u32 %v891, 16
      %v1255 = vrot.slane %v1253, 5
      %v1256 = vor.u32 %v1252, %v1255
      %v1257 = vrot.slane %v1256, 4
      %v1259 = vshll.u32 %v892, 16
      %v1261 = vrot.slane %v1259, 5
      %v1262 = vsel %vm912, %v1257, %v1261
      %v1263 = vshrl.u32 %v892, 16
      %v1265 = vrot.slane %v1263, 4
      %v1266 = vor.u32 %v1265, %v1261
      %v1267 = vrot.slane %v1266, 4
      %v1269 = vshll.u32 %v893, 16
      %v1271 = vrot.slane %v1269, 5
      %v1272 = vsel %vm912, %v1267, %v1271
      %v1274 = vshrl.u32 %v894, 16
      %v1276 = vrot.slane %v1274, 4
      %v1277 = vshll.u32 %v894, 16
      %v1279 = vrot.slane %v1277, 5
      %v1280 = vor.u32 %v1276, %v1279
      %v1281 = vrot.slane %v1280, 4
      %v1283 = vshll.u32 %v895, 16
      %v1285 = vrot.slane %v1283, 5
      %v1286 = vsel %vm912, %v1281, %v1285
      %v1287 = vshrl.u32 %v895, 16
      %v1289 = vrot.slane %v1287, 4
      %v1290 = vor.u32 %v1289, %v1285
      %v1291 = vrot.slane %v1290, 4
      %v1293 = vshll.u32 %v896, 16
      %v1295 = vrot.slane %v1293, 5
      %v1296 = vsel %vm912, %v1291, %v1295
      %vm1345 = vcmask 1042432
      %vm1346 = vcmask 1046532
      %vm1347 = vmor %vm1345, %vm1346
      %v1348 = vrot.slane %v849, 5
      %v1349 = vrot.slane %v1348, 4
      %v1350 = vrot.slane %v850, 5
      %v1351 = vsel %vm1347, %v1349, %v1350
      %v1352 = vrot.slane %v1350, 4
      %v1353 = vrot.slane %v851, 5
      %v1354 = vsel %vm1347, %v1352, %v1353
      %v1355 = vrot.slane %v852, 5
      %v1356 = vrot.slane %v1355, 4
      %v1357 = vrot.slane %v853, 5
      %v1358 = vsel %vm1347, %v1356, %v1357
      %v1359 = vrot.slane %v1357, 4
      %v1360 = vrot.slane %v854, 5
      %v1361 = vsel %vm1347, %v1359, %v1360
      %v1362 = vrot.slane %v855, 5
      %v1363 = vrot.slane %v1362, 4
      %v1364 = vrot.slane %v856, 5
      %v1365 = vsel %vm1347, %v1363, %v1364
      %v1366 = vrot.slane %v1364, 4
      %v1367 = vrot.slane %v857, 5
      %v1368 = vsel %vm1347, %v1366, %v1367
      %v1369 = vrot.slane %v858, 5
      %v1370 = vrot.slane %v1369, 4
      %v1371 = vrot.slane %v859, 5
      %v1372 = vsel %vm1347, %v1370, %v1371
      %v1373 = vrot.slane %v1371, 4
      %v1374 = vrot.slane %v860, 5
      %v1375 = vsel %vm1347, %v1373, %v1374
      %v1376 = vrot.slane %v861, 5
      %v1377 = vrot.slane %v1376, 4
      %v1378 = vrot.slane %v862, 5
      %v1379 = vsel %vm1347, %v1377, %v1378
      %v1380 = vrot.slane %v1378, 4
      %v1381 = vrot.slane %v863, 5
      %v1382 = vsel %vm1347, %v1380, %v1381
      %v1383 = vrot.slane %v864, 5
      %v1384 = vrot.slane %v1383, 4
      %v1385 = vrot.slane %v865, 5
      %v1386 = vsel %vm1347, %v1384, %v1385
      %v1387 = vrot.slane %v1385, 4
      %v1388 = vrot.slane %v866, 5
      %v1389 = vsel %vm1347, %v1387, %v1388
      %v1390 = vrot.slane %v867, 5
      %v1391 = vrot.slane %v1390, 4
      %v1392 = vrot.slane %v868, 5
      %v1393 = vsel %vm1347, %v1391, %v1392
      %v1394 = vrot.slane %v1392, 4
      %v1395 = vrot.slane %v869, 5
      %v1396 = vsel %vm1347, %v1394, %v1395
      %v1397 = vrot.slane %v870, 5
      %v1398 = vrot.slane %v1397, 4
      %v1399 = vrot.slane %v871, 5
      %v1400 = vsel %vm1347, %v1398, %v1399
      %v1401 = vrot.slane %v1399, 4
      %v1402 = vrot.slane %v872, 5
      %v1403 = vsel %vm1347, %v1401, %v1402
      %v1404 = vrot.slane %v873, 5
      %v1405 = vrot.slane %v1404, 4
      %v1406 = vrot.slane %v874, 5
      %v1407 = vsel %vm1347, %v1405, %v1406
      %v1408 = vrot.slane %v1406, 4
      %v1409 = vrot.slane %v875, 5
      %v1410 = vsel %vm1347, %v1408, %v1409
      %v1411 = vrot.slane %v876, 5
      %v1412 = vrot.slane %v1411, 4
      %v1413 = vrot.slane %v877, 5
      %v1414 = vsel %vm1347, %v1412, %v1413
      %v1415 = vrot.slane %v1413, 4
      %v1416 = vrot.slane %v878, 5
      %v1417 = vsel %vm1347, %v1415, %v1416
      %v1418 = vrot.slane %v879, 5
      %v1419 = vrot.slane %v1418, 4
      %v1420 = vrot.slane %v880, 5
      %v1421 = vsel %vm1347, %v1419, %v1420
      %v1422 = vrot.slane %v1420, 4
      %v1423 = vrot.slane %v881, 5
      %v1424 = vsel %vm1347, %v1422, %v1423
      %v1425 = vrot.slane %v882, 5
      %v1426 = vrot.slane %v1425, 4
      %v1427 = vrot.slane %v883, 5
      %v1428 = vsel %vm1347, %v1426, %v1427
      %v1429 = vrot.slane %v1427, 4
      %v1430 = vrot.slane %v884, 5
      %v1431 = vsel %vm1347, %v1429, %v1430
      %v1432 = vrot.slane %v885, 5
      %v1433 = vrot.slane %v1432, 4
      %v1434 = vrot.slane %v886, 5
      %v1435 = vsel %vm1347, %v1433, %v1434
      %v1436 = vrot.slane %v1434, 4
      %v1437 = vrot.slane %v887, 5
      %v1438 = vsel %vm1347, %v1436, %v1437
      %v1439 = vrot.slane %v888, 5
      %v1440 = vrot.slane %v1439, 4
      %v1441 = vrot.slane %v889, 5
      %v1442 = vsel %vm1347, %v1440, %v1441
      %v1443 = vrot.slane %v1441, 4
      %v1444 = vrot.slane %v890, 5
      %v1445 = vsel %vm1347, %v1443, %v1444
      %v1446 = vrot.slane %v891, 5
      %v1447 = vrot.slane %v1446, 4
      %v1448 = vrot.slane %v892, 5
      %v1449 = vsel %vm1347, %v1447, %v1448
      %v1450 = vrot.slane %v1448, 4
      %v1451 = vrot.slane %v893, 5
      %v1452 = vsel %vm1347, %v1450, %v1451
      %v1453 = vrot.slane %v894, 5
      %v1454 = vrot.slane %v1453, 4
      %v1455 = vrot.slane %v895, 5
      %v1456 = vsel %vm1347, %v1454, %v1455
      %v1457 = vrot.slane %v1455, 4
      %v1458 = vrot.slane %v896, 5
      %v1459 = vsel %vm1347, %v1457, %v1458
      %v1461 = vshrl.u32 %v897, 16
      %v1463 = vrot.slane %v1461, 4
      %v1464 = vshll.u32 %v897, 16
      %v1466 = vrot.slane %v1464, 5
      %v1467 = vor.u32 %v1463, %v1466
      %v1468 = vrot.slane %v1467, 4
      %v1470 = vshll.u32 %v898, 16
      %v1472 = vrot.slane %v1470, 5
      %v1473 = vsel %vm912, %v1468, %v1472
      %v1474 = vshrl.u32 %v898, 16
      %v1476 = vrot.slane %v1474, 4
      %v1477 = vor.u32 %v1476, %v1472
      %v1478 = vrot.slane %v1477, 4
      %v1480 = vshll.u32 %v899, 16
      %v1482 = vrot.slane %v1480, 5
      %v1483 = vsel %vm912, %v1478, %v1482
      %v1487 = vrot.slane %v897, 5
      %v1488 = vrot.slane %v1487, 4
      %v1489 = vrot.slane %v898, 5
      %v1490 = vsel %vm1347, %v1488, %v1489
      %v1491 = vrot.slane %v1489, 4
      %v1492 = vrot.slane %v899, 5
      %v1493 = vsel %vm1347, %v1491, %v1492
      %v1495 = vshrl.u32 %v900, 16
      %v1497 = vrot.slane %v1495, 4
      %v1498 = vshll.u32 %v900, 16
      %v1500 = vrot.slane %v1498, 5
      %v1501 = vor.u32 %v1497, %v1500
      %v1502 = vrot.slane %v1501, 4
      %v1504 = vshll.u32 %v901, 16
      %v1506 = vrot.slane %v1504, 5
      %v1507 = vsel %vm912, %v1502, %v1506
      %v1508 = vshrl.u32 %v901, 16
      %v1510 = vrot.slane %v1508, 4
      %v1511 = vor.u32 %v1510, %v1506
      %v1512 = vrot.slane %v1511, 4
      %v1514 = vshll.u32 %v902, 16
      %v1516 = vrot.slane %v1514, 5
      %v1517 = vsel %vm912, %v1512, %v1516
      %v1521 = vrot.slane %v900, 5
      %v1522 = vrot.slane %v1521, 4
      %v1523 = vrot.slane %v901, 5
      %v1524 = vsel %vm1347, %v1522, %v1523
      %v1525 = vrot.slane %v1523, 4
      %v1526 = vrot.slane %v902, 5
      %v1527 = vsel %vm1347, %v1525, %v1526
      %v1528 = vunpack.c.l.b16 %v849
      %v1529 = vunpack.c.l.b16 %v850
      %v1530 = vunpack.c.l.b16 %v852
      %v1531 = vunpack.c.l.b16 %v853
      %v1532 = vunpack.c.l.b16 %v855
      %v1533 = vunpack.c.l.b16 %v856
      %v1534 = vunpack.c.l.b16 %v858
      %v1535 = vunpack.c.l.b16 %v859
      %v1536 = vunpack.c.l.b16 %v861
      %v1537 = vunpack.c.l.b16 %v862
      %v1538 = vunpack.c.l.b16 %v864
      %v1539 = vunpack.c.l.b16 %v865
      %v1540 = vunpack.c.l.b16 %v867
      %v1541 = vunpack.c.l.b16 %v868
      %v1542 = vunpack.c.l.b16 %v870
      %v1543 = vunpack.c.l.b16 %v871
      %v1544 = vunpack.c.l.b16 %v873
      %v1545 = vunpack.c.l.b16 %v874
      %v1546 = vunpack.c.l.b16 %v876
      %v1547 = vunpack.c.l.b16 %v877
      %v1548 = vunpack.c.l.b16 %v879
      %v1549 = vunpack.c.l.b16 %v880
      %v1550 = vunpack.c.l.b16 %v882
      %v1551 = vunpack.c.l.b16 %v883
      %v1552 = vunpack.c.l.b16 %v885
      %v1553 = vunpack.c.l.b16 %v886
      %v1554 = vunpack.c.l.b16 %v888
      %v1555 = vunpack.c.l.b16 %v889
      %v1556 = vunpack.c.l.b16 %v891
      %v1557 = vunpack.c.l.b16 %v892
      %v1558 = vunpack.c.l.b16 %v894
      %v1559 = vunpack.c.l.b16 %v895
      %v1560 = vpack.c.b16 %v1529, %v1528
      %v1561 = vpack.c.b16 %v1531, %v1530
      %v1562 = vpack.c.b16 %v1533, %v1532
      %v1563 = vpack.c.b16 %v1535, %v1534
      %v1564 = vpack.c.b16 %v1537, %v1536
      %v1565 = vpack.c.b16 %v1539, %v1538
      %v1566 = vpack.c.b16 %v1541, %v1540
      %v1567 = vpack.c.b16 %v1543, %v1542
      %v1568 = vpack.c.b16 %v1545, %v1544
      %v1569 = vpack.c.b16 %v1547, %v1546
      %v1570 = vpack.c.b16 %v1549, %v1548
      %v1571 = vpack.c.b16 %v1551, %v1550
      %v1572 = vpack.c.b16 %v1553, %v1552
      %v1573 = vpack.c.b16 %v1555, %v1554
      %v1574 = vpack.c.b16 %v1557, %v1556
      %v1575 = vpack.c.b16 %v1559, %v1558
      %v1576 = vunpack.c.l.b16 %v926
      %v1577 = vunpack.c.l.b16 %v936
      %v1578 = vunpack.c.l.b16 %v950
      %v1579 = vunpack.c.l.b16 %v960
      %v1580 = vunpack.c.l.b16 %v974
      %v1581 = vunpack.c.l.b16 %v984
      %v1582 = vunpack.c.l.b16 %v998
      %v1583 = vunpack.c.l.b16 %v1008
      %v1584 = vunpack.c.l.b16 %v1022
      %v1585 = vunpack.c.l.b16 %v1032
      %v1586 = vunpack.c.l.b16 %v1046
      %v1587 = vunpack.c.l.b16 %v1056
      %v1588 = vunpack.c.l.b16 %v1070
      %v1589 = vunpack.c.l.b16 %v1080
      %v1590 = vunpack.c.l.b16 %v1094
      %v1591 = vunpack.c.l.b16 %v1104
      %v1592 = vunpack.c.l.b16 %v1118
      %v1593 = vunpack.c.l.b16 %v1128
      %v1594 = vunpack.c.l.b16 %v1142
      %v1595 = vunpack.c.l.b16 %v1152
      %v1596 = vunpack.c.l.b16 %v1166
      %v1597 = vunpack.c.l.b16 %v1176
      %v1598 = vunpack.c.l.b16 %v1190
      %v1599 = vunpack.c.l.b16 %v1200
      %v1600 = vunpack.c.l.b16 %v1214
      %v1601 = vunpack.c.l.b16 %v1224
      %v1602 = vunpack.c.l.b16 %v1238
      %v1603 = vunpack.c.l.b16 %v1248
      %v1604 = vunpack.c.l.b16 %v1262
      %v1605 = vunpack.c.l.b16 %v1272
      %v1606 = vunpack.c.l.b16 %v1286
      %v1607 = vunpack.c.l.b16 %v1296
      %v1608 = vpack.c.b16 %v1577, %v1576
      %v1609 = vpack.c.b16 %v1579, %v1578
      %v1610 = vpack.c.b16 %v1581, %v1580
      %v1611 = vpack.c.b16 %v1583, %v1582
      %v1612 = vpack.c.b16 %v1585, %v1584
      %v1613 = vpack.c.b16 %v1587, %v1586
      %v1614 = vpack.c.b16 %v1589, %v1588
      %v1615 = vpack.c.b16 %v1591, %v1590
      %v1616 = vpack.c.b16 %v1593, %v1592
      %v1617 = vpack.c.b16 %v1595, %v1594
      %v1618 = vpack.c.b16 %v1597, %v1596
      %v1619 = vpack.c.b16 %v1599, %v1598
      %v1620 = vpack.c.b16 %v1601, %v1600
      %v1621 = vpack.c.b16 %v1603, %v1602
      %v1622 = vpack.c.b16 %v1605, %v1604
      %v1623 = vpack.c.b16 %v1607, %v1606
      %1624 = vrot.lane.b32.xlu0 %v1608, 4
      %v1625 = vpop.permute.xlu0 %1624
      %1626 = vrot.lane.b32.xlu0 %v1609, 4
      %v1627 = vpop.permute.xlu0 %1626
      %1628 = vrot.lane.b32.xlu0 %v1610, 4
      %v1629 = vpop.permute.xlu0 %1628
      %1630 = vrot.lane.b32.xlu0 %v1611, 4
      %v1631 = vpop.permute.xlu0 %1630
      %1632 = vrot.lane.b32.xlu0 %v1612, 4
      %v1633 = vpop.permute.xlu0 %1632
      %1634 = vrot.lane.b32.xlu0 %v1613, 4
      %v1635 = vpop.permute.xlu0 %1634
      %1636 = vrot.lane.b32.xlu0 %v1614, 4
      %v1637 = vpop.permute.xlu0 %1636
      %1638 = vrot.lane.b32.xlu0 %v1615, 4
      %v1639 = vpop.permute.xlu0 %1638
      %1640 = vrot.lane.b32.xlu0 %v1616, 4
      %v1641 = vpop.permute.xlu0 %1640
      %1642 = vrot.lane.b32.xlu0 %v1617, 4
      %v1643 = vpop.permute.xlu0 %1642
      %1644 = vrot.lane.b32.xlu0 %v1618, 4
      %v1645 = vpop.permute.xlu0 %1644
      %1646 = vrot.lane.b32.xlu0 %v1619, 4
      %v1647 = vpop.permute.xlu0 %1646
      %1648 = vrot.lane.b32.xlu0 %v1620, 4
      %v1649 = vpop.permute.xlu0 %1648
      %1650 = vrot.lane.b32.xlu0 %v1621, 4
      %v1651 = vpop.permute.xlu0 %1650
      %1652 = vrot.lane.b32.xlu0 %v1622, 4
      %v1653 = vpop.permute.xlu0 %1652
      %1654 = vrot.lane.b32.xlu0 %v1623, 4
      %v1655 = vpop.permute.xlu0 %1654
      %v1656 = vunpack.c.l.b16 %v1351
      %v1657 = vunpack.c.l.b16 %v1354
      %v1658 = vunpack.c.l.b16 %v1358
      %v1659 = vunpack.c.l.b16 %v1361
      %v1660 = vunpack.c.l.b16 %v1365
      %v1661 = vunpack.c.l.b16 %v1368
      %v1662 = vunpack.c.l.b16 %v1372
      %v1663 = vunpack.c.l.b16 %v1375
      %v1664 = vunpack.c.l.b16 %v1379
      %v1665 = vunpack.c.l.b16 %v1382
      %v1666 = vunpack.c.l.b16 %v1386
      %v1667 = vunpack.c.l.b16 %v1389
      %v1668 = vunpack.c.l.b16 %v1393
      %v1669 = vunpack.c.l.b16 %v1396
      %v1670 = vunpack.c.l.b16 %v1400
      %v1671 = vunpack.c.l.b16 %v1403
      %v1672 = vunpack.c.l.b16 %v1407
      %v1673 = vunpack.c.l.b16 %v1410
      %v1674 = vunpack.c.l.b16 %v1414
      %v1675 = vunpack.c.l.b16 %v1417
      %v1676 = vunpack.c.l.b16 %v1421
      %v1677 = vunpack.c.l.b16 %v1424
      %v1678 = vunpack.c.l.b16 %v1428
      %v1679 = vunpack.c.l.b16 %v1431
      %v1680 = vunpack.c.l.b16 %v1435
      %v1681 = vunpack.c.l.b16 %v1438
      %v1682 = vunpack.c.l.b16 %v1442
      %v1683 = vunpack.c.l.b16 %v1445
      %v1684 = vunpack.c.l.b16 %v1449
      %v1685 = vunpack.c.l.b16 %v1452
      %v1686 = vunpack.c.l.b16 %v1456
      %v1687 = vunpack.c.l.b16 %v1459
      %v1688 = vpack.c.b16 %v1657, %v1656
      %v1689 = vpack.c.b16 %v1659, %v1658
      %v1690 = vpack.c.b16 %v1661, %v1660
      %v1691 = vpack.c.b16 %v1663, %v1662
      %v1692 = vpack.c.b16 %v1665, %v1664
      %v1693 = vpack.c.b16 %v1667, %v1666
      %v1694 = vpack.c.b16 %v1669, %v1668
      %v1695 = vpack.c.b16 %v1671, %v1670
      %v1696 = vpack.c.b16 %v1673, %v1672
      %v1697 = vpack.c.b16 %v1675, %v1674
      %v1698 = vpack.c.b16 %v1677, %v1676
      %v1699 = vpack.c.b16 %v1679, %v1678
      %v1700 = vpack.c.b16 %v1681, %v1680
      %v1701 = vpack.c.b16 %v1683, %v1682
      %v1702 = vpack.c.b16 %v1685, %v1684
      %v1703 = vpack.c.b16 %v1687, %v1686
      %1704 = vrot.lane.b32.xlu0 %v1688, 8
      %v1705 = vpop.permute.xlu0 %1704
      %1706 = vrot.lane.b32.xlu0 %v1689, 8
      %v1707 = vpop.permute.xlu0 %1706
      %1708 = vrot.lane.b32.xlu0 %v1690, 8
      %v1709 = vpop.permute.xlu0 %1708
      %1710 = vrot.lane.b32.xlu0 %v1691, 8
      %v1711 = vpop.permute.xlu0 %1710
      %1712 = vrot.lane.b32.xlu0 %v1692, 8
      %v1713 = vpop.permute.xlu0 %1712
      %1714 = vrot.lane.b32.xlu0 %v1693, 8
      %v1715 = vpop.permute.xlu0 %1714
      %1716 = vrot.lane.b32.xlu0 %v1694, 8
      %v1717 = vpop.permute.xlu0 %1716
      %1718 = vrot.lane.b32.xlu0 %v1695, 8
      %v1719 = vpop.permute.xlu0 %1718
      %1720 = vrot.lane.b32.xlu0 %v1696, 8
      %v1721 = vpop.permute.xlu0 %1720
      %1722 = vrot.lane.b32.xlu0 %v1697, 8
      %v1723 = vpop.permute.xlu0 %1722
      %1724 = vrot.lane.b32.xlu0 %v1698, 8
      %v1725 = vpop.permute.xlu0 %1724
      %1726 = vrot.lane.b32.xlu0 %v1699, 8
      %v1727 = vpop.permute.xlu0 %1726
      %1728 = vrot.lane.b32.xlu0 %v1700, 8
      %v1729 = vpop.permute.xlu0 %1728
      %1730 = vrot.lane.b32.xlu0 %v1701, 8
      %v1731 = vpop.permute.xlu0 %1730
      %1732 = vrot.lane.b32.xlu0 %v1702, 8
      %v1733 = vpop.permute.xlu0 %1732
      %1734 = vrot.lane.b32.xlu0 %v1703, 8
      %v1735 = vpop.permute.xlu0 %1734
      %v1736 = vunpack.c.l.b16 %v897
      %v1737 = vunpack.c.l.b16 %v898
      %v1738 = vpack.c.b16 %v1737, %v1736
      %1739 = vrot.lane.b32.xlu0 %v1561, 12
      %v1740 = vpop.permute.xlu0 %1739
      %1741 = vrot.lane.b32.xlu0 %v1562, 12
      %v1742 = vpop.permute.xlu0 %1741
      %1743 = vrot.lane.b32.xlu0 %v1563, 12
      %v1744 = vpop.permute.xlu0 %1743
      %1745 = vrot.lane.b32.xlu0 %v1564, 12
      %v1746 = vpop.permute.xlu0 %1745
      %1747 = vrot.lane.b32.xlu0 %v1565, 12
      %v1748 = vpop.permute.xlu0 %1747
      %1749 = vrot.lane.b32.xlu0 %v1566, 12
      %v1750 = vpop.permute.xlu0 %1749
      %1751 = vrot.lane.b32.xlu0 %v1567, 12
      %v1752 = vpop.permute.xlu0 %1751
      %1753 = vrot.lane.b32.xlu0 %v1568, 12
      %v1754 = vpop.permute.xlu0 %1753
      %1755 = vrot.lane.b32.xlu0 %v1569, 12
      %v1756 = vpop.permute.xlu0 %1755
      %1757 = vrot.lane.b32.xlu0 %v1570, 12
      %v1758 = vpop.permute.xlu0 %1757
      %1759 = vrot.lane.b32.xlu0 %v1571, 12
      %v1760 = vpop.permute.xlu0 %1759
      %1761 = vrot.lane.b32.xlu0 %v1572, 12
      %v1762 = vpop.permute.xlu0 %1761
      %1763 = vrot.lane.b32.xlu0 %v1573, 12
      %v1764 = vpop.permute.xlu0 %1763
      %1765 = vrot.lane.b32.xlu0 %v1574, 12
      %v1766 = vpop.permute.xlu0 %1765
      %1767 = vrot.lane.b32.xlu0 %v1575, 12
      %v1768 = vpop.permute.xlu0 %1767
      %1769 = vrot.lane.b32.xlu0 %v1738, 12
      %v1770 = vpop.permute.xlu0 %1769
      %v1771 = vunpack.c.l.b16 %v1473
      %v1772 = vunpack.c.l.b16 %v1483
      %v1773 = vpack.c.b16 %v1772, %v1771
      %1774 = vrot.lane.b32.xlu0 %v1609, 16
      %v1775 = vpop.permute.xlu0 %1774
      %1776 = vrot.lane.b32.xlu0 %v1610, 16
      %v1777 = vpop.permute.xlu0 %1776
      %1778 = vrot.lane.b32.xlu0 %v1611, 16
      %v1779 = vpop.permute.xlu0 %1778
      %1780 = vrot.lane.b32.xlu0 %v1612, 16
      %v1781 = vpop.permute.xlu0 %1780
      %1782 = vrot.lane.b32.xlu0 %v1613, 16
      %v1783 = vpop.permute.xlu0 %1782
      %1784 = vrot.lane.b32.xlu0 %v1614, 16
      %v1785 = vpop.permute.xlu0 %1784
      %1786 = vrot.lane.b32.xlu0 %v1615, 16
      %v1787 = vpop.permute.xlu0 %1786
      %1788 = vrot.lane.b32.xlu0 %v1616, 16
      %v1789 = vpop.permute.xlu0 %1788
      %1790 = vrot.lane.b32.xlu0 %v1617, 16
      %v1791 = vpop.permute.xlu0 %1790
      %1792 = vrot.lane.b32.xlu0 %v1618, 16
      %v1793 = vpop.permute.xlu0 %1792
      %1794 = vrot.lane.b32.xlu0 %v1619, 16
      %v1795 = vpop.permute.xlu0 %1794
      %1796 = vrot.lane.b32.xlu0 %v1620, 16
      %v1797 = vpop.permute.xlu0 %1796
      %1798 = vrot.lane.b32.xlu0 %v1621, 16
      %v1799 = vpop.permute.xlu0 %1798
      %1800 = vrot.lane.b32.xlu0 %v1622, 16
      %v1801 = vpop.permute.xlu0 %1800
      %1802 = vrot.lane.b32.xlu0 %v1623, 16
      %v1803 = vpop.permute.xlu0 %1802
      %1804 = vrot.lane.b32.xlu0 %v1773, 16
      %v1805 = vpop.permute.xlu0 %1804
      %v1806 = vunpack.c.l.b16 %v1490
      %v1807 = vunpack.c.l.b16 %v1493
      %v1808 = vpack.c.b16 %v1807, %v1806
      %1809 = vrot.lane.b32.xlu0 %v1689, 20
      %v1810 = vpop.permute.xlu0 %1809
      %1811 = vrot.lane.b32.xlu0 %v1690, 20
      %v1812 = vpop.permute.xlu0 %1811
      %1813 = vrot.lane.b32.xlu0 %v1691, 20
      %v1814 = vpop.permute.xlu0 %1813
      %1815 = vrot.lane.b32.xlu0 %v1692, 20
      %v1816 = vpop.permute.xlu0 %1815
      %1817 = vrot.lane.b32.xlu0 %v1693, 20
      %v1818 = vpop.permute.xlu0 %1817
      %1819 = vrot.lane.b32.xlu0 %v1694, 20
      %v1820 = vpop.permute.xlu0 %1819
      %1821 = vrot.lane.b32.xlu0 %v1695, 20
      %v1822 = vpop.permute.xlu0 %1821
      %1823 = vrot.lane.b32.xlu0 %v1696, 20
      %v1824 = vpop.permute.xlu0 %1823
      %1825 = vrot.lane.b32.xlu0 %v1697, 20
      %v1826 = vpop.permute.xlu0 %1825
      %1827 = vrot.lane.b32.xlu0 %v1698, 20
      %v1828 = vpop.permute.xlu0 %1827
      %1829 = vrot.lane.b32.xlu0 %v1699, 20
      %v1830 = vpop.permute.xlu0 %1829
      %1831 = vrot.lane.b32.xlu0 %v1700, 20
      %v1832 = vpop.permute.xlu0 %1831
      %1833 = vrot.lane.b32.xlu0 %v1701, 20
      %v1834 = vpop.permute.xlu0 %1833
      %1835 = vrot.lane.b32.xlu0 %v1702, 20
      %v1836 = vpop.permute.xlu0 %1835
      %1837 = vrot.lane.b32.xlu0 %v1703, 20
      %v1838 = vpop.permute.xlu0 %1837
      %1839 = vrot.lane.b32.xlu0 %v1808, 20
      %v1840 = vpop.permute.xlu0 %1839
      %v1841 = vunpack.c.l.b16 %v900
      %v1842 = vunpack.c.l.b16 %v901
      %v1843 = vpack.c.b16 %v1842, %v1841
      %1844 = vrot.lane.b32.xlu0 %v1562, 24
      %v1845 = vpop.permute.xlu0 %1844
      %1846 = vrot.lane.b32.xlu0 %v1563, 24
      %v1847 = vpop.permute.xlu0 %1846
      %1848 = vrot.lane.b32.xlu0 %v1564, 24
      %v1849 = vpop.permute.xlu0 %1848
      %1850 = vrot.lane.b32.xlu0 %v1565, 24
      %v1851 = vpop.permute.xlu0 %1850
      %1852 = vrot.lane.b32.xlu0 %v1566, 24
      %v1853 = vpop.permute.xlu0 %1852
      %1854 = vrot.lane.b32.xlu0 %v1567, 24
      %v1855 = vpop.permute.xlu0 %1854
      %1856 = vrot.lane.b32.xlu0 %v1568, 24
      %v1857 = vpop.permute.xlu0 %1856
      %1858 = vrot.lane.b32.xlu0 %v1569, 24
      %v1859 = vpop.permute.xlu0 %1858
      %1860 = vrot.lane.b32.xlu0 %v1570, 24
      %v1861 = vpop.permute.xlu0 %1860
      %1862 = vrot.lane.b32.xlu0 %v1571, 24
      %v1863 = vpop.permute.xlu0 %1862
      %1864 = vrot.lane.b32.xlu0 %v1572, 24
      %v1865 = vpop.permute.xlu0 %1864
      %1866 = vrot.lane.b32.xlu0 %v1573, 24
      %v1867 = vpop.permute.xlu0 %1866
      %1868 = vrot.lane.b32.xlu0 %v1574, 24
      %v1869 = vpop.permute.xlu0 %1868
      %1870 = vrot.lane.b32.xlu0 %v1575, 24
      %v1871 = vpop.permute.xlu0 %1870
      %1872 = vrot.lane.b32.xlu0 %v1738, 24
      %v1873 = vpop.permute.xlu0 %1872
      %1874 = vrot.lane.b32.xlu0 %v1843, 24
      %v1875 = vpop.permute.xlu0 %1874
      %v1876 = vunpack.c.l.b16 %v1507
      %v1877 = vunpack.c.l.b16 %v1517
      %v1878 = vpack.c.b16 %v1877, %v1876
      %1879 = vrot.lane.b32.xlu0 %v1610, 28
      %v1880 = vpop.permute.xlu0 %1879
      %1881 = vrot.lane.b32.xlu0 %v1611, 28
      %v1882 = vpop.permute.xlu0 %1881
      %1883 = vrot.lane.b32.xlu0 %v1612, 28
      %v1884 = vpop.permute.xlu0 %1883
      %1885 = vrot.lane.b32.xlu0 %v1613, 28
      %v1886 = vpop.permute.xlu0 %1885
      %1887 = vrot.lane.b32.xlu0 %v1614, 28
      %v1888 = vpop.permute.xlu0 %1887
      %1889 = vrot.lane.b32.xlu0 %v1615, 28
      %v1890 = vpop.permute.xlu0 %1889
      %1891 = vrot.lane.b32.xlu0 %v1616, 28
      %v1892 = vpop.permute.xlu0 %1891
      %1893 = vrot.lane.b32.xlu0 %v1617, 28
      %v1894 = vpop.permute.xlu0 %1893
      %1895 = vrot.lane.b32.xlu0 %v1618, 28
      %v1896 = vpop.permute.xlu0 %1895
      %1897 = vrot.lane.b32.xlu0 %v1619, 28
      %v1898 = vpop.permute.xlu0 %1897
      %1899 = vrot.lane.b32.xlu0 %v1620, 28
      %v1900 = vpop.permute.xlu0 %1899
      %1901 = vrot.lane.b32.xlu0 %v1621, 28
      %v1902 = vpop.permute.xlu0 %1901
      %1903 = vrot.lane.b32.xlu0 %v1622, 28
      %v1904 = vpop.permute.xlu0 %1903
      %1905 = vrot.lane.b32.xlu0 %v1623, 28
      %v1906 = vpop.permute.xlu0 %1905
      %1907 = vrot.lane.b32.xlu0 %v1773, 28
      %v1908 = vpop.permute.xlu0 %1907
      %1909 = vrot.lane.b32.xlu0 %v1878, 28
      %v1910 = vpop.permute.xlu0 %1909
      %v1911 = vunpack.c.l.b16 %v1524
      %v1912 = vunpack.c.l.b16 %v1527
      %v1913 = vpack.c.b16 %v1912, %v1911
      %1914 = vrot.lane.b32.xlu0 %v1690, 32
      %v1915 = vpop.permute.xlu0 %1914
      %1916 = vrot.lane.b32.xlu0 %v1691, 32
      %v1917 = vpop.permute.xlu0 %1916
      %1918 = vrot.lane.b32.xlu0 %v1692, 32
      %v1919 = vpop.permute.xlu0 %1918
      %1920 = vrot.lane.b32.xlu0 %v1693, 32
      %v1921 = vpop.permute.xlu0 %1920
      %1922 = vrot.lane.b32.xlu0 %v1694, 32
      %v1923 = vpop.permute.xlu0 %1922
      %1924 = vrot.lane.b32.xlu0 %v1695, 32
      %v1925 = vpop.permute.xlu0 %1924
      %1926 = vrot.lane.b32.xlu0 %v1696, 32
      %v1927 = vpop.permute.xlu0 %1926
      %1928 = vrot.lane.b32.xlu0 %v1697, 32
      %v1929 = vpop.permute.xlu0 %1928
      %1930 = vrot.lane.b32.xlu0 %v1698, 32
      %v1931 = vpop.permute.xlu0 %1930
      %1932 = vrot.lane.b32.xlu0 %v1699, 32
      %v1933 = vpop.permute.xlu0 %1932
      %1934 = vrot.lane.b32.xlu0 %v1700, 32
      %v1935 = vpop.permute.xlu0 %1934
      %1936 = vrot.lane.b32.xlu0 %v1701, 32
      %v1937 = vpop.permute.xlu0 %1936
      %1938 = vrot.lane.b32.xlu0 %v1702, 32
      %v1939 = vpop.permute.xlu0 %1938
      %1940 = vrot.lane.b32.xlu0 %v1703, 32
      %v1941 = vpop.permute.xlu0 %1940
      %1942 = vrot.lane.b32.xlu0 %v1808, 32
      %v1943 = vpop.permute.xlu0 %1942
      %1944 = vrot.lane.b32.xlu0 %v1913, 32
      %v1945 = vpop.permute.xlu0 %1944
      %vm1946 = vcmask 31744
      %v1949 = vsel %vm1946, %v1560, %v1625
      %v1952 = vsel %vm1946, %v1561, %v1627
      %v1955 = vsel %vm1946, %v1562, %v1629
      %v1958 = vsel %vm1946, %v1563, %v1631
      %v1961 = vsel %vm1946, %v1564, %v1633
      %v1964 = vsel %vm1946, %v1565, %v1635
      %v1967 = vsel %vm1946, %v1566, %v1637
      %v1970 = vsel %vm1946, %v1567, %v1639
      %v1973 = vsel %vm1946, %v1568, %v1641
      %v1976 = vsel %vm1946, %v1569, %v1643
      %v1979 = vsel %vm1946, %v1570, %v1645
      %v1982 = vsel %vm1946, %v1571, %v1647
      %v1985 = vsel %vm1946, %v1572, %v1649
      %v1988 = vsel %vm1946, %v1573, %v1651
      %v1991 = vsel %vm1946, %v1574, %v1653
      %v1994 = vsel %vm1946, %v1575, %v1655
      %vm1995 = vcmask 64512
      %v1997 = vsel %vm1995, %v1949, %v1705
      %v1999 = vsel %vm1995, %v1952, %v1707
      %v2001 = vsel %vm1995, %v1955, %v1709
      %v2003 = vsel %vm1995, %v1958, %v1711
      %v2005 = vsel %vm1995, %v1961, %v1713
      %v2007 = vsel %vm1995, %v1964, %v1715
      %v2009 = vsel %vm1995, %v1967, %v1717
      %v2011 = vsel %vm1995, %v1970, %v1719
      %v2013 = vsel %vm1995, %v1973, %v1721
      %v2015 = vsel %vm1995, %v1976, %v1723
      %v2017 = vsel %vm1995, %v1979, %v1725
      %v2019 = vsel %vm1995, %v1982, %v1727
      %v2021 = vsel %vm1995, %v1985, %v1729
      %v2023 = vsel %vm1995, %v1988, %v1731
      %v2025 = vsel %vm1995, %v1991, %v1733
      %v2027 = vsel %vm1995, %v1994, %v1735
      %vm2028 = vcmask 97280
      %v2030 = vsel %vm2028, %v1997, %v1740
      %v2032 = vsel %vm2028, %v1999, %v1742
      %v2034 = vsel %vm2028, %v2001, %v1744
      %v2036 = vsel %vm2028, %v2003, %v1746
      %v2038 = vsel %vm2028, %v2005, %v1748
      %v2040 = vsel %vm2028, %v2007, %v1750
      %v2042 = vsel %vm2028, %v2009, %v1752
      %v2044 = vsel %vm2028, %v2011, %v1754
      %v2046 = vsel %vm2028, %v2013, %v1756
      %v2048 = vsel %vm2028, %v2015, %v1758
      %v2050 = vsel %vm2028, %v2017, %v1760
      %v2052 = vsel %vm2028, %v2019, %v1762
      %v2054 = vsel %vm2028, %v2021, %v1764
      %v2056 = vsel %vm2028, %v2023, %v1766
      %v2058 = vsel %vm2028, %v2025, %v1768
      %v2060 = vsel %vm2028, %v2027, %v1770
      %vm2061 = vcmask 130048
      %v2063 = vsel %vm2061, %v2030, %v1775
      %v2065 = vsel %vm2061, %v2032, %v1777
      %v2067 = vsel %vm2061, %v2034, %v1779
      %v2069 = vsel %vm2061, %v2036, %v1781
      %v2071 = vsel %vm2061, %v2038, %v1783
      %v2073 = vsel %vm2061, %v2040, %v1785
      %v2075 = vsel %vm2061, %v2042, %v1787
      %v2077 = vsel %vm2061, %v2044, %v1789
      %v2079 = vsel %vm2061, %v2046, %v1791
      %v2081 = vsel %vm2061, %v2048, %v1793
      %v2083 = vsel %vm2061, %v2050, %v1795
      %v2085 = vsel %vm2061, %v2052, %v1797
      %v2087 = vsel %vm2061, %v2054, %v1799
      %v2089 = vsel %vm2061, %v2056, %v1801
      %v2091 = vsel %vm2061, %v2058, %v1803
      %v2093 = vsel %vm2061, %v2060, %v1805
      %vm2094 = vcmask 162816
      %v2096 = vsel %vm2094, %v2063, %v1810
      %v2098 = vsel %vm2094, %v2065, %v1812
      %v2100 = vsel %vm2094, %v2067, %v1814
      %v2102 = vsel %vm2094, %v2069, %v1816
      %v2104 = vsel %vm2094, %v2071, %v1818
      %v2106 = vsel %vm2094, %v2073, %v1820
      %v2108 = vsel %vm2094, %v2075, %v1822
      %v2110 = vsel %vm2094, %v2077, %v1824
      %v2112 = vsel %vm2094, %v2079, %v1826
      %v2114 = vsel %vm2094, %v2081, %v1828
      %v2116 = vsel %vm2094, %v2083, %v1830
      %v2118 = vsel %vm2094, %v2085, %v1832
      %v2120 = vsel %vm2094, %v2087, %v1834
      %v2122 = vsel %vm2094, %v2089, %v1836
      %v2124 = vsel %vm2094, %v2091, %v1838
      %v2126 = vsel %vm2094, %v2093, %v1840
      %vm2127 = vcmask 195584
      %v2129 = vsel %vm2127, %v2096, %v1845
      %v2131 = vsel %vm2127, %v2098, %v1847
      %v2133 = vsel %vm2127, %v2100, %v1849
      %v2135 = vsel %vm2127, %v2102, %v1851
      %v2137 = vsel %vm2127, %v2104, %v1853
      %v2139 = vsel %vm2127, %v2106, %v1855
      %v2141 = vsel %vm2127, %v2108, %v1857
      %v2143 = vsel %vm2127, %v2110, %v1859
      %v2145 = vsel %vm2127, %v2112, %v1861
      %v2147 = vsel %vm2127, %v2114, %v1863
      %v2149 = vsel %vm2127, %v2116, %v1865
      %v2151 = vsel %vm2127, %v2118, %v1867
      %v2153 = vsel %vm2127, %v2120, %v1869
      %v2155 = vsel %vm2127, %v2122, %v1871
      %v2157 = vsel %vm2127, %v2124, %v1873
      %v2159 = vsel %vm2127, %v2126, %v1875
      %vm2160 = vcmask 228352
      %v2162 = vsel %vm2160, %v2129, %v1880
      %v2164 = vsel %vm2160, %v2131, %v1882
      %v2166 = vsel %vm2160, %v2133, %v1884
      %v2168 = vsel %vm2160, %v2135, %v1886
      %v2170 = vsel %vm2160, %v2137, %v1888
      %v2172 = vsel %vm2160, %v2139, %v1890
      %v2174 = vsel %vm2160, %v2141, %v1892
      %v2176 = vsel %vm2160, %v2143, %v1894
      %v2178 = vsel %vm2160, %v2145, %v1896
      %v2180 = vsel %vm2160, %v2147, %v1898
      %v2182 = vsel %vm2160, %v2149, %v1900
      %v2184 = vsel %vm2160, %v2151, %v1902
      %v2186 = vsel %vm2160, %v2153, %v1904
      %v2188 = vsel %vm2160, %v2155, %v1906
      %v2190 = vsel %vm2160, %v2157, %v1908
      %v2192 = vsel %vm2160, %v2159, %v1910
      %vm2193 = vcmask 261120
      %v2195 = vsel %vm2193, %v2162, %v1915
      %v2197 = vsel %vm2193, %v2164, %v1917
      %v2199 = vsel %vm2193, %v2166, %v1919
      %v2201 = vsel %vm2193, %v2168, %v1921
      %v2203 = vsel %vm2193, %v2170, %v1923
      %v2205 = vsel %vm2193, %v2172, %v1925
      %v2207 = vsel %vm2193, %v2174, %v1927
      %v2209 = vsel %vm2193, %v2176, %v1929
      %v2211 = vsel %vm2193, %v2178, %v1931
      %v2213 = vsel %vm2193, %v2180, %v1933
      %v2215 = vsel %vm2193, %v2182, %v1935
      %v2217 = vsel %vm2193, %v2184, %v1937
      %v2219 = vsel %vm2193, %v2186, %v1939
      %v2221 = vsel %vm2193, %v2188, %v1941
      %v2223 = vsel %vm2193, %v2190, %v1943
      %v2225 = vsel %vm2193, %v2192, %v1945
      %v2231 = vunpack.c.l.b16 %v903
      %v2232 = vunpack.c.l.b16 %v904
      %v2233 = vunpack.c.l.b16 %v905
      %v2234 = vunpack.c.l.b16 %v906
      %v2235 = vunpack.c.l.b16 %v907
      %v2236 = vpack.c.b16 %v2232, %v2231
      %v2237 = vpack.c.b16 %v2234, %v2233
      %v2238 = vpack.c.b16 %v2235, %v2235
      %vm2241 = vcmask 293888
      %v2242 = vsel %vm2241, %v2195, 0
      %v2244 = vsel %vm2241, %v2197, 0
      %v2246 = vsel %vm2241, %v2199, 0
      %v2248 = vsel %vm2241, %v2201, 0
      %v2250 = vsel %vm2241, %v2203, 0
      %v2252 = vsel %vm2241, %v2205, 0
      %v2254 = vsel %vm2241, %v2207, 0
      %v2256 = vsel %vm2241, %v2209, 0
      %v2258 = vsel %vm2241, %v2211, 0
      %v2260 = vsel %vm2241, %v2213, 0
      %v2262 = vsel %vm2241, %v2215, 0
      %v2264 = vsel %vm2241, %v2217, 0
      %v2266 = vsel %vm2241, %v2219, 0
      %v2268 = vsel %vm2241, %v2221, 0
      %v2270 = vsel %vm2241, %v2223, 0
      %v2272 = vsel %vm2241, %v2225, 0
      %vm2274 = vcmask 1041408
      %v2276 = vsel %vm2274, %v2238, 0
      %2278 = vmatprep.subr.bf16.mxu0 0
      %2279 = vmatpush1.bf16.msra.mxu0 %v2236
      %2280 = vmatprep.subr.bf16.mxu0 0
      %2281 = vmatpush1.bf16.msra.mxu0 %v2237
      %2282 = vmatprep.subr.bf16.mxu0 0
      %2283 = vmatpush1.bf16.msra.mxu0 %v2276
      %2284 = vmatprep.subr.bf16.mxu0 0
      %2285 = vmatpush1.bf16.msra.mxu0 0
      %2286 = vmatprep.subr.bf16.mxu0 0
      %2287 = vmatpush1.bf16.msra.mxu0 0
      %2288 = vmatprep.subr.bf16.mxu0 0
      %2289 = vmatpush1.bf16.msra.mxu0 0
      %2290 = vmatprep.subr.bf16.mxu0 0
      %2291 = vmatpush1.bf16.msra.mxu0 0
      %2292 = vmatprep.subr.bf16.mxu0 0
      %2293 = vmatpush1.bf16.msra.mxu0 0
      %2294 = vmatprep.subr.bf16.mxu0 0
      %2295 = vmatpush1.bf16.msra.mxu0 0
      %2296 = vmatprep.subr.bf16.mxu0 0
      %2297 = vmatpush1.bf16.msra.mxu0 0
      %2298 = vmatprep.subr.bf16.mxu0 0
      %2299 = vmatpush1.bf16.msra.mxu0 0
      %2300 = vmatprep.subr.bf16.mxu0 0
      %2301 = vmatpush1.bf16.msra.mxu0 0
      %2302 = vmatprep.subr.bf16.mxu0 0
      %2303 = vmatpush1.bf16.msra.mxu0 0
      %2304 = vmatprep.subr.bf16.mxu0 0
      %2305 = vmatpush1.bf16.msra.mxu0 0
      %2306 = vmatprep.subr.bf16.mxu0 0
      %2307 = vmatpush1.bf16.msra.mxu0 0
      %2308 = vmatprep.subr.bf16.mxu0 0
      %2309 = vmatpush1.bf16.msra.mxu0 0
      %2310 = vmatprep.mubr.bf16.mxu0 0
      %2311 = vmatmul.mubr.bf16.gmra.mrb[0].mxu0 %v2242
      %v2312 = vpop.f32.mrb[0].mxu0
      %v2313 = vadd.f32 0.0, %v2312
      %v2314 = vpop.f32.mrb[0].mxu0
      %v2315 = vpop.f32.mrb[0].mxu0
      %v2316 = vadd.f32 0.0, %v2315
      %v2317 = vpop.f32.mrb[0].mxu0
      %2318 = vmatprep.mubr.bf16.mxu0 0
      %2319 = vmatmul.mubr.bf16.gmra.mrb[0].mxu0 %v2244
      %v2320 = vpop.f32.mrb[0].mxu0
      %v2321 = vadd.f32 0.0, %v2320
      %v2322 = vpop.f32.mrb[0].mxu0
      %v2323 = vpop.f32.mrb[0].mxu0
      %v2324 = vadd.f32 0.0, %v2323
      %v2325 = vpop.f32.mrb[0].mxu0
      %2326 = vmatprep.mubr.bf16.mxu0 0
      %2327 = vmatmul.mubr.bf16.gmra.mrb[0].mxu0 %v2246
      %v2328 = vpop.f32.mrb[0].mxu0
      %v2329 = vadd.f32 0.0, %v2328
      %v2330 = vpop.f32.mrb[0].mxu0
      %v2331 = vpop.f32.mrb[0].mxu0
      %v2332 = vadd.f32 0.0, %v2331
      %v2333 = vpop.f32.mrb[0].mxu0
      %2334 = vmatprep.mubr.bf16.mxu0 0
      %2335 = vmatmul.mubr.bf16.gmra.mrb[0].mxu0 %v2248
      %v2336 = vpop.f32.mrb[0].mxu0
      %v2337 = vadd.f32 0.0, %v2336
      %v2338 = vpop.f32.mrb[0].mxu0
      %v2339 = vpop.f32.mrb[0].mxu0
      %v2340 = vadd.f32 0.0, %v2339
      %v2341 = vpop.f32.mrb[0].mxu0
      %2342 = vmatprep.mubr.bf16.mxu0 0
      %2343 = vmatmul.mubr.bf16.gmra.mrb[0].mxu0 %v2250
      %v2344 = vpop.f32.mrb[0].mxu0
      %v2345 = vadd.f32 0.0, %v2344
      %v2346 = vpop.f32.mrb[0].mxu0
      %v2347 = vpop.f32.mrb[0].mxu0
      %v2348 = vadd.f32 0.0, %v2347
      %v2349 = vpop.f32.mrb[0].mxu0
      %2350 = vmatprep.mubr.bf16.mxu0 0
      %2351 = vmatmul.mubr.bf16.gmra.mrb[0].mxu0 %v2252
      %v2352 = vpop.f32.mrb[0].mxu0
      %v2353 = vadd.f32 0.0, %v2352
      %v2354 = vpop.f32.mrb[0].mxu0
      %v2355 = vpop.f32.mrb[0].mxu0
      %v2356 = vadd.f32 0.0, %v2355
      %v2357 = vpop.f32.mrb[0].mxu0
      %2358 = vmatprep.mubr.bf16.mxu0 0
      %2359 = vmatmul.mubr.bf16.gmra.mrb[0].mxu0 %v2254
      %v2360 = vpop.f32.mrb[0].mxu0
      %v2361 = vadd.f32 0.0, %v2360
      %v2362 = vpop.f32.mrb[0].mxu0
      %v2363 = vpop.f32.mrb[0].mxu0
      %v2364 = vadd.f32 0.0, %v2363
      %v2365 = vpop.f32.mrb[0].mxu0
      %2366 = vmatprep.mubr.bf16.mxu0 0
      %2367 = vmatmul.mubr.bf16.gmra.mrb[0].mxu0 %v2256
      %v2368 = vpop.f32.mrb[0].mxu0
      %v2369 = vadd.f32 0.0, %v2368
      %v2370 = vpop.f32.mrb[0].mxu0
      %v2371 = vpop.f32.mrb[0].mxu0
      %v2372 = vadd.f32 0.0, %v2371
      %v2373 = vpop.f32.mrb[0].mxu0
      %2374 = vmatprep.mubr.bf16.mxu0 0
      %2375 = vmatmul.mubr.bf16.gmra.mrb[0].mxu0 %v2258
      %v2376 = vpop.f32.mrb[0].mxu0
      %v2377 = vadd.f32 0.0, %v2376
      %v2378 = vpop.f32.mrb[0].mxu0
      %v2379 = vpop.f32.mrb[0].mxu0
      %v2380 = vadd.f32 0.0, %v2379
      %v2381 = vpop.f32.mrb[0].mxu0
      %2382 = vmatprep.mubr.bf16.mxu0 0
      %2383 = vmatmul.mubr.bf16.gmra.mrb[0].mxu0 %v2260
      %v2384 = vpop.f32.mrb[0].mxu0
      %v2385 = vadd.f32 0.0, %v2384
      %v2386 = vpop.f32.mrb[0].mxu0
      %v2387 = vpop.f32.mrb[0].mxu0
      %v2388 = vadd.f32 0.0, %v2387
      %v2389 = vpop.f32.mrb[0].mxu0
      %2390 = vmatprep.mubr.bf16.mxu0 0
      %2391 = vmatmul.mubr.bf16.gmra.mrb[0].mxu0 %v2262
      %v2392 = vpop.f32.mrb[0].mxu0
      %v2393 = vadd.f32 0.0, %v2392
      %v2394 = vpop.f32.mrb[0].mxu0
      %v2395 = vpop.f32.mrb[0].mxu0
      %v2396 = vadd.f32 0.0, %v2395
      %v2397 = vpop.f32.mrb[0].mxu0
      %2398 = vmatprep.mubr.bf16.mxu0 0
      %2399 = vmatmul.mubr.bf16.gmra.mrb[0].mxu0 %v2264
      %v2400 = vpop.f32.mrb[0].mxu0
      %v2401 = vadd.f32 0.0, %v2400
      %v2402 = vpop.f32.mrb[0].mxu0
      %v2403 = vpop.f32.mrb[0].mxu0
      %v2404 = vadd.f32 0.0, %v2403
      %v2405 = vpop.f32.mrb[0].mxu0
      %2406 = vmatprep.mubr.bf16.mxu0 0
      %2407 = vmatmul.mubr.bf16.gmra.mrb[0].mxu0 %v2266
      %v2408 = vpop.f32.mrb[0].mxu0
      %v2409 = vadd.f32 0.0, %v2408
      %v2410 = vpop.f32.mrb[0].mxu0
      %v2411 = vpop.f32.mrb[0].mxu0
      %v2412 = vadd.f32 0.0, %v2411
      %v2413 = vpop.f32.mrb[0].mxu0
      %2414 = vmatprep.mubr.bf16.mxu0 0
      %2415 = vmatmul.mubr.bf16.gmra.mrb[0].mxu0 %v2268
      %v2416 = vpop.f32.mrb[0].mxu0
      %v2417 = vadd.f32 0.0, %v2416
      %v2418 = vpop.f32.mrb[0].mxu0
      %v2419 = vpop.f32.mrb[0].mxu0
      %v2420 = vadd.f32 0.0, %v2419
      %v2421 = vpop.f32.mrb[0].mxu0
      %2422 = vmatprep.mubr.bf16.mxu0 0
      %2423 = vmatmul.mubr.bf16.gmra.mrb[0].mxu0 %v2270
      %v2424 = vpop.f32.mrb[0].mxu0
      %v2425 = vadd.f32 0.0, %v2424
      %v2426 = vpop.f32.mrb[0].mxu0
      %v2427 = vpop.f32.mrb[0].mxu0
      %v2428 = vadd.f32 0.0, %v2427
      %v2429 = vpop.f32.mrb[0].mxu0
      %2430 = vmatprep.mubr.bf16.mxu0 0
      %2431 = vmatmul.mubr.bf16.gmra.mrb[0].mxu0 %v2272
      %v2432 = vpop.f32.mrb[0].mxu0
      %v2433 = vadd.f32 0.0, %v2432
      %v2434 = vpop.f32.mrb[0].mxu0
      %v2435 = vpop.f32.mrb[0].mxu0
      %v2436 = vadd.f32 0.0, %v2435
      %v2437 = vpop.f32.mrb[0].mxu0
      %2438 = vdwg.mxu0
      %v2440 = vlaneseq
      %v2441 = vshrl.u32 %v2440, 7
      %v2442 = vsub.s32 0, %v2441
      %v2443 = vrot.slane %v908, %v2442
      %v2445 = vmul.f32 %v2313, %v2443
      %v2446 = vmul.f32 %v2316, %v2443
      %v2447 = vmul.f32 %v2321, %v2443
      %v2448 = vmul.f32 %v2324, %v2443
      %v2449 = vmul.f32 %v2329, %v2443
      %v2450 = vmul.f32 %v2332, %v2443
      %v2451 = vmul.f32 %v2337, %v2443
      %v2452 = vmul.f32 %v2340, %v2443
      %v2453 = vmul.f32 %v2345, %v2443
      %v2454 = vmul.f32 %v2348, %v2443
      %v2455 = vmul.f32 %v2353, %v2443
      %v2456 = vmul.f32 %v2356, %v2443
      %v2457 = vmul.f32 %v2361, %v2443
      %v2458 = vmul.f32 %v2364, %v2443
      %v2459 = vmul.f32 %v2369, %v2443
      %v2460 = vmul.f32 %v2372, %v2443
      %v2461 = vmul.f32 %v2377, %v2443
      %v2462 = vmul.f32 %v2380, %v2443
      %v2463 = vmul.f32 %v2385, %v2443
      %v2464 = vmul.f32 %v2388, %v2443
      %v2465 = vmul.f32 %v2393, %v2443
      %v2466 = vmul.f32 %v2396, %v2443
      %v2467 = vmul.f32 %v2401, %v2443
      %v2468 = vmul.f32 %v2404, %v2443
      %v2469 = vmul.f32 %v2409, %v2443
      %v2470 = vmul.f32 %v2412, %v2443
      %v2471 = vmul.f32 %v2417, %v2443
      %v2472 = vmul.f32 %v2420, %v2443
      %v2473 = vmul.f32 %v2425, %v2443
      %v2474 = vmul.f32 %v2428, %v2443
      %v2475 = vmul.f32 %v2433, %v2443
      %v2476 = vmul.f32 %v2436, %v2443
      %v2478 = vlaneseq
      %v2479 = vshrl.u32 %v2478, 7
      %v2480 = vsub.s32 0, %v2479
      %v2481 = vrot.slane %v909, %v2480
      %v2483 = vadd.f32 %v2445, %v2481
      %v2484 = vadd.f32 %v2446, %v2481
      %v2485 = vadd.f32 %v2447, %v2481
      %v2486 = vadd.f32 %v2448, %v2481
      %v2487 = vadd.f32 %v2449, %v2481
      %v2488 = vadd.f32 %v2450, %v2481
      %v2489 = vadd.f32 %v2451, %v2481
      %v2490 = vadd.f32 %v2452, %v2481
      %v2491 = vadd.f32 %v2453, %v2481
      %v2492 = vadd.f32 %v2454, %v2481
      %v2493 = vadd.f32 %v2455, %v2481
      %v2494 = vadd.f32 %v2456, %v2481
      %v2495 = vadd.f32 %v2457, %v2481
      %v2496 = vadd.f32 %v2458, %v2481
      %v2497 = vadd.f32 %v2459, %v2481
      %v2498 = vadd.f32 %v2460, %v2481
      %v2499 = vadd.f32 %v2461, %v2481
      %v2500 = vadd.f32 %v2462, %v2481
      %v2501 = vadd.f32 %v2463, %v2481
      %v2502 = vadd.f32 %v2464, %v2481
      %v2503 = vadd.f32 %v2465, %v2481
      %v2504 = vadd.f32 %v2466, %v2481
      %v2505 = vadd.f32 %v2467, %v2481
      %v2506 = vadd.f32 %v2468, %v2481
      %v2507 = vadd.f32 %v2469, %v2481
      %v2508 = vadd.f32 %v2470, %v2481
      %v2509 = vadd.f32 %v2471, %v2481
      %v2510 = vadd.f32 %v2472, %v2481
      %v2511 = vadd.f32 %v2473, %v2481
      %v2512 = vadd.f32 %v2474, %v2481
      %v2513 = vadd.f32 %v2475, %v2481
      %v2514 = vadd.f32 %v2476, %v2481
      %v2515 = vmax.f32 %v2483, 0.0
      %v2516 = vmax.f32 %v2484, 0.0
      %v2517 = vmax.f32 %v2485, 0.0
      %v2518 = vmax.f32 %v2486, 0.0
      %v2519 = vmax.f32 %v2487, 0.0
      %v2520 = vmax.f32 %v2488, 0.0
      %v2521 = vmax.f32 %v2489, 0.0
      %v2522 = vmax.f32 %v2490, 0.0
      %v2523 = vmax.f32 %v2491, 0.0
      %v2524 = vmax.f32 %v2492, 0.0
      %v2525 = vmax.f32 %v2493, 0.0
      %v2526 = vmax.f32 %v2494, 0.0
      %v2527 = vmax.f32 %v2495, 0.0
      %v2528 = vmax.f32 %v2496, 0.0
      %v2529 = vmax.f32 %v2497, 0.0
      %v2530 = vmax.f32 %v2498, 0.0
      %v2531 = vmax.f32 %v2499, 0.0
      %v2532 = vmax.f32 %v2500, 0.0
      %v2533 = vmax.f32 %v2501, 0.0
      %v2534 = vmax.f32 %v2502, 0.0
      %v2535 = vmax.f32 %v2503, 0.0
      %v2536 = vmax.f32 %v2504, 0.0
      %v2537 = vmax.f32 %v2505, 0.0
      %v2538 = vmax.f32 %v2506, 0.0
      %v2539 = vmax.f32 %v2507, 0.0
      %v2540 = vmax.f32 %v2508, 0.0
      %v2541 = vmax.f32 %v2509, 0.0
      %v2542 = vmax.f32 %v2510, 0.0
      %v2543 = vmax.f32 %v2511, 0.0
      %v2544 = vmax.f32 %v2512, 0.0
      %v2545 = vmax.f32 %v2513, 0.0
      %v2546 = vmax.f32 %v2514, 0.0
      %vm2547 = vcmask 60416
      %2548 = vst.msk [vmem:[#allocation3] sm:$0xf] %vm2547, 0
      %2549 = vst.msk [vmem:[#allocation3 + $0x4] sm:$0xf] %vm2547, 0
      %vm2550 = vcmask 57344
      %2551 = vst.msk [vmem:[#allocation3 + $0x8] sm:$0x1] %vm2550, 0
      %2552 = vst.msk [vmem:[#allocation3 + $0xc] sm:$0xf] %vm2547, 0
      %2553 = vst.msk [vmem:[#allocation3 + $0x10] sm:$0xf] %vm2547, 0
      %2554 = vst.msk [vmem:[#allocation3 + $0x14] sm:$0x1] %vm2550, 0
      %2555 = vst.msk [vmem:[#allocation3 + $0x18] sm:$0xf] %vm2547, 0
      %2556 = vst.msk [vmem:[#allocation3 + $0x1c] sm:$0xf] %vm2547, 0
      %2557 = vst.msk [vmem:[#allocation3 + $0x20] sm:$0x1] %vm2550, 0
      %2558 = vst.msk [vmem:[#allocation3 + $0x24] sm:$0xf] %vm2547, 0
      %2559 = vst.msk [vmem:[#allocation3 + $0x28] sm:$0xf] %vm2547, 0
      %2560 = vst.msk [vmem:[#allocation3 + $0x2c] sm:$0x1] %vm2550, 0
      %2561 = vst.msk [vmem:[#allocation3 + $0x30] sm:$0xf] %vm2547, 0
      %2562 = vst.msk [vmem:[#allocation3 + $0x34] sm:$0xf] %vm2547, 0
      %2563 = vst.msk [vmem:[#allocation3 + $0x38] sm:$0x1] %vm2550, 0
      %2564 = vst.msk [vmem:[#allocation3 + $0x3c] sm:$0xf] %vm2547, 0
      %2565 = vst.msk [vmem:[#allocation3 + $0x40] sm:$0xf] %vm2547, 0
      %2566 = vst.msk [vmem:[#allocation3 + $0x44] sm:$0x1] %vm2550, 0
      %2567 = vst.msk [vmem:[#allocation3 + $0x48] sm:$0xf] %vm2547, 0
      %2568 = vst.msk [vmem:[#allocation3 + $0x4c] sm:$0xf] %vm2547, 0
      %2569 = vst.msk [vmem:[#allocation3 + $0x50] sm:$0x1] %vm2550, 0
      %2570 = vst.msk [vmem:[#allocation3 + $0x54] sm:$0xf] %vm2547, 0
      %2571 = vst.msk [vmem:[#allocation3 + $0x58] sm:$0xf] %vm2547, 0
      %2572 = vst.msk [vmem:[#allocation3 + $0x5c] sm:$0x1] %vm2550, 0
      %2573 = vst.msk [vmem:[#allocation3 + $0x60] sm:$0xf] %vm2547, 0
      %2574 = vst.msk [vmem:[#allocation3 + $0x64] sm:$0xf] %vm2547, 0
      %2575 = vst.msk [vmem:[#allocation3 + $0x68] sm:$0x1] %vm2550, 0
      %2576 = vst.msk [vmem:[#allocation3 + $0x6c] sm:$0xf] %vm2547, 0
      %2577 = vst.msk [vmem:[#allocation3 + $0x70] sm:$0xf] %vm2547, 0
      %2578 = vst.msk [vmem:[#allocation3 + $0x74] sm:$0x1] %vm2550, 0
      %2579 = vst.msk [vmem:[#allocation3 + $0x78] sm:$0xf] %vm2547, 0
      %2580 = vst.msk [vmem:[#allocation3 + $0x7c] sm:$0xf] %vm2547, 0
      %2581 = vst.msk [vmem:[#allocation3 + $0x80] sm:$0x1] %vm2550, 0
      %2582 = vst.msk [vmem:[#allocation3 + $0x84] sm:$0xf] %vm2547, 0
      %2583 = vst.msk [vmem:[#allocation3 + $0x88] sm:$0xf] %vm2547, 0
      %2584 = vst.msk [vmem:[#allocation3 + $0x8c] sm:$0x1] %vm2550, 0
      %2585 = vst.msk [vmem:[#allocation3 + $0x90] sm:$0xf] %vm2547, 0
      %2586 = vst.msk [vmem:[#allocation3 + $0x94] sm:$0xf] %vm2547, 0
      %2587 = vst.msk [vmem:[#allocation3 + $0x98] sm:$0x1] %vm2550, 0
      %2588 = vst.msk [vmem:[#allocation3 + $0x9c] sm:$0xf] %vm2547, 0
      %2589 = vst.msk [vmem:[#allocation3 + $0xa0] sm:$0xf] %vm2547, 0
      %2590 = vst.msk [vmem:[#allocation3 + $0xa4] sm:$0x1] %vm2550, 0
      %2591 = vst.msk [vmem:[#allocation3 + $0xa8] sm:$0xf] %vm2547, 0
      %2592 = vst.msk [vmem:[#allocation3 + $0xac] sm:$0xf] %vm2547, 0
      %2593 = vst.msk [vmem:[#allocation3 + $0xb0] sm:$0x1] %vm2550, 0
      %2594 = vst.msk [vmem:[#allocation3 + $0xb4] sm:$0xf] %vm2547, 0
      %2595 = vst.msk [vmem:[#allocation3 + $0xb8] sm:$0xf] %vm2547, 0
      %2596 = vst.msk [vmem:[#allocation3 + $0xbc] sm:$0x1] %vm2550, 0
      %2597 = vst.msk [vmem:[#allocation3 + $0xc0] sm:$0xf] %vm2547, 0
      %2598 = vst.msk [vmem:[#allocation3 + $0xc4] sm:$0xf] %vm2547, 0
      %2599 = vst.msk [vmem:[#allocation3 + $0xc8] sm:$0x1] %vm2550, 0
      %2600 = vst.msk [vmem:[#allocation3 + $0xcc] sm:$0xf] %vm2547, 0
      %2601 = vst.msk [vmem:[#allocation3 + $0xd0] sm:$0xf] %vm2547, 0
      %2602 = vst.msk [vmem:[#allocation3 + $0xd4] sm:$0x1] %vm2550, 0
      %v2603 = vpack.c.bf16 %v2516, %v2515
      %v2604 = vpack.c.bf16 %v2518, %v2517
      %v2605 = vpack.c.bf16 %v2520, %v2519
      %v2606 = vpack.c.bf16 %v2522, %v2521
      %v2607 = vpack.c.bf16 %v2524, %v2523
      %v2608 = vpack.c.bf16 %v2526, %v2525
      %v2609 = vpack.c.bf16 %v2528, %v2527
      %v2610 = vpack.c.bf16 %v2530, %v2529
      %v2611 = vpack.c.bf16 %v2532, %v2531
      %v2612 = vpack.c.bf16 %v2534, %v2533
      %v2613 = vpack.c.bf16 %v2536, %v2535
      %v2614 = vpack.c.bf16 %v2538, %v2537
      %v2615 = vpack.c.bf16 %v2540, %v2539
      %v2616 = vpack.c.bf16 %v2542, %v2541
      %v2617 = vpack.c.bf16 %v2544, %v2543
      %v2618 = vpack.c.bf16 %v2546, %v2545
      %v2635 = vunpack.c.l.b16 %v2603
      %v2636 = vunpack.c.h.b16 %v2603
      %v2637 = vunpack.c.l.b16 %v2604
      %v2638 = vunpack.c.h.b16 %v2604
      %v2639 = vunpack.c.l.b16 %v2605
      %v2640 = vunpack.c.h.b16 %v2605
      %v2641 = vunpack.c.l.b16 %v2606
      %v2642 = vunpack.c.h.b16 %v2606
      %v2643 = vunpack.c.l.b16 %v2607
      %v2644 = vunpack.c.h.b16 %v2607
      %v2645 = vunpack.c.l.b16 %v2608
      %v2646 = vunpack.c.h.b16 %v2608
      %v2647 = vunpack.c.l.b16 %v2609
      %v2648 = vunpack.c.h.b16 %v2609
      %v2649 = vunpack.c.l.b16 %v2610
      %v2650 = vunpack.c.h.b16 %v2610
      %v2651 = vunpack.c.l.b16 %v2611
      %v2652 = vunpack.c.h.b16 %v2611
      %v2653 = vunpack.c.l.b16 %v2612
      %v2654 = vunpack.c.h.b16 %v2612
      %v2655 = vunpack.c.l.b16 %v2613
      %v2656 = vunpack.c.h.b16 %v2613
      %v2657 = vunpack.c.l.b16 %v2614
      %v2658 = vunpack.c.h.b16 %v2614
      %v2659 = vunpack.c.l.b16 %v2615
      %v2660 = vunpack.c.h.b16 %v2615
      %v2661 = vunpack.c.l.b16 %v2616
      %v2662 = vunpack.c.h.b16 %v2616
      %v2663 = vunpack.c.l.b16 %v2617
      %v2664 = vunpack.c.h.b16 %v2617
      %v2665 = vunpack.c.l.b16 %v2618
      %v2666 = vunpack.c.h.b16 %v2618
      %v2667 = vpack.c.b16 %v2635, %v2635
      %v2668 = vpack.c.b16 %v2636, %v2636
      %v2669 = vpack.c.b16 %v2637, %v2637
      %v2670 = vpack.c.b16 %v2638, %v2638
      %v2671 = vpack.c.b16 %v2639, %v2639
      %v2672 = vpack.c.b16 %v2640, %v2640
      %v2673 = vpack.c.b16 %v2641, %v2641
      %v2674 = vpack.c.b16 %v2642, %v2642
      %v2675 = vpack.c.b16 %v2643, %v2643
      %v2676 = vpack.c.b16 %v2644, %v2644
      %v2677 = vpack.c.b16 %v2645, %v2645
      %v2678 = vpack.c.b16 %v2646, %v2646
      %v2679 = vpack.c.b16 %v2647, %v2647
      %v2680 = vpack.c.b16 %v2648, %v2648
      %v2681 = vpack.c.b16 %v2649, %v2649
      %v2682 = vpack.c.b16 %v2650, %v2650
      %v2683 = vpack.c.b16 %v2651, %v2651
      %v2684 = vpack.c.b16 %v2652, %v2652
      %v2685 = vpack.c.b16 %v2653, %v2653
      %v2686 = vpack.c.b16 %v2654, %v2654
      %v2687 = vpack.c.b16 %v2655, %v2655
      %v2688 = vpack.c.b16 %v2656, %v2656
      %v2689 = vpack.c.b16 %v2657, %v2657
      %v2690 = vpack.c.b16 %v2658, %v2658
      %v2691 = vpack.c.b16 %v2659, %v2659
      %v2692 = vpack.c.b16 %v2660, %v2660
      %v2693 = vpack.c.b16 %v2661, %v2661
      %v2694 = vpack.c.b16 %v2662, %v2662
      %v2695 = vpack.c.b16 %v2663, %v2663
      %v2696 = vpack.c.b16 %v2664, %v2664
      %v2697 = vpack.c.b16 %v2665, %v2665
      %v2698 = vpack.c.b16 %v2666, %v2666
      %v2700 = vshrl.u32 %v2667, 16
      %v2702 = vrot.slane %v2700, 7
      %v2703 = vshll.u32 %v2667, 16
      %v2705 = vor.u32 %v2702, %v2703
      %v2706 = vrot.slane %v2702, 4
      %v2708 = vshrl.u32 %v2668, 16
      %v2710 = vrot.slane %v2708, 7
      %v2711 = vshll.u32 %v2668, 16
      %v2713 = vor.u32 %v2710, %v2711
      %v2714 = vsel %vm410, %v2706, %v2713
      %v2715 = vrot.slane %v2710, 4
      %v2717 = vshrl.u32 %v2669, 16
      %v2719 = vrot.slane %v2717, 7
      %v2720 = vshll.u32 %v2669, 16
      %v2722 = vor.u32 %v2719, %v2720
      %v2723 = vrot.slane %v2719, 4
      %v2725 = vshrl.u32 %v2670, 16
      %v2727 = vrot.slane %v2725, 7
      %v2728 = vshll.u32 %v2670, 16
      %v2730 = vor.u32 %v2727, %v2728
      %v2731 = vsel %vm410, %v2723, %v2730
      %v2732 = vrot.slane %v2727, 4
      %v2734 = vshrl.u32 %v2671, 16
      %v2736 = vrot.slane %v2734, 7
      %v2737 = vshll.u32 %v2671, 16
      %v2739 = vor.u32 %v2736, %v2737
      %v2740 = vrot.slane %v2736, 4
      %v2742 = vshrl.u32 %v2672, 16
      %v2744 = vrot.slane %v2742, 7
      %v2745 = vshll.u32 %v2672, 16
      %v2747 = vor.u32 %v2744, %v2745
      %v2748 = vsel %vm410, %v2740, %v2747
      %v2749 = vrot.slane %v2744, 4
      %v2751 = vshrl.u32 %v2673, 16
      %v2753 = vrot.slane %v2751, 7
      %v2754 = vshll.u32 %v2673, 16
      %v2756 = vor.u32 %v2753, %v2754
      %v2757 = vrot.slane %v2753, 4
      %v2759 = vshrl.u32 %v2674, 16
      %v2761 = vrot.slane %v2759, 7
      %v2762 = vshll.u32 %v2674, 16
      %v2764 = vor.u32 %v2761, %v2762
      %v2765 = vsel %vm410, %v2757, %v2764
      %v2766 = vrot.slane %v2761, 4
      %v2768 = vshrl.u32 %v2675, 16
      %v2770 = vrot.slane %v2768, 7
      %v2771 = vshll.u32 %v2675, 16
      %v2773 = vor.u32 %v2770, %v2771
      %v2774 = vrot.slane %v2770, 4
      %v2776 = vshrl.u32 %v2676, 16
      %v2778 = vrot.slane %v2776, 7
      %v2779 = vshll.u32 %v2676, 16
      %v2781 = vor.u32 %v2778, %v2779
      %v2782 = vsel %vm410, %v2774, %v2781
      %v2783 = vrot.slane %v2778, 4
      %v2785 = vshrl.u32 %v2677, 16
      %v2787 = vrot.slane %v2785, 7
      %v2788 = vshll.u32 %v2677, 16
      %v2790 = vor.u32 %v2787, %v2788
      %v2791 = vrot.slane %v2787, 4
      %v2793 = vshrl.u32 %v2678, 16
      %v2795 = vrot.slane %v2793, 7
      %v2796 = vshll.u32 %v2678, 16
      %v2798 = vor.u32 %v2795, %v2796
      %v2799 = vsel %vm410, %v2791, %v2798
      %v2800 = vrot.slane %v2795, 4
      %v2802 = vshrl.u32 %v2679, 16
      %v2804 = vrot.slane %v2802, 7
      %v2805 = vshll.u32 %v2679, 16
      %v2807 = vor.u32 %v2804, %v2805
      %v2808 = vrot.slane %v2804, 4
      %v2810 = vshrl.u32 %v2680, 16
      %v2812 = vrot.slane %v2810, 7
      %v2813 = vshll.u32 %v2680, 16
      %v2815 = vor.u32 %v2812, %v2813
      %v2816 = vsel %vm410, %v2808, %v2815
      %v2817 = vrot.slane %v2812, 4
      %v2819 = vshrl.u32 %v2681, 16
      %v2821 = vrot.slane %v2819, 7
      %v2822 = vshll.u32 %v2681, 16
      %v2824 = vor.u32 %v2821, %v2822
      %v2825 = vrot.slane %v2821, 4
      %v2827 = vshrl.u32 %v2682, 16
      %v2829 = vrot.slane %v2827, 7
      %v2830 = vshll.u32 %v2682, 16
      %v2832 = vor.u32 %v2829, %v2830
      %v2833 = vsel %vm410, %v2825, %v2832
      %v2834 = vrot.slane %v2829, 4
      %v2836 = vshrl.u32 %v2683, 16
      %v2838 = vrot.slane %v2836, 7
      %v2839 = vshll.u32 %v2683, 16
      %v2841 = vor.u32 %v2838, %v2839
      %v2842 = vrot.slane %v2838, 4
      %v2844 = vshrl.u32 %v2684, 16
      %v2846 = vrot.slane %v2844, 7
      %v2847 = vshll.u32 %v2684, 16
      %v2849 = vor.u32 %v2846, %v2847
      %v2850 = vsel %vm410, %v2842, %v2849
      %v2851 = vrot.slane %v2846, 4
      %v2853 = vshrl.u32 %v2685, 16
      %v2855 = vrot.slane %v2853, 7
      %v2856 = vshll.u32 %v2685, 16
      %v2858 = vor.u32 %v2855, %v2856
      %v2859 = vrot.slane %v2855, 4
      %v2861 = vshrl.u32 %v2686, 16
      %v2863 = vrot.slane %v2861, 7
      %v2864 = vshll.u32 %v2686, 16
      %v2866 = vor.u32 %v2863, %v2864
      %v2867 = vsel %vm410, %v2859, %v2866
      %v2868 = vrot.slane %v2863, 4
      %v2870 = vshrl.u32 %v2687, 16
      %v2872 = vrot.slane %v2870, 7
      %v2873 = vshll.u32 %v2687, 16
      %v2875 = vor.u32 %v2872, %v2873
      %v2876 = vrot.slane %v2872, 4
      %v2878 = vshrl.u32 %v2688, 16
      %v2880 = vrot.slane %v2878, 7
      %v2881 = vshll.u32 %v2688, 16
      %v2883 = vor.u32 %v2880, %v2881
      %v2884 = vsel %vm410, %v2876, %v2883
      %v2885 = vrot.slane %v2880, 4
      %v2887 = vshrl.u32 %v2689, 16
      %v2889 = vrot.slane %v2887, 7
      %v2890 = vshll.u32 %v2689, 16
      %v2892 = vor.u32 %v2889, %v2890
      %v2893 = vrot.slane %v2889, 4
      %v2895 = vshrl.u32 %v2690, 16
      %v2897 = vrot.slane %v2895, 7
      %v2898 = vshll.u32 %v2690, 16
      %v2900 = vor.u32 %v2897, %v2898
      %v2901 = vsel %vm410, %v2893, %v2900
      %v2902 = vrot.slane %v2897, 4
      %v2904 = vshrl.u32 %v2691, 16
      %v2906 = vrot.slane %v2904, 7
      %v2907 = vshll.u32 %v2691, 16
      %v2909 = vor.u32 %v2906, %v2907
      %v2910 = vrot.slane %v2906, 4
      %v2912 = vshrl.u32 %v2692, 16
      %v2914 = vrot.slane %v2912, 7
      %v2915 = vshll.u32 %v2692, 16
      %v2917 = vor.u32 %v2914, %v2915
      %v2918 = vsel %vm410, %v2910, %v2917
      %v2919 = vrot.slane %v2914, 4
      %v2921 = vshrl.u32 %v2693, 16
      %v2923 = vrot.slane %v2921, 7
      %v2924 = vshll.u32 %v2693, 16
      %v2926 = vor.u32 %v2923, %v2924
      %v2927 = vrot.slane %v2923, 4
      %v2929 = vshrl.u32 %v2694, 16
      %v2931 = vrot.slane %v2929, 7
      %v2932 = vshll.u32 %v2694, 16
      %v2934 = vor.u32 %v2931, %v2932
      %v2935 = vsel %vm410, %v2927, %v2934
      %v2936 = vrot.slane %v2931, 4
      %v2938 = vshrl.u32 %v2695, 16
      %v2940 = vrot.slane %v2938, 7
      %v2941 = vshll.u32 %v2695, 16
      %v2943 = vor.u32 %v2940, %v2941
      %v2944 = vrot.slane %v2940, 4
      %v2946 = vshrl.u32 %v2696, 16
      %v2948 = vrot.slane %v2946, 7
      %v2949 = vshll.u32 %v2696, 16
      %v2951 = vor.u32 %v2948, %v2949
      %v2952 = vsel %vm410, %v2944, %v2951
      %v2953 = vrot.slane %v2948, 4
      %v2955 = vshrl.u32 %v2697, 16
      %v2957 = vrot.slane %v2955, 7
      %v2958 = vshll.u32 %v2697, 16
      %v2960 = vor.u32 %v2957, %v2958
      %v2961 = vrot.slane %v2957, 4
      %v2963 = vshrl.u32 %v2698, 16
      %v2965 = vrot.slane %v2963, 7
      %v2966 = vshll.u32 %v2698, 16
      %v2968 = vor.u32 %v2965, %v2966
      %v2969 = vsel %vm410, %v2961, %v2968
      %v2970 = vrot.slane %v2965, 4
      %s3019 = scalar_lea.vmem [#allocation3], 12
      %vm3020 = vcmask 60416
      %vm3021 = vmand %vm3020, %vm733
      %v3022 = vld [vmem:[%s3019] sm:$0xf]
      %v3023 = vsel %vm3021, %v2705, %v3022
      %3024 = vst [vmem:[%s3019] sm:$0xf] %v3023
      %3025 = vst.msk [vmem:[%s3019 + $0x4] sm:$0xf] %vm2547, %v2714
      %vm3026 = vcmask 57344
      %vm3027 = vmand %vm3026, %vm408
      %v3028 = vld [vmem:[%s3019 + $0x8] sm:$0x1]
      %v3029 = vsel %vm3027, %v2715, %v3028
      %3030 = vst [vmem:[%s3019 + $0x8] sm:$0x1] %v3029
      %v3031 = vld [vmem:[%s3019 + $0xc] sm:$0xf]
      %v3032 = vsel %vm3021, %v2722, %v3031
      %3033 = vst [vmem:[%s3019 + $0xc] sm:$0xf] %v3032
      %3034 = vst.msk [vmem:[%s3019 + $0x10] sm:$0xf] %vm2547, %v2731
      %v3035 = vld [vmem:[%s3019 + $0x14] sm:$0x1]
      %v3036 = vsel %vm3027, %v2732, %v3035
      %3037 = vst [vmem:[%s3019 + $0x14] sm:$0x1] %v3036
      %v3038 = vld [vmem:[%s3019 + $0x18] sm:$0xf]
      %v3039 = vsel %vm3021, %v2739, %v3038
      %3040 = vst [vmem:[%s3019 + $0x18] sm:$0xf] %v3039
      %3041 = vst.msk [vmem:[%s3019 + $0x1c] sm:$0xf] %vm2547, %v2748
      %v3042 = vld [vmem:[%s3019 + $0x20] sm:$0x1]
      %v3043 = vsel %vm3027, %v2749, %v3042
      %3044 = vst [vmem:[%s3019 + $0x20] sm:$0x1] %v3043
      %v3045 = vld [vmem:[%s3019 + $0x24] sm:$0xf]
      %v3046 = vsel %vm3021, %v2756, %v3045
      %3047 = vst [vmem:[%s3019 + $0x24] sm:$0xf] %v3046
      %3048 = vst.msk [vmem:[%s3019 + $0x28] sm:$0xf] %vm2547, %v2765
      %v3049 = vld [vmem:[%s3019 + $0x2c] sm:$0x1]
      %v3050 = vsel %vm3027, %v2766, %v3049
      %3051 = vst [vmem:[%s3019 + $0x2c] sm:$0x1] %v3050
      %v3052 = vld [vmem:[%s3019 + $0x30] sm:$0xf]
      %v3053 = vsel %vm3021, %v2773, %v3052
      %3054 = vst [vmem:[%s3019 + $0x30] sm:$0xf] %v3053
      %3055 = vst.msk [vmem:[%s3019 + $0x34] sm:$0xf] %vm2547, %v2782
      %v3056 = vld [vmem:[%s3019 + $0x38] sm:$0x1]
      %v3057 = vsel %vm3027, %v2783, %v3056
      %3058 = vst [vmem:[%s3019 + $0x38] sm:$0x1] %v3057
      %v3059 = vld [vmem:[%s3019 + $0x3c] sm:$0xf]
      %v3060 = vsel %vm3021, %v2790, %v3059
      %3061 = vst [vmem:[%s3019 + $0x3c] sm:$0xf] %v3060
      %3062 = vst.msk [vmem:[%s3019 + $0x40] sm:$0xf] %vm2547, %v2799
      %v3063 = vld [vmem:[%s3019 + $0x44] sm:$0x1]
      %v3064 = vsel %vm3027, %v2800, %v3063
      %3065 = vst [vmem:[%s3019 + $0x44] sm:$0x1] %v3064
      %v3066 = vld [vmem:[%s3019 + $0x48] sm:$0xf]
      %v3067 = vsel %vm3021, %v2807, %v3066
      %3068 = vst [vmem:[%s3019 + $0x48] sm:$0xf] %v3067
      %3069 = vst.msk [vmem:[%s3019 + $0x4c] sm:$0xf] %vm2547, %v2816
      %v3070 = vld [vmem:[%s3019 + $0x50] sm:$0x1]
      %v3071 = vsel %vm3027, %v2817, %v3070
      %3072 = vst [vmem:[%s3019 + $0x50] sm:$0x1] %v3071
      %v3073 = vld [vmem:[%s3019 + $0x54] sm:$0xf]
      %v3074 = vsel %vm3021, %v2824, %v3073
      %3075 = vst [vmem:[%s3019 + $0x54] sm:$0xf] %v3074
      %3076 = vst.msk [vmem:[%s3019 + $0x58] sm:$0xf] %vm2547, %v2833
      %v3077 = vld [vmem:[%s3019 + $0x5c] sm:$0x1]
      %v3078 = vsel %vm3027, %v2834, %v3077
      %3079 = vst [vmem:[%s3019 + $0x5c] sm:$0x1] %v3078
      %v3080 = vld [vmem:[%s3019 + $0x60] sm:$0xf]
      %v3081 = vsel %vm3021, %v2841, %v3080
      %3082 = vst [vmem:[%s3019 + $0x60] sm:$0xf] %v3081
      %3083 = vst.msk [vmem:[%s3019 + $0x64] sm:$0xf] %vm2547, %v2850
      %v3084 = vld [vmem:[%s3019 + $0x68] sm:$0x1]
      %v3085 = vsel %vm3027, %v2851, %v3084
      %3086 = vst [vmem:[%s3019 + $0x68] sm:$0x1] %v3085
      %v3087 = vld [vmem:[%s3019 + $0x6c] sm:$0xf]
      %v3088 = vsel %vm3021, %v2858, %v3087
      %3089 = vst [vmem:[%s3019 + $0x6c] sm:$0xf] %v3088
      %3090 = vst.msk [vmem:[%s3019 + $0x70] sm:$0xf] %vm2547, %v2867
      %v3091 = vld [vmem:[%s3019 + $0x74] sm:$0x1]
      %v3092 = vsel %vm3027, %v2868, %v3091
      %3093 = vst [vmem:[%s3019 + $0x74] sm:$0x1] %v3092
      %v3094 = vld [vmem:[%s3019 + $0x78] sm:$0xf]
      %v3095 = vsel %vm3021, %v2875, %v3094
      %3096 = vst [vmem:[%s3019 + $0x78] sm:$0xf] %v3095
      %3097 = vst.msk [vmem:[%s3019 + $0x7c] sm:$0xf] %vm2547, %v2884
      %v3098 = vld [vmem:[%s3019 + $0x80] sm:$0x1]
      %v3099 = vsel %vm3027, %v2885, %v3098
      %3100 = vst [vmem:[%s3019 + $0x80] sm:$0x1] %v3099
      %v3101 = vld [vmem:[%s3019 + $0x84] sm:$0xf]
      %v3102 = vsel %vm3021, %v2892, %v3101
      %3103 = vst [vmem:[%s3019 + $0x84] sm:$0xf] %v3102
      %3104 = vst.msk [vmem:[%s3019 + $0x88] sm:$0xf] %vm2547, %v2901
      %v3105 = vld [vmem:[%s3019 + $0x8c] sm:$0x1]
      %v3106 = vsel %vm3027, %v2902, %v3105
      %3107 = vst [vmem:[%s3019 + $0x8c] sm:$0x1] %v3106
      %v3108 = vld [vmem:[%s3019 + $0x90] sm:$0xf]
      %v3109 = vsel %vm3021, %v2909, %v3108
      %3110 = vst [vmem:[%s3019 + $0x90] sm:$0xf] %v3109
      %3111 = vst.msk [vmem:[%s3019 + $0x94] sm:$0xf] %vm2547, %v2918
      %v3112 = vld [vmem:[%s3019 + $0x98] sm:$0x1]
      %v3113 = vsel %vm3027, %v2919, %v3112
      %3114 = vst [vmem:[%s3019 + $0x98] sm:$0x1] %v3113
      %v3115 = vld [vmem:[%s3019 + $0x9c] sm:$0xf]
      %v3116 = vsel %vm3021, %v2926, %v3115
      %3117 = vst [vmem:[%s3019 + $0x9c] sm:$0xf] %v3116
      %3118 = vst.msk [vmem:[%s3019 + $0xa0] sm:$0xf] %vm2547, %v2935
      %v3119 = vld [vmem:[%s3019 + $0xa4] sm:$0x1]
      %v3120 = vsel %vm3027, %v2936, %v3119
      %3121 = vst [vmem:[%s3019 + $0xa4] sm:$0x1] %v3120
      %v3122 = vld [vmem:[%s3019 + $0xa8] sm:$0xf]
      %v3123 = vsel %vm3021, %v2943, %v3122
      %3124 = vst [vmem:[%s3019 + $0xa8] sm:$0xf] %v3123
      %3125 = vst.msk [vmem:[%s3019 + $0xac] sm:$0xf] %vm2547, %v2952
      %v3126 = vld [vmem:[%s3019 + $0xb0] sm:$0x1]
      %v3127 = vsel %vm3027, %v2953, %v3126
      %3128 = vst [vmem:[%s3019 + $0xb0] sm:$0x1] %v3127
      %v3129 = vld [vmem:[%s3019 + $0xb4] sm:$0xf]
      %v3130 = vsel %vm3021, %v2960, %v3129
      %3131 = vst [vmem:[%s3019 + $0xb4] sm:$0xf] %v3130
      %3132 = vst.msk [vmem:[%s3019 + $0xb8] sm:$0xf] %vm2547, %v2969
      %v3133 = vld [vmem:[%s3019 + $0xbc] sm:$0x1]
      %v3134 = vsel %vm3027, %v2970, %v3133
      %3135 = vst [vmem:[%s3019 + $0xbc] sm:$0x1] %v3134
      %v3136 = vld [vmem:[#allocation3] sm:$0xf]
      %v3137 = vld [vmem:[#allocation3 + $0x4] sm:$0xf]
      %v3138 = vld [vmem:[#allocation3 + $0x8] sm:$0x1]
      %v3139 = vld [vmem:[#allocation3 + $0xc] sm:$0xf]
      %v3140 = vld [vmem:[#allocation3 + $0x10] sm:$0xf]
      %v3141 = vld [vmem:[#allocation3 + $0x14] sm:$0x1]
      %v3142 = vld [vmem:[#allocation3 + $0x18] sm:$0xf]
      %v3143 = vld [vmem:[#allocation3 + $0x1c] sm:$0xf]
      %v3144 = vld [vmem:[#allocation3 + $0x20] sm:$0x1]
      %v3145 = vld [vmem:[#allocation3 + $0x24] sm:$0xf]
      %v3146 = vld [vmem:[#allocation3 + $0x28] sm:$0xf]
      %v3147 = vld [vmem:[#allocation3 + $0x2c] sm:$0x1]
      %v3148 = vld [vmem:[#allocation3 + $0x30] sm:$0xf]
      %v3149 = vld [vmem:[#allocation3 + $0x34] sm:$0xf]
      %v3150 = vld [vmem:[#allocation3 + $0x38] sm:$0x1]
      %v3151 = vld [vmem:[#allocation3 + $0x3c] sm:$0xf]
      %v3152 = vld [vmem:[#allocation3 + $0x40] sm:$0xf]
      %v3153 = vld [vmem:[#allocation3 + $0x44] sm:$0x1]
      %v3154 = vld [vmem:[#allocation3 + $0x48] sm:$0xf]
      %v3155 = vld [vmem:[#allocation3 + $0x4c] sm:$0xf]
      %v3156 = vld [vmem:[#allocation3 + $0x50] sm:$0x1]
      %v3157 = vld [vmem:[#allocation3 + $0x54] sm:$0xf]
      %v3158 = vld [vmem:[#allocation3 + $0x58] sm:$0xf]
      %v3159 = vld [vmem:[#allocation3 + $0x5c] sm:$0x1]
      %v3160 = vld [vmem:[#allocation3 + $0x60] sm:$0xf]
      %v3161 = vld [vmem:[#allocation3 + $0x64] sm:$0xf]
      %v3162 = vld [vmem:[#allocation3 + $0x68] sm:$0x1]
      %v3163 = vld [vmem:[#allocation3 + $0x6c] sm:$0xf]
      %v3164 = vld [vmem:[#allocation3 + $0x70] sm:$0xf]
      %v3165 = vld [vmem:[#allocation3 + $0x74] sm:$0x1]
      %v3166 = vld [vmem:[#allocation3 + $0x78] sm:$0xf]
      %v3167 = vld [vmem:[#allocation3 + $0x7c] sm:$0xf]
      %v3168 = vld [vmem:[#allocation3 + $0x80] sm:$0x1]
      %v3169 = vld [vmem:[#allocation3 + $0x84] sm:$0xf]
      %v3170 = vld [vmem:[#allocation3 + $0x88] sm:$0xf]
      %v3171 = vld [vmem:[#allocation3 + $0x8c] sm:$0x1]
      %v3172 = vld [vmem:[#allocation3 + $0x90] sm:$0xf]
      %v3173 = vld [vmem:[#allocation3 + $0x94] sm:$0xf]
      %v3174 = vld [vmem:[#allocation3 + $0x98] sm:$0x1]
      %v3175 = vld [vmem:[#allocation3 + $0x9c] sm:$0xf]
      %v3176 = vld [vmem:[#allocation3 + $0xa0] sm:$0xf]
      %v3177 = vld [vmem:[#allocation3 + $0xa4] sm:$0x1]
      %v3178 = vld [vmem:[#allocation3 + $0xa8] sm:$0xf]
      %v3179 = vld [vmem:[#allocation3 + $0xac] sm:$0xf]
      %v3180 = vld [vmem:[#allocation3 + $0xb0] sm:$0x1]
      %v3181 = vld [vmem:[#allocation3 + $0xb4] sm:$0xf]
      %v3182 = vld [vmem:[#allocation3 + $0xb8] sm:$0xf]
      %v3183 = vld [vmem:[#allocation3 + $0xbc] sm:$0x1]
      %v3184 = vld [vmem:[#allocation3 + $0xc0] sm:$0xf]
      %v3185 = vld [vmem:[#allocation3 + $0xc4] sm:$0xf]
      %v3186 = vld [vmem:[#allocation3 + $0xc8] sm:$0x1]
      %v3187 = vld [vmem:[#allocation3 + $0xcc] sm:$0xf]
      %v3188 = vld [vmem:[#allocation3 + $0xd0] sm:$0xf]
      %v3189 = vld [vmem:[#allocation3 + $0xd4] sm:$0x1]
      %v3190 = vld [vmem:[%s4] sm:$0xf]
      %v3191 = vld [vmem:[%s4 + $0x4] sm:$0xf]
      %v3192 = vld [vmem:[%s4 + $0x8] sm:$0xf]
      %v3193 = vld [vmem:[%s4 + $0xc] sm:$0xf]
      %v3194 = vld [vmem:[%s4 + $0x10] sm:$0xf]
      %v3195 = vld [vmem:[%s4 + $0x14] sm:$0xf]
      %v3196 = vld [vmem:[%s4 + $0x18] sm:$0xf]
      %v3197 = vld [vmem:[%s4 + $0x1c] sm:$0xf]
      %v3198 = vld [vmem:[%s4 + $0x20] sm:$0xf]
      %v3199 = vld [vmem:[%s5] sm:$0x1]
      %v3200 = vld [vmem:[%s6] sm:$0x1]
      %v3202 = vshrl.u32 %v3136, 16
      %v3204 = vrot.slane %v3202, 4
      %v3205 = vshll.u32 %v3136, 16
      %v3207 = vrot.slane %v3205, 5
      %v3208 = vor.u32 %v3204, %v3207
      %v3209 = vrot.slane %v3208, 4
      %v3211 = vshll.u32 %v3137, 16
      %v3213 = vrot.slane %v3211, 5
      %v3214 = vsel %vm912, %v3209, %v3213
      %v3215 = vshrl.u32 %v3137, 16
      %v3217 = vrot.slane %v3215, 4
      %v3218 = vor.u32 %v3217, %v3213
      %v3219 = vrot.slane %v3218, 4
      %v3221 = vshll.u32 %v3138, 16
      %v3223 = vrot.slane %v3221, 5
      %v3224 = vsel %vm912, %v3219, %v3223
      %v3226 = vshrl.u32 %v3139, 16
      %v3228 = vrot.slane %v3226, 4
      %v3229 = vshll.u32 %v3139, 16
      %v3231 = vrot.slane %v3229, 5
      %v3232 = vor.u32 %v3228, %v3231
      %v3233 = vrot.slane %v3232, 4
      %v3235 = vshll.u32 %v3140, 16
      %v3237 = vrot.slane %v3235, 5
      %v3238 = vsel %vm912, %v3233, %v3237
      %v3239 = vshrl.u32 %v3140, 16
      %v3241 = vrot.slane %v3239, 4
      %v3242 = vor.u32 %v3241, %v3237
      %v3243 = vrot.slane %v3242, 4
      %v3245 = vshll.u32 %v3141, 16
      %v3247 = vrot.slane %v3245, 5
      %v3248 = vsel %vm912, %v3243, %v3247
      %v3250 = vshrl.u32 %v3142, 16
      %v3252 = vrot.slane %v3250, 4
      %v3253 = vshll.u32 %v3142, 16
      %v3255 = vrot.slane %v3253, 5
      %v3256 = vor.u32 %v3252, %v3255
      %v3257 = vrot.slane %v3256, 4
      %v3259 = vshll.u32 %v3143, 16
      %v3261 = vrot.slane %v3259, 5
      %v3262 = vsel %vm912, %v3257, %v3261
      %v3263 = vshrl.u32 %v3143, 16
      %v3265 = vrot.slane %v3263, 4
      %v3266 = vor.u32 %v3265, %v3261
      %v3267 = vrot.slane %v3266, 4
      %v3269 = vshll.u32 %v3144, 16
      %v3271 = vrot.slane %v3269, 5
      %v3272 = vsel %vm912, %v3267, %v3271
      %v3274 = vshrl.u32 %v3145, 16
      %v3276 = vrot.slane %v3274, 4
      %v3277 = vshll.u32 %v3145, 16
      %v3279 = vrot.slane %v3277, 5
      %v3280 = vor.u32 %v3276, %v3279
      %v3281 = vrot.slane %v3280, 4
      %v3283 = vshll.u32 %v3146, 16
      %v3285 = vrot.slane %v3283, 5
      %v3286 = vsel %vm912, %v3281, %v3285
      %v3287 = vshrl.u32 %v3146, 16
      %v3289 = vrot.slane %v3287, 4
      %v3290 = vor.u32 %v3289, %v3285
      %v3291 = vrot.slane %v3290, 4
      %v3293 = vshll.u32 %v3147, 16
      %v3295 = vrot.slane %v3293, 5
      %v3296 = vsel %vm912, %v3291, %v3295
      %v3298 = vshrl.u32 %v3148, 16
      %v3300 = vrot.slane %v3298, 4
      %v3301 = vshll.u32 %v3148, 16
      %v3303 = vrot.slane %v3301, 5
      %v3304 = vor.u32 %v3300, %v3303
      %v3305 = vrot.slane %v3304, 4
      %v3307 = vshll.u32 %v3149, 16
      %v3309 = vrot.slane %v3307, 5
      %v3310 = vsel %vm912, %v3305, %v3309
      %v3311 = vshrl.u32 %v3149, 16
      %v3313 = vrot.slane %v3311, 4
      %v3314 = vor.u32 %v3313, %v3309
      %v3315 = vrot.slane %v3314, 4
      %v3317 = vshll.u32 %v3150, 16
      %v3319 = vrot.slane %v3317, 5
      %v3320 = vsel %vm912, %v3315, %v3319
      %v3322 = vshrl.u32 %v3151, 16
      %v3324 = vrot.slane %v3322, 4
      %v3325 = vshll.u32 %v3151, 16
      %v3327 = vrot.slane %v3325, 5
      %v3328 = vor.u32 %v3324, %v3327
      %v3329 = vrot.slane %v3328, 4
      %v3331 = vshll.u32 %v3152, 16
      %v3333 = vrot.slane %v3331, 5
      %v3334 = vsel %vm912, %v3329, %v3333
      %v3335 = vshrl.u32 %v3152, 16
      %v3337 = vrot.slane %v3335, 4
      %v3338 = vor.u32 %v3337, %v3333
      %v3339 = vrot.slane %v3338, 4
      %v3341 = vshll.u32 %v3153, 16
      %v3343 = vrot.slane %v3341, 5
      %v3344 = vsel %vm912, %v3339, %v3343
      %v3346 = vshrl.u32 %v3154, 16
      %v3348 = vrot.slane %v3346, 4
      %v3349 = vshll.u32 %v3154, 16
      %v3351 = vrot.slane %v3349, 5
      %v3352 = vor.u32 %v3348, %v3351
      %v3353 = vrot.slane %v3352, 4
      %v3355 = vshll.u32 %v3155, 16
      %v3357 = vrot.slane %v3355, 5
      %v3358 = vsel %vm912, %v3353, %v3357
      %v3359 = vshrl.u32 %v3155, 16
      %v3361 = vrot.slane %v3359, 4
      %v3362 = vor.u32 %v3361, %v3357
      %v3363 = vrot.slane %v3362, 4
      %v3365 = vshll.u32 %v3156, 16
      %v3367 = vrot.slane %v3365, 5
      %v3368 = vsel %vm912, %v3363, %v3367
      %v3370 = vshrl.u32 %v3157, 16
      %v3372 = vrot.slane %v3370, 4
      %v3373 = vshll.u32 %v3157, 16
      %v3375 = vrot.slane %v3373, 5
      %v3376 = vor.u32 %v3372, %v3375
      %v3377 = vrot.slane %v3376, 4
      %v3379 = vshll.u32 %v3158, 16
      %v3381 = vrot.slane %v3379, 5
      %v3382 = vsel %vm912, %v3377, %v3381
      %v3383 = vshrl.u32 %v3158, 16
      %v3385 = vrot.slane %v3383, 4
      %v3386 = vor.u32 %v3385, %v3381
      %v3387 = vrot.slane %v3386, 4
      %v3389 = vshll.u32 %v3159, 16
      %v3391 = vrot.slane %v3389, 5
      %v3392 = vsel %vm912, %v3387, %v3391
      %v3394 = vshrl.u32 %v3160, 16
      %v3396 = vrot.slane %v3394, 4
      %v3397 = vshll.u32 %v3160, 16
      %v3399 = vrot.slane %v3397, 5
      %v3400 = vor.u32 %v3396, %v3399
      %v3401 = vrot.slane %v3400, 4
      %v3403 = vshll.u32 %v3161, 16
      %v3405 = vrot.slane %v3403, 5
      %v3406 = vsel %vm912, %v3401, %v3405
      %v3407 = vshrl.u32 %v3161, 16
      %v3409 = vrot.slane %v3407, 4
      %v3410 = vor.u32 %v3409, %v3405
      %v3411 = vrot.slane %v3410, 4
      %v3413 = vshll.u32 %v3162, 16
      %v3415 = vrot.slane %v3413, 5
      %v3416 = vsel %vm912, %v3411, %v3415
      %v3418 = vshrl.u32 %v3163, 16
      %v3420 = vrot.slane %v3418, 4
      %v3421 = vshll.u32 %v3163, 16
      %v3423 = vrot.slane %v3421, 5
      %v3424 = vor.u32 %v3420, %v3423
      %v3425 = vrot.slane %v3424, 4
      %v3427 = vshll.u32 %v3164, 16
      %v3429 = vrot.slane %v3427, 5
      %v3430 = vsel %vm912, %v3425, %v3429
      %v3431 = vshrl.u32 %v3164, 16
      %v3433 = vrot.slane %v3431, 4
      %v3434 = vor.u32 %v3433, %v3429
      %v3435 = vrot.slane %v3434, 4
      %v3437 = vshll.u32 %v3165, 16
      %v3439 = vrot.slane %v3437, 5
      %v3440 = vsel %vm912, %v3435, %v3439
      %v3442 = vshrl.u32 %v3166, 16
      %v3444 = vrot.slane %v3442, 4
      %v3445 = vshll.u32 %v3166, 16
      %v3447 = vrot.slane %v3445, 5
      %v3448 = vor.u32 %v3444, %v3447
      %v3449 = vrot.slane %v3448, 4
      %v3451 = vshll.u32 %v3167, 16
      %v3453 = vrot.slane %v3451, 5
      %v3454 = vsel %vm912, %v3449, %v3453
      %v3455 = vshrl.u32 %v3167, 16
      %v3457 = vrot.slane %v3455, 4
      %v3458 = vor.u32 %v3457, %v3453
      %v3459 = vrot.slane %v3458, 4
      %v3461 = vshll.u32 %v3168, 16
      %v3463 = vrot.slane %v3461, 5
      %v3464 = vsel %vm912, %v3459, %v3463
      %v3466 = vshrl.u32 %v3169, 16
      %v3468 = vrot.slane %v3466, 4
      %v3469 = vshll.u32 %v3169, 16
      %v3471 = vrot.slane %v3469, 5
      %v3472 = vor.u32 %v3468, %v3471
      %v3473 = vrot.slane %v3472, 4
      %v3475 = vshll.u32 %v3170, 16
      %v3477 = vrot.slane %v3475, 5
      %v3478 = vsel %vm912, %v3473, %v3477
      %v3479 = vshrl.u32 %v3170, 16
      %v3481 = vrot.slane %v3479, 4
      %v3482 = vor.u32 %v3481, %v3477
      %v3483 = vrot.slane %v3482, 4
      %v3485 = vshll.u32 %v3171, 16
      %v3487 = vrot.slane %v3485, 5
      %v3488 = vsel %vm912, %v3483, %v3487
      %v3490 = vshrl.u32 %v3172, 16
      %v3492 = vrot.slane %v3490, 4
      %v3493 = vshll.u32 %v3172, 16
      %v3495 = vrot.slane %v3493, 5
      %v3496 = vor.u32 %v3492, %v3495
      %v3497 = vrot.slane %v3496, 4
      %v3499 = vshll.u32 %v3173, 16
      %v3501 = vrot.slane %v3499, 5
      %v3502 = vsel %vm912, %v3497, %v3501
      %v3503 = vshrl.u32 %v3173, 16
      %v3505 = vrot.slane %v3503, 4
      %v3506 = vor.u32 %v3505, %v3501
      %v3507 = vrot.slane %v3506, 4
      %v3509 = vshll.u32 %v3174, 16
      %v3511 = vrot.slane %v3509, 5
      %v3512 = vsel %vm912, %v3507, %v3511
      %v3514 = vshrl.u32 %v3175, 16
      %v3516 = vrot.slane %v3514, 4
      %v3517 = vshll.u32 %v3175, 16
      %v3519 = vrot.slane %v3517, 5
      %v3520 = vor.u32 %v3516, %v3519
      %v3521 = vrot.slane %v3520, 4
      %v3523 = vshll.u32 %v3176, 16
      %v3525 = vrot.slane %v3523, 5
      %v3526 = vsel %vm912, %v3521, %v3525
      %v3527 = vshrl.u32 %v3176, 16
      %v3529 = vrot.slane %v3527, 4
      %v3530 = vor.u32 %v3529, %v3525
      %v3531 = vrot.slane %v3530, 4
      %v3533 = vshll.u32 %v3177, 16
      %v3535 = vrot.slane %v3533, 5
      %v3536 = vsel %vm912, %v3531, %v3535
      %v3538 = vshrl.u32 %v3178, 16
      %v3540 = vrot.slane %v3538, 4
      %v3541 = vshll.u32 %v3178, 16
      %v3543 = vrot.slane %v3541, 5
      %v3544 = vor.u32 %v3540, %v3543
      %v3545 = vrot.slane %v3544, 4
      %v3547 = vshll.u32 %v3179, 16
      %v3549 = vrot.slane %v3547, 5
      %v3550 = vsel %vm912, %v3545, %v3549
      %v3551 = vshrl.u32 %v3179, 16
      %v3553 = vrot.slane %v3551, 4
      %v3554 = vor.u32 %v3553, %v3549
      %v3555 = vrot.slane %v3554, 4
      %v3557 = vshll.u32 %v3180, 16
      %v3559 = vrot.slane %v3557, 5
      %v3560 = vsel %vm912, %v3555, %v3559
      %v3562 = vshrl.u32 %v3181, 16
      %v3564 = vrot.slane %v3562, 4
      %v3565 = vshll.u32 %v3181, 16
      %v3567 = vrot.slane %v3565, 5
      %v3568 = vor.u32 %v3564, %v3567
      %v3569 = vrot.slane %v3568, 4
      %v3571 = vshll.u32 %v3182, 16
      %v3573 = vrot.slane %v3571, 5
      %v3574 = vsel %vm912, %v3569, %v3573
      %v3575 = vshrl.u32 %v3182, 16
      %v3577 = vrot.slane %v3575, 4
      %v3578 = vor.u32 %v3577, %v3573
      %v3579 = vrot.slane %v3578, 4
      %v3581 = vshll.u32 %v3183, 16
      %v3583 = vrot.slane %v3581, 5
      %v3584 = vsel %vm912, %v3579, %v3583
      %v3633 = vrot.slane %v3136, 5
      %v3634 = vrot.slane %v3633, 4
      %v3635 = vrot.slane %v3137, 5
      %v3636 = vsel %vm1347, %v3634, %v3635
      %v3637 = vrot.slane %v3635, 4
      %v3638 = vrot.slane %v3138, 5
      %v3639 = vsel %vm1347, %v3637, %v3638
      %v3640 = vrot.slane %v3139, 5
      %v3641 = vrot.slane %v3640, 4
      %v3642 = vrot.slane %v3140, 5
      %v3643 = vsel %vm1347, %v3641, %v3642
      %v3644 = vrot.slane %v3642, 4
      %v3645 = vrot.slane %v3141, 5
      %v3646 = vsel %vm1347, %v3644, %v3645
      %v3647 = vrot.slane %v3142, 5
      %v3648 = vrot.slane %v3647, 4
      %v3649 = vrot.slane %v3143, 5
      %v3650 = vsel %vm1347, %v3648, %v3649
      %v3651 = vrot.slane %v3649, 4
      %v3652 = vrot.slane %v3144, 5
      %v3653 = vsel %vm1347, %v3651, %v3652
      %v3654 = vrot.slane %v3145, 5
      %v3655 = vrot.slane %v3654, 4
      %v3656 = vrot.slane %v3146, 5
      %v3657 = vsel %vm1347, %v3655, %v3656
      %v3658 = vrot.slane %v3656, 4
      %v3659 = vrot.slane %v3147, 5
      %v3660 = vsel %vm1347, %v3658, %v3659
      %v3661 = vrot.slane %v3148, 5
      %v3662 = vrot.slane %v3661, 4
      %v3663 = vrot.slane %v3149, 5
      %v3664 = vsel %vm1347, %v3662, %v3663
      %v3665 = vrot.slane %v3663, 4
      %v3666 = vrot.slane %v3150, 5
      %v3667 = vsel %vm1347, %v3665, %v3666
      %v3668 = vrot.slane %v3151, 5
      %v3669 = vrot.slane %v3668, 4
      %v3670 = vrot.slane %v3152, 5
      %v3671 = vsel %vm1347, %v3669, %v3670
      %v3672 = vrot.slane %v3670, 4
      %v3673 = vrot.slane %v3153, 5
      %v3674 = vsel %vm1347, %v3672, %v3673
      %v3675 = vrot.slane %v3154, 5
      %v3676 = vrot.slane %v3675, 4
      %v3677 = vrot.slane %v3155, 5
      %v3678 = vsel %vm1347, %v3676, %v3677
      %v3679 = vrot.slane %v3677, 4
      %v3680 = vrot.slane %v3156, 5
      %v3681 = vsel %vm1347, %v3679, %v3680
      %v3682 = vrot.slane %v3157, 5
      %v3683 = vrot.slane %v3682, 4
      %v3684 = vrot.slane %v3158, 5
      %v3685 = vsel %vm1347, %v3683, %v3684
      %v3686 = vrot.slane %v3684, 4
      %v3687 = vrot.slane %v3159, 5
      %v3688 = vsel %vm1347, %v3686, %v3687
      %v3689 = vrot.slane %v3160, 5
      %v3690 = vrot.slane %v3689, 4
      %v3691 = vrot.slane %v3161, 5
      %v3692 = vsel %vm1347, %v3690, %v3691
      %v3693 = vrot.slane %v3691, 4
      %v3694 = vrot.slane %v3162, 5
      %v3695 = vsel %vm1347, %v3693, %v3694
      %v3696 = vrot.slane %v3163, 5
      %v3697 = vrot.slane %v3696, 4
      %v3698 = vrot.slane %v3164, 5
      %v3699 = vsel %vm1347, %v3697, %v3698
      %v3700 = vrot.slane %v3698, 4
      %v3701 = vrot.slane %v3165, 5
      %v3702 = vsel %vm1347, %v3700, %v3701
      %v3703 = vrot.slane %v3166, 5
      %v3704 = vrot.slane %v3703, 4
      %v3705 = vrot.slane %v3167, 5
      %v3706 = vsel %vm1347, %v3704, %v3705
      %v3707 = vrot.slane %v3705, 4
      %v3708 = vrot.slane %v3168, 5
      %v3709 = vsel %vm1347, %v3707, %v3708
      %v3710 = vrot.slane %v3169, 5
      %v3711 = vrot.slane %v3710, 4
      %v3712 = vrot.slane %v3170, 5
      %v3713 = vsel %vm1347, %v3711, %v3712
      %v3714 = vrot.slane %v3712, 4
      %v3715 = vrot.slane %v3171, 5
      %v3716 = vsel %vm1347, %v3714, %v3715
      %v3717 = vrot.slane %v3172, 5
      %v3718 = vrot.slane %v3717, 4
      %v3719 = vrot.slane %v3173, 5
      %v3720 = vsel %vm1347, %v3718, %v3719
      %v3721 = vrot.slane %v3719, 4
      %v3722 = vrot.slane %v3174, 5
      %v3723 = vsel %vm1347, %v3721, %v3722
      %v3724 = vrot.slane %v3175, 5
      %v3725 = vrot.slane %v3724, 4
      %v3726 = vrot.slane %v3176, 5
      %v3727 = vsel %vm1347, %v3725, %v3726
      %v3728 = vrot.slane %v3726, 4
      %v3729 = vrot.slane %v3177, 5
      %v3730 = vsel %vm1347, %v3728, %v3729
      %v3731 = vrot.slane %v3178, 5
      %v3732 = vrot.slane %v3731, 4
      %v3733 = vrot.slane %v3179, 5
      %v3734 = vsel %vm1347, %v3732, %v3733
      %v3735 = vrot.slane %v3733, 4
      %v3736 = vrot.slane %v3180, 5
      %v3737 = vsel %vm1347, %v3735, %v3736
      %v3738 = vrot.slane %v3181, 5
      %v3739 = vrot.slane %v3738, 4
      %v3740 = vrot.slane %v3182, 5
      %v3741 = vsel %vm1347, %v3739, %v3740
      %v3742 = vrot.slane %v3740, 4
      %v3743 = vrot.slane %v3183, 5
      %v3744 = vsel %vm1347, %v3742, %v3743
      %v3746 = vshrl.u32 %v3184, 16
      %v3748 = vrot.slane %v3746, 4
      %v3749 = vshll.u32 %v3184, 16
      %v3751 = vrot.slane %v3749, 5
      %v3752 = vor.u32 %v3748, %v3751
      %v3753 = vrot.slane %v3752, 4
      %v3755 = vshll.u32 %v3185, 16
      %v3757 = vrot.slane %v3755, 5
      %v3758 = vsel %vm912, %v3753, %v3757
      %v3759 = vshrl.u32 %v3185, 16
      %v3761 = vrot.slane %v3759, 4
      %v3762 = vor.u32 %v3761, %v3757
      %v3763 = vrot.slane %v3762, 4
      %v3765 = vshll.u32 %v3186, 16
      %v3767 = vrot.slane %v3765, 5
      %v3768 = vsel %vm912, %v3763, %v3767
      %v3772 = vrot.slane %v3184, 5
      %v3773 = vrot.slane %v3772, 4
      %v3774 = vrot.slane %v3185, 5
      %v3775 = vsel %vm1347, %v3773, %v3774
      %v3776 = vrot.slane %v3774, 4
      %v3777 = vrot.slane %v3186, 5
      %v3778 = vsel %vm1347, %v3776, %v3777
      %v3780 = vshrl.u32 %v3187, 16
      %v3782 = vrot.slane %v3780, 4
      %v3783 = vshll.u32 %v3187, 16
      %v3785 = vrot.slane %v3783, 5
      %v3786 = vor.u32 %v3782, %v3785
      %v3787 = vrot.slane %v3786, 4
      %v3789 = vshll.u32 %v3188, 16
      %v3791 = vrot.slane %v3789, 5
      %v3792 = vsel %vm912, %v3787, %v3791
      %v3793 = vshrl.u32 %v3188, 16
      %v3795 = vrot.slane %v3793, 4
      %v3796 = vor.u32 %v3795, %v3791
      %v3797 = vrot.slane %v3796, 4
      %v3799 = vshll.u32 %v3189, 16
      %v3801 = vrot.slane %v3799, 5
      %v3802 = vsel %vm912, %v3797, %v3801
      %v3806 = vrot.slane %v3187, 5
      %v3807 = vrot.slane %v3806, 4
      %v3808 = vrot.slane %v3188, 5
      %v3809 = vsel %vm1347, %v3807, %v3808
      %v3810 = vrot.slane %v3808, 4
      %v3811 = vrot.slane %v3189, 5
      %v3812 = vsel %vm1347, %v3810, %v3811
      %v3813 = vunpack.c.l.b16 %v3136
      %v3814 = vunpack.c.l.b16 %v3137
      %v3815 = vunpack.c.l.b16 %v3139
      %v3816 = vunpack.c.l.b16 %v3140
      %v3817 = vunpack.c.l.b16 %v3142
      %v3818 = vunpack.c.l.b16 %v3143
      %v3819 = vunpack.c.l.b16 %v3145
      %v3820 = vunpack.c.l.b16 %v3146
      %v3821 = vunpack.c.l.b16 %v3148
      %v3822 = vunpack.c.l.b16 %v3149
      %v3823 = vunpack.c.l.b16 %v3151
      %v3824 = vunpack.c.l.b16 %v3152
      %v3825 = vunpack.c.l.b16 %v3154
      %v3826 = vunpack.c.l.b16 %v3155
      %v3827 = vunpack.c.l.b16 %v3157
      %v3828 = vunpack.c.l.b16 %v3158
      %v3829 = vunpack.c.l.b16 %v3160
      %v3830 = vunpack.c.l.b16 %v3161
      %v3831 = vunpack.c.l.b16 %v3163
      %v3832 = vunpack.c.l.b16 %v3164
      %v3833 = vunpack.c.l.b16 %v3166
      %v3834 = vunpack.c.l.b16 %v3167
      %v3835 = vunpack.c.l.b16 %v3169
      %v3836 = vunpack.c.l.b16 %v3170
      %v3837 = vunpack.c.l.b16 %v3172
      %v3838 = vunpack.c.l.b16 %v3173
      %v3839 = vunpack.c.l.b16 %v3175
      %v3840 = vunpack.c.l.b16 %v3176
      %v3841 = vunpack.c.l.b16 %v3178
      %v3842 = vunpack.c.l.b16 %v3179
      %v3843 = vunpack.c.l.b16 %v3181
      %v3844 = vunpack.c.l.b16 %v3182
      %v3845 = vpack.c.b16 %v3814, %v3813
      %v3846 = vpack.c.b16 %v3816, %v3815
      %v3847 = vpack.c.b16 %v3818, %v3817
      %v3848 = vpack.c.b16 %v3820, %v3819
      %v3849 = vpack.c.b16 %v3822, %v3821
      %v3850 = vpack.c.b16 %v3824, %v3823
      %v3851 = vpack.c.b16 %v3826, %v3825
      %v3852 = vpack.c.b16 %v3828, %v3827
      %v3853 = vpack.c.b16 %v3830, %v3829
      %v3854 = vpack.c.b16 %v3832, %v3831
      %v3855 = vpack.c.b16 %v3834, %v3833
      %v3856 = vpack.c.b16 %v3836, %v3835
      %v3857 = vpack.c.b16 %v3838, %v3837
      %v3858 = vpack.c.b16 %v3840, %v3839
      %v3859 = vpack.c.b16 %v3842, %v3841
      %v3860 = vpack.c.b16 %v3844, %v3843
      %v3861 = vunpack.c.l.b16 %v3214
      %v3862 = vunpack.c.l.b16 %v3224
      %v3863 = vunpack.c.l.b16 %v3238
      %v3864 = vunpack.c.l.b16 %v3248
      %v3865 = vunpack.c.l.b16 %v3262
      %v3866 = vunpack.c.l.b16 %v3272
      %v3867 = vunpack.c.l.b16 %v3286
      %v3868 = vunpack.c.l.b16 %v3296
      %v3869 = vunpack.c.l.b16 %v3310
      %v3870 = vunpack.c.l.b16 %v3320
      %v3871 = vunpack.c.l.b16 %v3334
      %v3872 = vunpack.c.l.b16 %v3344
      %v3873 = vunpack.c.l.b16 %v3358
      %v3874 = vunpack.c.l.b16 %v3368
      %v3875 = vunpack.c.l.b16 %v3382
      %v3876 = vunpack.c.l.b16 %v3392
      %v3877 = vunpack.c.l.b16 %v3406
      %v3878 = vunpack.c.l.b16 %v3416
      %v3879 = vunpack.c.l.b16 %v3430
      %v3880 = vunpack.c.l.b16 %v3440
      %v3881 = vunpack.c.l.b16 %v3454
      %v3882 = vunpack.c.l.b16 %v3464
      %v3883 = vunpack.c.l.b16 %v3478
      %v3884 = vunpack.c.l.b16 %v3488
      %v3885 = vunpack.c.l.b16 %v3502
      %v3886 = vunpack.c.l.b16 %v3512
      %v3887 = vunpack.c.l.b16 %v3526
      %v3888 = vunpack.c.l.b16 %v3536
      %v3889 = vunpack.c.l.b16 %v3550
      %v3890 = vunpack.c.l.b16 %v3560
      %v3891 = vunpack.c.l.b16 %v3574
      %v3892 = vunpack.c.l.b16 %v3584
      %v3893 = vpack.c.b16 %v3862, %v3861
      %v3894 = vpack.c.b16 %v3864, %v3863
      %v3895 = vpack.c.b16 %v3866, %v3865
      %v3896 = vpack.c.b16 %v3868, %v3867
      %v3897 = vpack.c.b16 %v3870, %v3869
      %v3898 = vpack.c.b16 %v3872, %v3871
      %v3899 = vpack.c.b16 %v3874, %v3873
      %v3900 = vpack.c.b16 %v3876, %v3875
      %v3901 = vpack.c.b16 %v3878, %v3877
      %v3902 = vpack.c.b16 %v3880, %v3879
      %v3903 = vpack.c.b16 %v3882, %v3881
      %v3904 = vpack.c.b16 %v3884, %v3883
      %v3905 = vpack.c.b16 %v3886, %v3885
      %v3906 = vpack.c.b16 %v3888, %v3887
      %v3907 = vpack.c.b16 %v3890, %v3889
      %v3908 = vpack.c.b16 %v3892, %v3891
      %3909 = vrot.lane.b32.xlu0 %v3893, 8
      %v3910 = vpop.permute.xlu0 %3909
      %3911 = vrot.lane.b32.xlu0 %v3894, 8
      %v3912 = vpop.permute.xlu0 %3911
      %3913 = vrot.lane.b32.xlu0 %v3895, 8
      %v3914 = vpop.permute.xlu0 %3913
      %3915 = vrot.lane.b32.xlu0 %v3896, 8
      %v3916 = vpop.permute.xlu0 %3915
      %3917 = vrot.lane.b32.xlu0 %v3897, 8
      %v3918 = vpop.permute.xlu0 %3917
      %3919 = vrot.lane.b32.xlu0 %v3898, 8
      %v3920 = vpop.permute.xlu0 %3919
      %3921 = vrot.lane.b32.xlu0 %v3899, 8
      %v3922 = vpop.permute.xlu0 %3921
      %3923 = vrot.lane.b32.xlu0 %v3900, 8
      %v3924 = vpop.permute.xlu0 %3923
      %3925 = vrot.lane.b32.xlu0 %v3901, 8
      %v3926 = vpop.permute.xlu0 %3925
      %3927 = vrot.lane.b32.xlu0 %v3902, 8
      %v3928 = vpop.permute.xlu0 %3927
      %3929 = vrot.lane.b32.xlu0 %v3903, 8
      %v3930 = vpop.permute.xlu0 %3929
      %3931 = vrot.lane.b32.xlu0 %v3904, 8
      %v3932 = vpop.permute.xlu0 %3931
      %3933 = vrot.lane.b32.xlu0 %v3905, 8
      %v3934 = vpop.permute.xlu0 %3933
      %3935 = vrot.lane.b32.xlu0 %v3906, 8
      %v3936 = vpop.permute.xlu0 %3935
      %3937 = vrot.lane.b32.xlu0 %v3907, 8
      %v3938 = vpop.permute.xlu0 %3937
      %3939 = vrot.lane.b32.xlu0 %v3908, 8
      %v3940 = vpop.permute.xlu0 %3939
      %v3941 = vunpack.c.l.b16 %v3636
      %v3942 = vunpack.c.l.b16 %v3639
      %v3943 = vunpack.c.l.b16 %v3643
      %v3944 = vunpack.c.l.b16 %v3646
      %v3945 = vunpack.c.l.b16 %v3650
      %v3946 = vunpack.c.l.b16 %v3653
      %v3947 = vunpack.c.l.b16 %v3657
      %v3948 = vunpack.c.l.b16 %v3660
      %v3949 = vunpack.c.l.b16 %v3664
      %v3950 = vunpack.c.l.b16 %v3667
      %v3951 = vunpack.c.l.b16 %v3671
      %v3952 = vunpack.c.l.b16 %v3674
      %v3953 = vunpack.c.l.b16 %v3678
      %v3954 = vunpack.c.l.b16 %v3681
      %v3955 = vunpack.c.l.b16 %v3685
      %v3956 = vunpack.c.l.b16 %v3688
      %v3957 = vunpack.c.l.b16 %v3692
      %v3958 = vunpack.c.l.b16 %v3695
      %v3959 = vunpack.c.l.b16 %v3699
      %v3960 = vunpack.c.l.b16 %v3702
      %v3961 = vunpack.c.l.b16 %v3706
      %v3962 = vunpack.c.l.b16 %v3709
      %v3963 = vunpack.c.l.b16 %v3713
      %v3964 = vunpack.c.l.b16 %v3716
      %v3965 = vunpack.c.l.b16 %v3720
      %v3966 = vunpack.c.l.b16 %v3723
      %v3967 = vunpack.c.l.b16 %v3727
      %v3968 = vunpack.c.l.b16 %v3730
      %v3969 = vunpack.c.l.b16 %v3734
      %v3970 = vunpack.c.l.b16 %v3737
      %v3971 = vunpack.c.l.b16 %v3741
      %v3972 = vunpack.c.l.b16 %v3744
      %v3973 = vpack.c.b16 %v3942, %v3941
      %v3974 = vpack.c.b16 %v3944, %v3943
      %v3975 = vpack.c.b16 %v3946, %v3945
      %v3976 = vpack.c.b16 %v3948, %v3947
      %v3977 = vpack.c.b16 %v3950, %v3949
      %v3978 = vpack.c.b16 %v3952, %v3951
      %v3979 = vpack.c.b16 %v3954, %v3953
      %v3980 = vpack.c.b16 %v3956, %v3955
      %v3981 = vpack.c.b16 %v3958, %v3957
      %v3982 = vpack.c.b16 %v3960, %v3959
      %v3983 = vpack.c.b16 %v3962, %v3961
      %v3984 = vpack.c.b16 %v3964, %v3963
      %v3985 = vpack.c.b16 %v3966, %v3965
      %v3986 = vpack.c.b16 %v3968, %v3967
      %v3987 = vpack.c.b16 %v3970, %v3969
      %v3988 = vpack.c.b16 %v3972, %v3971
      %3989 = vrot.lane.b32.xlu0 %v3973, 16
      %v3990 = vpop.permute.xlu0 %3989
      %3991 = vrot.lane.b32.xlu0 %v3974, 16
      %v3992 = vpop.permute.xlu0 %3991
      %3993 = vrot.lane.b32.xlu0 %v3975, 16
      %v3994 = vpop.permute.xlu0 %3993
      %3995 = vrot.lane.b32.xlu0 %v3976, 16
      %v3996 = vpop.permute.xlu0 %3995
      %3997 = vrot.lane.b32.xlu0 %v3977, 16
      %v3998 = vpop.permute.xlu0 %3997
      %3999 = vrot.lane.b32.xlu0 %v3978, 16
      %v4000 = vpop.permute.xlu0 %3999
      %4001 = vrot.lane.b32.xlu0 %v3979, 16
      %v4002 = vpop.permute.xlu0 %4001
      %4003 = vrot.lane.b32.xlu0 %v3980, 16
      %v4004 = vpop.permute.xlu0 %4003
      %4005 = vrot.lane.b32.xlu0 %v3981, 16
      %v4006 = vpop.permute.xlu0 %4005
      %4007 = vrot.lane.b32.xlu0 %v3982, 16
      %v4008 = vpop.permute.xlu0 %4007
      %4009 = vrot.lane.b32.xlu0 %v3983, 16
      %v4010 = vpop.permute.xlu0 %4009
      %4011 = vrot.lane.b32.xlu0 %v3984, 16
      %v4012 = vpop.permute.xlu0 %4011
      %4013 = vrot.lane.b32.xlu0 %v3985, 16
      %v4014 = vpop.permute.xlu0 %4013
      %4015 = vrot.lane.b32.xlu0 %v3986, 16
      %v4016 = vpop.permute.xlu0 %4015
      %4017 = vrot.lane.b32.xlu0 %v3987, 16
      %v4018 = vpop.permute.xlu0 %4017
      %4019 = vrot.lane.b32.xlu0 %v3988, 16
      %v4020 = vpop.permute.xlu0 %4019
      %v4021 = vunpack.c.l.b16 %v3184
      %v4022 = vunpack.c.l.b16 %v3185
      %v4023 = vpack.c.b16 %v4022, %v4021
      %4024 = vrot.lane.b32.xlu0 %v3846, 24
      %v4025 = vpop.permute.xlu0 %4024
      %4026 = vrot.lane.b32.xlu0 %v3847, 24
      %v4027 = vpop.permute.xlu0 %4026
      %4028 = vrot.lane.b32.xlu0 %v3848, 24
      %v4029 = vpop.permute.xlu0 %4028
      %4030 = vrot.lane.b32.xlu0 %v3849, 24
      %v4031 = vpop.permute.xlu0 %4030
      %4032 = vrot.lane.b32.xlu0 %v3850, 24
      %v4033 = vpop.permute.xlu0 %4032
      %4034 = vrot.lane.b32.xlu0 %v3851, 24
      %v4035 = vpop.permute.xlu0 %4034
      %4036 = vrot.lane.b32.xlu0 %v3852, 24
      %v4037 = vpop.permute.xlu0 %4036
      %4038 = vrot.lane.b32.xlu0 %v3853, 24
      %v4039 = vpop.permute.xlu0 %4038
      %4040 = vrot.lane.b32.xlu0 %v3854, 24
      %v4041 = vpop.permute.xlu0 %4040
      %4042 = vrot.lane.b32.xlu0 %v3855, 24
      %v4043 = vpop.permute.xlu0 %4042
      %4044 = vrot.lane.b32.xlu0 %v3856, 24
      %v4045 = vpop.permute.xlu0 %4044
      %4046 = vrot.lane.b32.xlu0 %v3857, 24
      %v4047 = vpop.permute.xlu0 %4046
      %4048 = vrot.lane.b32.xlu0 %v3858, 24
      %v4049 = vpop.permute.xlu0 %4048
      %4050 = vrot.lane.b32.xlu0 %v3859, 24
      %v4051 = vpop.permute.xlu0 %4050
      %4052 = vrot.lane.b32.xlu0 %v3860, 24
      %v4053 = vpop.permute.xlu0 %4052
      %4054 = vrot.lane.b32.xlu0 %v4023, 24
      %v4055 = vpop.permute.xlu0 %4054
      %v4056 = vunpack.c.l.b16 %v3758
      %v4057 = vunpack.c.l.b16 %v3768
      %v4058 = vpack.c.b16 %v4057, %v4056
      %4059 = vrot.lane.b32.xlu0 %v3894, 32
      %v4060 = vpop.permute.xlu0 %4059
      %4061 = vrot.lane.b32.xlu0 %v3895, 32
      %v4062 = vpop.permute.xlu0 %4061
      %4063 = vrot.lane.b32.xlu0 %v3896, 32
      %v4064 = vpop.permute.xlu0 %4063
      %4065 = vrot.lane.b32.xlu0 %v3897, 32
      %v4066 = vpop.permute.xlu0 %4065
      %4067 = vrot.lane.b32.xlu0 %v3898, 32
      %v4068 = vpop.permute.xlu0 %4067
      %4069 = vrot.lane.b32.xlu0 %v3899, 32
      %v4070 = vpop.permute.xlu0 %4069
      %4071 = vrot.lane.b32.xlu0 %v3900, 32
      %v4072 = vpop.permute.xlu0 %4071
      %4073 = vrot.lane.b32.xlu0 %v3901, 32
      %v4074 = vpop.permute.xlu0 %4073
      %4075 = vrot.lane.b32.xlu0 %v3902, 32
      %v4076 = vpop.permute.xlu0 %4075
      %4077 = vrot.lane.b32.xlu0 %v3903, 32
      %v4078 = vpop.permute.xlu0 %4077
      %4079 = vrot.lane.b32.xlu0 %v3904, 32
      %v4080 = vpop.permute.xlu0 %4079
      %4081 = vrot.lane.b32.xlu0 %v3905, 32
      %v4082 = vpop.permute.xlu0 %4081
      %4083 = vrot.lane.b32.xlu0 %v3906, 32
      %v4084 = vpop.permute.xlu0 %4083
      %4085 = vrot.lane.b32.xlu0 %v3907, 32
      %v4086 = vpop.permute.xlu0 %4085
      %4087 = vrot.lane.b32.xlu0 %v3908, 32
      %v4088 = vpop.permute.xlu0 %4087
      %4089 = vrot.lane.b32.xlu0 %v4058, 32
      %v4090 = vpop.permute.xlu0 %4089
      %v4091 = vunpack.c.l.b16 %v3775
      %v4092 = vunpack.c.l.b16 %v3778
      %v4093 = vpack.c.b16 %v4092, %v4091
      %4094 = vrot.lane.b32.xlu0 %v3974, 40
      %v4095 = vpop.permute.xlu0 %4094
      %4096 = vrot.lane.b32.xlu0 %v3975, 40
      %v4097 = vpop.permute.xlu0 %4096
      %4098 = vrot.lane.b32.xlu0 %v3976, 40
      %v4099 = vpop.permute.xlu0 %4098
      %4100 = vrot.lane.b32.xlu0 %v3977, 40
      %v4101 = vpop.permute.xlu0 %4100
      %4102 = vrot.lane.b32.xlu0 %v3978, 40
      %v4103 = vpop.permute.xlu0 %4102
      %4104 = vrot.lane.b32.xlu0 %v3979, 40
      %v4105 = vpop.permute.xlu0 %4104
      %4106 = vrot.lane.b32.xlu0 %v3980, 40
      %v4107 = vpop.permute.xlu0 %4106
      %4108 = vrot.lane.b32.xlu0 %v3981, 40
      %v4109 = vpop.permute.xlu0 %4108
      %4110 = vrot.lane.b32.xlu0 %v3982, 40
      %v4111 = vpop.permute.xlu0 %4110
      %4112 = vrot.lane.b32.xlu0 %v3983, 40
      %v4113 = vpop.permute.xlu0 %4112
      %4114 = vrot.lane.b32.xlu0 %v3984, 40
      %v4115 = vpop.permute.xlu0 %4114
      %4116 = vrot.lane.b32.xlu0 %v3985, 40
      %v4117 = vpop.permute.xlu0 %4116
      %4118 = vrot.lane.b32.xlu0 %v3986, 40
      %v4119 = vpop.permute.xlu0 %4118
      %4120 = vrot.lane.b32.xlu0 %v3987, 40
      %v4121 = vpop.permute.xlu0 %4120
      %4122 = vrot.lane.b32.xlu0 %v3988, 40
      %v4123 = vpop.permute.xlu0 %4122
      %4124 = vrot.lane.b32.xlu0 %v4093, 40
      %v4125 = vpop.permute.xlu0 %4124
      %v4126 = vunpack.c.l.b16 %v3187
      %v4127 = vunpack.c.l.b16 %v3188
      %v4128 = vpack.c.b16 %v4127, %v4126
      %4129 = vrot.lane.b32.xlu0 %v3847, 48
      %v4130 = vpop.permute.xlu0 %4129
      %4131 = vrot.lane.b32.xlu0 %v3848, 48
      %v4132 = vpop.permute.xlu0 %4131
      %4133 = vrot.lane.b32.xlu0 %v3849, 48
      %v4134 = vpop.permute.xlu0 %4133
      %4135 = vrot.lane.b32.xlu0 %v3850, 48
      %v4136 = vpop.permute.xlu0 %4135
      %4137 = vrot.lane.b32.xlu0 %v3851, 48
      %v4138 = vpop.permute.xlu0 %4137
      %4139 = vrot.lane.b32.xlu0 %v3852, 48
      %v4140 = vpop.permute.xlu0 %4139
      %4141 = vrot.lane.b32.xlu0 %v3853, 48
      %v4142 = vpop.permute.xlu0 %4141
      %4143 = vrot.lane.b32.xlu0 %v3854, 48
      %v4144 = vpop.permute.xlu0 %4143
      %4145 = vrot.lane.b32.xlu0 %v3855, 48
      %v4146 = vpop.permute.xlu0 %4145
      %4147 = vrot.lane.b32.xlu0 %v3856, 48
      %v4148 = vpop.permute.xlu0 %4147
      %4149 = vrot.lane.b32.xlu0 %v3857, 48
      %v4150 = vpop.permute.xlu0 %4149
      %4151 = vrot.lane.b32.xlu0 %v3858, 48
      %v4152 = vpop.permute.xlu0 %4151
      %4153 = vrot.lane.b32.xlu0 %v3859, 48
      %v4154 = vpop.permute.xlu0 %4153
      %4155 = vrot.lane.b32.xlu0 %v3860, 48
      %v4156 = vpop.permute.xlu0 %4155
      %4157 = vrot.lane.b32.xlu0 %v4023, 48
      %v4158 = vpop.permute.xlu0 %4157
      %4159 = vrot.lane.b32.xlu0 %v4128, 48
      %v4160 = vpop.permute.xlu0 %4159
      %v4161 = vunpack.c.l.b16 %v3792
      %v4162 = vunpack.c.l.b16 %v3802
      %v4163 = vpack.c.b16 %v4162, %v4161
      %4164 = vrot.lane.b32.xlu0 %v3895, 56
      %v4165 = vpop.permute.xlu0 %4164
      %4166 = vrot.lane.b32.xlu0 %v3896, 56
      %v4167 = vpop.permute.xlu0 %4166
      %4168 = vrot.lane.b32.xlu0 %v3897, 56
      %v4169 = vpop.permute.xlu0 %4168
      %4170 = vrot.lane.b32.xlu0 %v3898, 56
      %v4171 = vpop.permute.xlu0 %4170
      %4172 = vrot.lane.b32.xlu0 %v3899, 56
      %v4173 = vpop.permute.xlu0 %4172
      %4174 = vrot.lane.b32.xlu0 %v3900, 56
      %v4175 = vpop.permute.xlu0 %4174
      %4176 = vrot.lane.b32.xlu0 %v3901, 56
      %v4177 = vpop.permute.xlu0 %4176
      %4178 = vrot.lane.b32.xlu0 %v3902, 56
      %v4179 = vpop.permute.xlu0 %4178
      %4180 = vrot.lane.b32.xlu0 %v3903, 56
      %v4181 = vpop.permute.xlu0 %4180
      %4182 = vrot.lane.b32.xlu0 %v3904, 56
      %v4183 = vpop.permute.xlu0 %4182
      %4184 = vrot.lane.b32.xlu0 %v3905, 56
      %v4185 = vpop.permute.xlu0 %4184
      %4186 = vrot.lane.b32.xlu0 %v3906, 56
      %v4187 = vpop.permute.xlu0 %4186
      %4188 = vrot.lane.b32.xlu0 %v3907, 56
      %v4189 = vpop.permute.xlu0 %4188
      %4190 = vrot.lane.b32.xlu0 %v3908, 56
      %v4191 = vpop.permute.xlu0 %4190
      %4192 = vrot.lane.b32.xlu0 %v4058, 56
      %v4193 = vpop.permute.xlu0 %4192
      %4194 = vrot.lane.b32.xlu0 %v4163, 56
      %v4195 = vpop.permute.xlu0 %4194
      %v4196 = vunpack.c.l.b16 %v3809
      %v4197 = vunpack.c.l.b16 %v3812
      %v4198 = vpack.c.b16 %v4197, %v4196
      %4199 = vrot.lane.b32.xlu0 %v3975, 64
      %v4200 = vpop.permute.xlu0 %4199
      %4201 = vrot.lane.b32.xlu0 %v3976, 64
      %v4202 = vpop.permute.xlu0 %4201
      %4203 = vrot.lane.b32.xlu0 %v3977, 64
      %v4204 = vpop.permute.xlu0 %4203
      %4205 = vrot.lane.b32.xlu0 %v3978, 64
      %v4206 = vpop.permute.xlu0 %4205
      %4207 = vrot.lane.b32.xlu0 %v3979, 64
      %v4208 = vpop.permute.xlu0 %4207
      %4209 = vrot.lane.b32.xlu0 %v3980, 64
      %v4210 = vpop.permute.xlu0 %4209
      %4211 = vrot.lane.b32.xlu0 %v3981, 64
      %v4212 = vpop.permute.xlu0 %4211
      %4213 = vrot.lane.b32.xlu0 %v3982, 64
      %v4214 = vpop.permute.xlu0 %4213
      %4215 = vrot.lane.b32.xlu0 %v3983, 64
      %v4216 = vpop.permute.xlu0 %4215
      %4217 = vrot.lane.b32.xlu0 %v3984, 64
      %v4218 = vpop.permute.xlu0 %4217
      %4219 = vrot.lane.b32.xlu0 %v3985, 64
      %v4220 = vpop.permute.xlu0 %4219
      %4221 = vrot.lane.b32.xlu0 %v3986, 64
      %v4222 = vpop.permute.xlu0 %4221
      %4223 = vrot.lane.b32.xlu0 %v3987, 64
      %v4224 = vpop.permute.xlu0 %4223
      %4225 = vrot.lane.b32.xlu0 %v3988, 64
      %v4226 = vpop.permute.xlu0 %4225
      %4227 = vrot.lane.b32.xlu0 %v4093, 64
      %v4228 = vpop.permute.xlu0 %4227
      %4229 = vrot.lane.b32.xlu0 %v4198, 64
      %v4230 = vpop.permute.xlu0 %4229
      %v4233 = vsel %vm1995, %v3845, %v3910
      %v4236 = vsel %vm1995, %v3846, %v3912
      %v4239 = vsel %vm1995, %v3847, %v3914
      %v4242 = vsel %vm1995, %v3848, %v3916
      %v4245 = vsel %vm1995, %v3849, %v3918
      %v4248 = vsel %vm1995, %v3850, %v3920
      %v4251 = vsel %vm1995, %v3851, %v3922
      %v4254 = vsel %vm1995, %v3852, %v3924
      %v4257 = vsel %vm1995, %v3853, %v3926
      %v4260 = vsel %vm1995, %v3854, %v3928
      %v4263 = vsel %vm1995, %v3855, %v3930
      %v4266 = vsel %vm1995, %v3856, %v3932
      %v4269 = vsel %vm1995, %v3857, %v3934
      %v4272 = vsel %vm1995, %v3858, %v3936
      %v4275 = vsel %vm1995, %v3859, %v3938
      %v4278 = vsel %vm1995, %v3860, %v3940
      %v4280 = vsel %vm2061, %v4233, %v3990
      %v4282 = vsel %vm2061, %v4236, %v3992
      %v4284 = vsel %vm2061, %v4239, %v3994
      %v4286 = vsel %vm2061, %v4242, %v3996
      %v4288 = vsel %vm2061, %v4245, %v3998
      %v4290 = vsel %vm2061, %v4248, %v4000
      %v4292 = vsel %vm2061, %v4251, %v4002
      %v4294 = vsel %vm2061, %v4254, %v4004
      %v4296 = vsel %vm2061, %v4257, %v4006
      %v4298 = vsel %vm2061, %v4260, %v4008
      %v4300 = vsel %vm2061, %v4263, %v4010
      %v4302 = vsel %vm2061, %v4266, %v4012
      %v4304 = vsel %vm2061, %v4269, %v4014
      %v4306 = vsel %vm2061, %v4272, %v4016
      %v4308 = vsel %vm2061, %v4275, %v4018
      %v4310 = vsel %vm2061, %v4278, %v4020
      %v4312 = vsel %vm2127, %v4280, %v4025
      %v4314 = vsel %vm2127, %v4282, %v4027
      %v4316 = vsel %vm2127, %v4284, %v4029
      %v4318 = vsel %vm2127, %v4286, %v4031
      %v4320 = vsel %vm2127, %v4288, %v4033
      %v4322 = vsel %vm2127, %v4290, %v4035
      %v4324 = vsel %vm2127, %v4292, %v4037
      %v4326 = vsel %vm2127, %v4294, %v4039
      %v4328 = vsel %vm2127, %v4296, %v4041
      %v4330 = vsel %vm2127, %v4298, %v4043
      %v4332 = vsel %vm2127, %v4300, %v4045
      %v4334 = vsel %vm2127, %v4302, %v4047
      %v4336 = vsel %vm2127, %v4304, %v4049
      %v4338 = vsel %vm2127, %v4306, %v4051
      %v4340 = vsel %vm2127, %v4308, %v4053
      %v4342 = vsel %vm2127, %v4310, %v4055
      %v4344 = vsel %vm2193, %v4312, %v4060
      %v4346 = vsel %vm2193, %v4314, %v4062
      %v4348 = vsel %vm2193, %v4316, %v4064
      %v4350 = vsel %vm2193, %v4318, %v4066
      %v4352 = vsel %vm2193, %v4320, %v4068
      %v4354 = vsel %vm2193, %v4322, %v4070
      %v4356 = vsel %vm2193, %v4324, %v4072
      %v4358 = vsel %vm2193, %v4326, %v4074
      %v4360 = vsel %vm2193, %v4328, %v4076
      %v4362 = vsel %vm2193, %v4330, %v4078
      %v4364 = vsel %vm2193, %v4332, %v4080
      %v4366 = vsel %vm2193, %v4334, %v4082
      %v4368 = vsel %vm2193, %v4336, %v4084
      %v4370 = vsel %vm2193, %v4338, %v4086
      %v4372 = vsel %vm2193, %v4340, %v4088
      %v4374 = vsel %vm2193, %v4342, %v4090
      %vm4375 = vcmask 326656
      %v4377 = vsel %vm4375, %v4344, %v4095
      %v4379 = vsel %vm4375, %v4346, %v4097
      %v4381 = vsel %vm4375, %v4348, %v4099
      %v4383 = vsel %vm4375, %v4350, %v4101
      %v4385 = vsel %vm4375, %v4352, %v4103
      %v4387 = vsel %vm4375, %v4354, %v4105
      %v4389 = vsel %vm4375, %v4356, %v4107
      %v4391 = vsel %vm4375, %v4358, %v4109
      %v4393 = vsel %vm4375, %v4360, %v4111
      %v4395 = vsel %vm4375, %v4362, %v4113
      %v4397 = vsel %vm4375, %v4364, %v4115
      %v4399 = vsel %vm4375, %v4366, %v4117
      %v4401 = vsel %vm4375, %v4368, %v4119
      %v4403 = vsel %vm4375, %v4370, %v4121
      %v4405 = vsel %vm4375, %v4372, %v4123
      %v4407 = vsel %vm4375, %v4374, %v4125
      %vm4408 = vcmask 392192
      %v4410 = vsel %vm4408, %v4377, %v4130
      %v4412 = vsel %vm4408, %v4379, %v4132
      %v4414 = vsel %vm4408, %v4381, %v4134
      %v4416 = vsel %vm4408, %v4383, %v4136
      %v4418 = vsel %vm4408, %v4385, %v4138
      %v4420 = vsel %vm4408, %v4387, %v4140
      %v4422 = vsel %vm4408, %v4389, %v4142
      %v4424 = vsel %vm4408, %v4391, %v4144
      %v4426 = vsel %vm4408, %v4393, %v4146
      %v4428 = vsel %vm4408, %v4395, %v4148
      %v4430 = vsel %vm4408, %v4397, %v4150
      %v4432 = vsel %vm4408, %v4399, %v4152
      %v4434 = vsel %vm4408, %v4401, %v4154
      %v4436 = vsel %vm4408, %v4403, %v4156
      %v4438 = vsel %vm4408, %v4405, %v4158
      %v4440 = vsel %vm4408, %v4407, %v4160
      %vm4441 = vcmask 457728
      %v4443 = vsel %vm4441, %v4410, %v4165
      %v4445 = vsel %vm4441, %v4412, %v4167
      %v4447 = vsel %vm4441, %v4414, %v4169
      %v4449 = vsel %vm4441, %v4416, %v4171
      %v4451 = vsel %vm4441, %v4418, %v4173
      %v4453 = vsel %vm4441, %v4420, %v4175
      %v4455 = vsel %vm4441, %v4422, %v4177
      %v4457 = vsel %vm4441, %v4424, %v4179
      %v4459 = vsel %vm4441, %v4426, %v4181
      %v4461 = vsel %vm4441, %v4428, %v4183
      %v4463 = vsel %vm4441, %v4430, %v4185
      %v4465 = vsel %vm4441, %v4432, %v4187
      %v4467 = vsel %vm4441, %v4434, %v4189
      %v4469 = vsel %vm4441, %v4436, %v4191
      %v4471 = vsel %vm4441, %v4438, %v4193
      %v4473 = vsel %vm4441, %v4440, %v4195
      %vm4474 = vcmask 523264
      %v4476 = vsel %vm4474, %v4443, %v4200
      %v4478 = vsel %vm4474, %v4445, %v4202
      %v4480 = vsel %vm4474, %v4447, %v4204
      %v4482 = vsel %vm4474, %v4449, %v4206
      %v4484 = vsel %vm4474, %v4451, %v4208
      %v4486 = vsel %vm4474, %v4453, %v4210
      %v4488 = vsel %vm4474, %v4455, %v4212
      %v4490 = vsel %vm4474, %v4457, %v4214
      %v4492 = vsel %vm4474, %v4459, %v4216
      %v4494 = vsel %vm4474, %v4461, %v4218
      %v4496 = vsel %vm4474, %v4463, %v4220
      %v4498 = vsel %vm4474, %v4465, %v4222
      %v4500 = vsel %vm4474, %v4467, %v4224
      %v4502 = vsel %vm4474, %v4469, %v4226
      %v4504 = vsel %vm4474, %v4471, %v4228
      %v4506 = vsel %vm4474, %v4473, %v4230
      %v4516 = vunpack.c.l.b16 %v3190
      %v4517 = vunpack.c.l.b16 %v3191
      %v4518 = vunpack.c.l.b16 %v3192
      %v4519 = vunpack.c.l.b16 %v3193
      %v4520 = vunpack.c.l.b16 %v3194
      %v4521 = vunpack.c.l.b16 %v3195
      %v4522 = vunpack.c.l.b16 %v3196
      %v4523 = vunpack.c.l.b16 %v3197
      %v4524 = vunpack.c.l.b16 %v3198
      %v4525 = vpack.c.b16 %v4517, %v4516
      %v4526 = vpack.c.b16 %v4519, %v4518
      %v4527 = vpack.c.b16 %v4521, %v4520
      %v4528 = vpack.c.b16 %v4523, %v4522
      %v4529 = vpack.c.b16 %v4524, %v4524
      %vm4534 = vcmask 588800
      %v4535 = vsel %vm4534, %v4476, 0
      %v4537 = vsel %vm4534, %v4478, 0
      %v4539 = vsel %vm4534, %v4480, 0
      %v4541 = vsel %vm4534, %v4482, 0
      %v4543 = vsel %vm4534, %v4484, 0
      %v4545 = vsel %vm4534, %v4486, 0
      %v4547 = vsel %vm4534, %v4488, 0
      %v4549 = vsel %vm4534, %v4490, 0
      %v4551 = vsel %vm4534, %v4492, 0
      %v4553 = vsel %vm4534, %v4494, 0
      %v4555 = vsel %vm4534, %v4496, 0
      %v4557 = vsel %vm4534, %v4498, 0
      %v4559 = vsel %vm4534, %v4500, 0
      %v4561 = vsel %vm4534, %v4502, 0
      %v4563 = vsel %vm4534, %v4504, 0
      %v4565 = vsel %vm4534, %v4506, 0
      %vm4567 = vcmask 1043456
      %v4569 = vsel %vm4567, %v4529, 0
      %4571 = vmatprep.subr.bf16.mxu0 0
      %4572 = vmatpush1.bf16.msra.mxu0 %v4525
      %4573 = vmatprep.subr.bf16.mxu0 0
      %4574 = vmatpush1.bf16.msra.mxu0 %v4526
      %4575 = vmatprep.subr.bf16.mxu0 0
      %4576 = vmatpush1.bf16.msra.mxu0 %v4527
      %4577 = vmatprep.subr.bf16.mxu0 0
      %4578 = vmatpush1.bf16.msra.mxu0 %v4528
      %4579 = vmatprep.subr.bf16.mxu0 0
      %4580 = vmatpush1.bf16.msra.mxu0 %v4569
      %4581 = vmatprep.subr.bf16.mxu0 0
      %4582 = vmatpush1.bf16.msra.mxu0 0
      %4583 = vmatprep.subr.bf16.mxu0 0
      %4584 = vmatpush1.bf16.msra.mxu0 0
      %4585 = vmatprep.subr.bf16.mxu0 0
      %4586 = vmatpush1.bf16.msra.mxu0 0
      %4587 = vmatprep.subr.bf16.mxu0 0
      %4588 = vmatpush1.bf16.msra.mxu0 0
      %4589 = vmatprep.subr.bf16.mxu0 0
      %4590 = vmatpush1.bf16.msra.mxu0 0
      %4591 = vmatprep.subr.bf16.mxu0 0
      %4592 = vmatpush1.bf16.msra.mxu0 0
      %4593 = vmatprep.subr.bf16.mxu0 0
      %4594 = vmatpush1.bf16.msra.mxu0 0
      %4595 = vmatprep.subr.bf16.mxu0 0
      %4596 = vmatpush1.bf16.msra.mxu0 0
      %4597 = vmatprep.subr.bf16.mxu0 0
      %4598 = vmatpush1.bf16.msra.mxu0 0
      %4599 = vmatprep.subr.bf16.mxu0 0
      %4600 = vmatpush1.bf16.msra.mxu0 0
      %4601 = vmatprep.subr.bf16.mxu0 0
      %4602 = vmatpush1.bf16.msra.mxu0 0
      %4603 = vmatprep.mubr.bf16.mxu0 0
      %4604 = vmatmul.mubr.bf16.gmra.mrb[0].mxu0 %v4535
      %v4605 = vpop.f32.mrb[0].mxu0
      %v4606 = vadd.f32 0.0, %v4605
      %v4607 = vpop.f32.mrb[0].mxu0
      %v4608 = vpop.f32.mrb[0].mxu0
      %v4609 = vadd.f32 0.0, %v4608
      %v4610 = vpop.f32.mrb[0].mxu0
      %4611 = vmatprep.mubr.bf16.mxu0 0
      %4612 = vmatmul.mubr.bf16.gmra.mrb[0].mxu0 %v4537
      %v4613 = vpop.f32.mrb[0].mxu0
      %v4614 = vadd.f32 0.0, %v4613
      %v4615 = vpop.f32.mrb[0].mxu0
      %v4616 = vpop.f32.mrb[0].mxu0
      %v4617 = vadd.f32 0.0, %v4616
      %v4618 = vpop.f32.mrb[0].mxu0
      %4619 = vmatprep.mubr.bf16.mxu0 0
      %4620 = vmatmul.mubr.bf16.gmra.mrb[0].mxu0 %v4539
      %v4621 = vpop.f32.mrb[0].mxu0
      %v4622 = vadd.f32 0.0, %v4621
      %v4623 = vpop.f32.mrb[0].mxu0
      %v4624 = vpop.f32.mrb[0].mxu0
      %v4625 = vadd.f32 0.0, %v4624
      %v4626 = vpop.f32.mrb[0].mxu0
      %4627 = vmatprep.mubr.bf16.mxu0 0
      %4628 = vmatmul.mubr.bf16.gmra.mrb[0].mxu0 %v4541
      %v4629 = vpop.f32.mrb[0].mxu0
      %v4630 = vadd.f32 0.0, %v4629
      %v4631 = vpop.f32.mrb[0].mxu0
      %v4632 = vpop.f32.mrb[0].mxu0
      %v4633 = vadd.f32 0.0, %v4632
      %v4634 = vpop.f32.mrb[0].mxu0
      %4635 = vmatprep.mubr.bf16.mxu0 0
      %4636 = vmatmul.mubr.bf16.gmra.mrb[0].mxu0 %v4543
      %v4637 = vpop.f32.mrb[0].mxu0
      %v4638 = vadd.f32 0.0, %v4637
      %v4639 = vpop.f32.mrb[0].mxu0
      %v4640 = vpop.f32.mrb[0].mxu0
      %v4641 = vadd.f32 0.0, %v4640
      %v4642 = vpop.f32.mrb[0].mxu0
      %4643 = vmatprep.mubr.bf16.mxu0 0
      %4644 = vmatmul.mubr.bf16.gmra.mrb[0].mxu0 %v4545
      %v4645 = vpop.f32.mrb[0].mxu0
      %v4646 = vadd.f32 0.0, %v4645
      %v4647 = vpop.f32.mrb[0].mxu0
      %v4648 = vpop.f32.mrb[0].mxu0
      %v4649 = vadd.f32 0.0, %v4648
      %v4650 = vpop.f32.mrb[0].mxu0
      %4651 = vmatprep.mubr.bf16.mxu0 0
      %4652 = vmatmul.mubr.bf16.gmra.mrb[0].mxu0 %v4547
      %v4653 = vpop.f32.mrb[0].mxu0
      %v4654 = vadd.f32 0.0, %v4653
      %v4655 = vpop.f32.mrb[0].mxu0
      %v4656 = vpop.f32.mrb[0].mxu0
      %v4657 = vadd.f32 0.0, %v4656
      %v4658 = vpop.f32.mrb[0].mxu0
      %4659 = vmatprep.mubr.bf16.mxu0 0
      %4660 = vmatmul.mubr.bf16.gmra.mrb[0].mxu0 %v4549
      %v4661 = vpop.f32.mrb[0].mxu0
      %v4662 = vadd.f32 0.0, %v4661
      %v4663 = vpop.f32.mrb[0].mxu0
      %v4664 = vpop.f32.mrb[0].mxu0
      %v4665 = vadd.f32 0.0, %v4664
      %v4666 = vpop.f32.mrb[0].mxu0
      %4667 = vmatprep.mubr.bf16.mxu0 0
      %4668 = vmatmul.mubr.bf16.gmra.mrb[0].mxu0 %v4551
      %v4669 = vpop.f32.mrb[0].mxu0
      %v4670 = vadd.f32 0.0, %v4669
      %v4671 = vpop.f32.mrb[0].mxu0
      %v4672 = vpop.f32.mrb[0].mxu0
      %v4673 = vadd.f32 0.0, %v4672
      %v4674 = vpop.f32.mrb[0].mxu0
      %4675 = vmatprep.mubr.bf16.mxu0 0
      %4676 = vmatmul.mubr.bf16.gmra.mrb[0].mxu0 %v4553
      %v4677 = vpop.f32.mrb[0].mxu0
      %v4678 = vadd.f32 0.0, %v4677
      %v4679 = vpop.f32.mrb[0].mxu0
      %v4680 = vpop.f32.mrb[0].mxu0
      %v4681 = vadd.f32 0.0, %v4680
      %v4682 = vpop.f32.mrb[0].mxu0
      %4683 = vmatprep.mubr.bf16.mxu0 0
      %4684 = vmatmul.mubr.bf16.gmra.mrb[0].mxu0 %v4555
      %v4685 = vpop.f32.mrb[0].mxu0
      %v4686 = vadd.f32 0.0, %v4685
      %v4687 = vpop.f32.mrb[0].mxu0
      %v4688 = vpop.f32.mrb[0].mxu0
      %v4689 = vadd.f32 0.0, %v4688
      %v4690 = vpop.f32.mrb[0].mxu0
      %4691 = vmatprep.mubr.bf16.mxu0 0
      %4692 = vmatmul.mubr.bf16.gmra.mrb[0].mxu0 %v4557
      %v4693 = vpop.f32.mrb[0].mxu0
      %v4694 = vadd.f32 0.0, %v4693
      %v4695 = vpop.f32.mrb[0].mxu0
      %v4696 = vpop.f32.mrb[0].mxu0
      %v4697 = vadd.f32 0.0, %v4696
      %v4698 = vpop.f32.mrb[0].mxu0
      %4699 = vmatprep.mubr.bf16.mxu0 0
      %4700 = vmatmul.mubr.bf16.gmra.mrb[0].mxu0 %v4559
      %v4701 = vpop.f32.mrb[0].mxu0
      %v4702 = vadd.f32 0.0, %v4701
      %v4703 = vpop.f32.mrb[0].mxu0
      %v4704 = vpop.f32.mrb[0].mxu0
      %v4705 = vadd.f32 0.0, %v4704
      %v4706 = vpop.f32.mrb[0].mxu0
      %4707 = vmatprep.mubr.bf16.mxu0 0
      %4708 = vmatmul.mubr.bf16.gmra.mrb[0].mxu0 %v4561
      %v4709 = vpop.f32.mrb[0].mxu0
      %v4710 = vadd.f32 0.0, %v4709
      %v4711 = vpop.f32.mrb[0].mxu0
      %v4712 = vpop.f32.mrb[0].mxu0
      %v4713 = vadd.f32 0.0, %v4712
      %v4714 = vpop.f32.mrb[0].mxu0
      %4715 = vmatprep.mubr.bf16.mxu0 0
      %4716 = vmatmul.mubr.bf16.gmra.mrb[0].mxu0 %v4563
      %v4717 = vpop.f32.mrb[0].mxu0
      %v4718 = vadd.f32 0.0, %v4717
      %v4719 = vpop.f32.mrb[0].mxu0
      %v4720 = vpop.f32.mrb[0].mxu0
      %v4721 = vadd.f32 0.0, %v4720
      %v4722 = vpop.f32.mrb[0].mxu0
      %4723 = vmatprep.mubr.bf16.mxu0 0
      %4724 = vmatmul.mubr.bf16.gmra.mrb[0].mxu0 %v4565
      %v4725 = vpop.f32.mrb[0].mxu0
      %v4726 = vadd.f32 0.0, %v4725
      %v4727 = vpop.f32.mrb[0].mxu0
      %v4728 = vpop.f32.mrb[0].mxu0
      %v4729 = vadd.f32 0.0, %v4728
      %v4730 = vpop.f32.mrb[0].mxu0
      %4731 = vdwg.mxu0
      %v4733 = vlaneseq
      %v4734 = vshrl.u32 %v4733, 7
      %v4735 = vsub.s32 0, %v4734
      %v4736 = vrot.slane %v3199, %v4735
      %v4738 = vmul.f32 %v4606, %v4736
      %v4739 = vmul.f32 %v4609, %v4736
      %v4740 = vmul.f32 %v4614, %v4736
      %v4741 = vmul.f32 %v4617, %v4736
      %v4742 = vmul.f32 %v4622, %v4736
      %v4743 = vmul.f32 %v4625, %v4736
      %v4744 = vmul.f32 %v4630, %v4736
      %v4745 = vmul.f32 %v4633, %v4736
      %v4746 = vmul.f32 %v4638, %v4736
      %v4747 = vmul.f32 %v4641, %v4736
      %v4748 = vmul.f32 %v4646, %v4736
      %v4749 = vmul.f32 %v4649, %v4736
      %v4750 = vmul.f32 %v4654, %v4736
      %v4751 = vmul.f32 %v4657, %v4736
      %v4752 = vmul.f32 %v4662, %v4736
      %v4753 = vmul.f32 %v4665, %v4736
      %v4754 = vmul.f32 %v4670, %v4736
      %v4755 = vmul.f32 %v4673, %v4736
      %v4756 = vmul.f32 %v4678, %v4736
      %v4757 = vmul.f32 %v4681, %v4736
      %v4758 = vmul.f32 %v4686, %v4736
      %v4759 = vmul.f32 %v4689, %v4736
      %v4760 = vmul.f32 %v4694, %v4736
      %v4761 = vmul.f32 %v4697, %v4736
      %v4762 = vmul.f32 %v4702, %v4736
      %v4763 = vmul.f32 %v4705, %v4736
      %v4764 = vmul.f32 %v4710, %v4736
      %v4765 = vmul.f32 %v4713, %v4736
      %v4766 = vmul.f32 %v4718, %v4736
      %v4767 = vmul.f32 %v4721, %v4736
      %v4768 = vmul.f32 %v4726, %v4736
      %v4769 = vmul.f32 %v4729, %v4736
      %v4771 = vlaneseq
      %v4772 = vshrl.u32 %v4771, 7
      %v4773 = vsub.s32 0, %v4772
      %v4774 = vrot.slane %v3200, %v4773
      %v4776 = vadd.f32 %v4738, %v4774
      %v4777 = vadd.f32 %v4739, %v4774
      %v4778 = vadd.f32 %v4740, %v4774
      %v4779 = vadd.f32 %v4741, %v4774
      %v4780 = vadd.f32 %v4742, %v4774
      %v4781 = vadd.f32 %v4743, %v4774
      %v4782 = vadd.f32 %v4744, %v4774
      %v4783 = vadd.f32 %v4745, %v4774
      %v4784 = vadd.f32 %v4746, %v4774
      %v4785 = vadd.f32 %v4747, %v4774
      %v4786 = vadd.f32 %v4748, %v4774
      %v4787 = vadd.f32 %v4749, %v4774
      %v4788 = vadd.f32 %v4750, %v4774
      %v4789 = vadd.f32 %v4751, %v4774
      %v4790 = vadd.f32 %v4752, %v4774
      %v4791 = vadd.f32 %v4753, %v4774
      %v4792 = vadd.f32 %v4754, %v4774
      %v4793 = vadd.f32 %v4755, %v4774
      %v4794 = vadd.f32 %v4756, %v4774
      %v4795 = vadd.f32 %v4757, %v4774
      %v4796 = vadd.f32 %v4758, %v4774
      %v4797 = vadd.f32 %v4759, %v4774
      %v4798 = vadd.f32 %v4760, %v4774
      %v4799 = vadd.f32 %v4761, %v4774
      %v4800 = vadd.f32 %v4762, %v4774
      %v4801 = vadd.f32 %v4763, %v4774
      %v4802 = vadd.f32 %v4764, %v4774
      %v4803 = vadd.f32 %v4765, %v4774
      %v4804 = vadd.f32 %v4766, %v4774
      %v4805 = vadd.f32 %v4767, %v4774
      %v4806 = vadd.f32 %v4768, %v4774
      %v4807 = vadd.f32 %v4769, %v4774
      %v4808 = vmax.f32 %v4776, 0.0
      %v4809 = vmax.f32 %v4777, 0.0
      %v4810 = vmax.f32 %v4778, 0.0
      %v4811 = vmax.f32 %v4779, 0.0
      %v4812 = vmax.f32 %v4780, 0.0
      %v4813 = vmax.f32 %v4781, 0.0
      %v4814 = vmax.f32 %v4782, 0.0
      %v4815 = vmax.f32 %v4783, 0.0
      %v4816 = vmax.f32 %v4784, 0.0
      %v4817 = vmax.f32 %v4785, 0.0
      %v4818 = vmax.f32 %v4786, 0.0
      %v4819 = vmax.f32 %v4787, 0.0
      %v4820 = vmax.f32 %v4788, 0.0
      %v4821 = vmax.f32 %v4789, 0.0
      %v4822 = vmax.f32 %v4790, 0.0
      %v4823 = vmax.f32 %v4791, 0.0
      %v4824 = vmax.f32 %v4792, 0.0
      %v4825 = vmax.f32 %v4793, 0.0
      %v4826 = vmax.f32 %v4794, 0.0
      %v4827 = vmax.f32 %v4795, 0.0
      %v4828 = vmax.f32 %v4796, 0.0
      %v4829 = vmax.f32 %v4797, 0.0
      %v4830 = vmax.f32 %v4798, 0.0
      %v4831 = vmax.f32 %v4799, 0.0
      %v4832 = vmax.f32 %v4800, 0.0
      %v4833 = vmax.f32 %v4801, 0.0
      %v4834 = vmax.f32 %v4802, 0.0
      %v4835 = vmax.f32 %v4803, 0.0
      %v4836 = vmax.f32 %v4804, 0.0
      %v4837 = vmax.f32 %v4805, 0.0
      %v4838 = vmax.f32 %v4806, 0.0
      %v4839 = vmax.f32 %v4807, 0.0
      %4840 = vst.msk [vmem:[%s318] sm:$0xff] %vm1995, %v4808
      %4841 = vst.msk [vmem:[%s318 + $0x8] sm:$0xff] %vm1995, %v4809
      %4842 = vst.msk [vmem:[%s318 + $0x10] sm:$0xff] %vm1995, %v4810
      %4843 = vst.msk [vmem:[%s318 + $0x18] sm:$0xff] %vm1995, %v4811
      %4844 = vst.msk [vmem:[%s318 + $0x20] sm:$0xff] %vm1995, %v4812
      %4845 = vst.msk [vmem:[%s318 + $0x28] sm:$0xff] %vm1995, %v4813
      %4846 = vst.msk [vmem:[%s318 + $0x30] sm:$0xff] %vm1995, %v4814
      %4847 = vst.msk [vmem:[%s318 + $0x38] sm:$0xff] %vm1995, %v4815
      %4848 = vst.msk [vmem:[%s318 + $0x40] sm:$0xff] %vm1995, %v4816
      %4849 = vst.msk [vmem:[%s318 + $0x48] sm:$0xff] %vm1995, %v4817
      %4850 = vst.msk [vmem:[%s318 + $0x50] sm:$0xff] %vm1995, %v4818
      %4851 = vst.msk [vmem:[%s318 + $0x58] sm:$0xff] %vm1995, %v4819
      %4852 = vst.msk [vmem:[%s318 + $0x60] sm:$0xff] %vm1995, %v4820
      %4853 = vst.msk [vmem:[%s318 + $0x68] sm:$0xff] %vm1995, %v4821
      %4854 = vst.msk [vmem:[%s318 + $0x70] sm:$0xff] %vm1995, %v4822
      %4855 = vst.msk [vmem:[%s318 + $0x78] sm:$0xff] %vm1995, %v4823
      %4856 = vst.msk [vmem:[%s318 + $0x80] sm:$0xff] %vm1995, %v4824
      %4857 = vst.msk [vmem:[%s318 + $0x88] sm:$0xff] %vm1995, %v4825
      %4858 = vst.msk [vmem:[%s318 + $0x90] sm:$0xff] %vm1995, %v4826
      %4859 = vst.msk [vmem:[%s318 + $0x98] sm:$0xff] %vm1995, %v4827
      %4860 = vst.msk [vmem:[%s318 + $0xa0] sm:$0xff] %vm1995, %v4828
      %4861 = vst.msk [vmem:[%s318 + $0xa8] sm:$0xff] %vm1995, %v4829
      %4862 = vst.msk [vmem:[%s318 + $0xb0] sm:$0xff] %vm1995, %v4830
      %4863 = vst.msk [vmem:[%s318 + $0xb8] sm:$0xff] %vm1995, %v4831
      %4864 = vst.msk [vmem:[%s318 + $0xc0] sm:$0xff] %vm1995, %v4832
      %4865 = vst.msk [vmem:[%s318 + $0xc8] sm:$0xff] %vm1995, %v4833
      %4866 = vst.msk [vmem:[%s318 + $0xd0] sm:$0xff] %vm1995, %v4834
      %4867 = vst.msk [vmem:[%s318 + $0xd8] sm:$0xff] %vm1995, %v4835
      %4868 = vst.msk [vmem:[%s318 + $0xe0] sm:$0xff] %vm1995, %v4836
      %4869 = vst.msk [vmem:[%s318 + $0xe8] sm:$0xff] %vm1995, %v4837
      %4870 = vst.msk [vmem:[%s318 + $0xf0] sm:$0xff] %vm1995, %v4838
      %4871 = vst.msk [vmem:[%s318 + $0xf8] sm:$0xff] %vm1995, %v4839
      %v4872 = vsel %vm1995, %v4808, -inf
      %v4873 = vsel %vm1995, %v4810, -inf
      %v4874 = vmax.f32 %v4872, %v4873
      %v4875 = vsel %vm1995, %v4809, -inf
      %v4876 = vsel %vm1995, %v4811, -inf
      %v4877 = vmax.f32 %v4875, %v4876
      %v4878 = vsel %vm1995, %v4812, -inf
      %v4879 = vsel %vm1995, %v4814, -inf
      %v4880 = vmax.f32 %v4878, %v4879
      %v4881 = vsel %vm1995, %v4813, -inf
      %v4882 = vsel %vm1995, %v4815, -inf
      %v4883 = vmax.f32 %v4881, %v4882
      %v4884 = vsel %vm1995, %v4816, -inf
      %v4885 = vsel %vm1995, %v4818, -inf
      %v4886 = vmax.f32 %v4884, %v4885
      %v4887 = vsel %vm1995, %v4817, -inf
      %v4888 = vsel %vm1995, %v4819, -inf
      %v4889 = vmax.f32 %v4887, %v4888
      %v4890 = vsel %vm1995, %v4820, -inf
      %v4891 = vsel %vm1995, %v4822, -inf
      %v4892 = vmax.f32 %v4890, %v4891
      %v4893 = vsel %vm1995, %v4821, -inf
      %v4894 = vsel %vm1995, %v4823, -inf
      %v4895 = vmax.f32 %v4893, %v4894
      %v4896 = vsel %vm1995, %v4824, -inf
      %v4897 = vsel %vm1995, %v4826, -inf
      %v4898 = vmax.f32 %v4896, %v4897
      %v4899 = vsel %vm1995, %v4825, -inf
      %v4900 = vsel %vm1995, %v4827, -inf
      %v4901 = vmax.f32 %v4899, %v4900
      %v4902 = vsel %vm1995, %v4828, -inf
      %v4903 = vsel %vm1995, %v4830, -inf
      %v4904 = vmax.f32 %v4902, %v4903
      %v4905 = vsel %vm1995, %v4829, -inf
      %v4906 = vsel %vm1995, %v4831, -inf
      %v4907 = vmax.f32 %v4905, %v4906
      %v4908 = vsel %vm1995, %v4832, -inf
      %v4909 = vsel %vm1995, %v4834, -inf
      %v4910 = vmax.f32 %v4908, %v4909
      %v4911 = vsel %vm1995, %v4833, -inf
      %v4912 = vsel %vm1995, %v4835, -inf
      %v4913 = vmax.f32 %v4911, %v4912
      %v4914 = vsel %vm1995, %v4836, -inf
      %v4915 = vsel %vm1995, %v4838, -inf
      %v4916 = vmax.f32 %v4914, %v4915
      %v4917 = vsel %vm1995, %v4837, -inf
      %v4918 = vsel %vm1995, %v4839, -inf
      %v4919 = vmax.f32 %v4917, %v4918
      %v4936 = vcombine.high %v4874, %v4874
      %v4938 = vunpack.c.l.s4 1983009808
      %v4939 = vunpack.c.0.s8 %v4938
      %v4940 = vlaneseq
      %v4941 = vshrl.u32 %v4940, 7
      %v4942 = vsub.s32 %v4939, %v4941
      %v4943 = vrot.slane %v4874, %v4942
      %v4945 = vunpack.c.l.s4 1983009808
      %v4946 = vunpack.c.0.s8 %v4945
      %v4947 = vlaneseq
      %v4948 = vshrl.u32 %v4947, 7
      %v4949 = vsub.s32 %v4946, %v4948
      %v4950 = vrot.slane %v4936, %v4949
      %v4951 = vcombine.high %v4943, %v4943
      %v4952 = vcombine.high %v4950, %v4950
      %v4953 = vcombine.high %v4877, %v4877
      %v4955 = vunpack.c.l.s4 1983009808
      %v4956 = vunpack.c.0.s8 %v4955
      %v4957 = vlaneseq
      %v4958 = vshrl.u32 %v4957, 7
      %v4959 = vsub.s32 %v4956, %v4958
      %v4960 = vrot.slane %v4877, %v4959
      %v4962 = vunpack.c.l.s4 1983009808
      %v4963 = vunpack.c.0.s8 %v4962
      %v4964 = vlaneseq
      %v4965 = vshrl.u32 %v4964, 7
      %v4966 = vsub.s32 %v4963, %v4965
      %v4967 = vrot.slane %v4953, %v4966
      %v4968 = vcombine.high %v4960, %v4960
      %v4969 = vcombine.high %v4967, %v4967
      %v4970 = vcombine.high %v4880, %v4880
      %v4972 = vunpack.c.l.s4 1983009808
      %v4973 = vunpack.c.0.s8 %v4972
      %v4974 = vlaneseq
      %v4975 = vshrl.u32 %v4974, 7
      %v4976 = vsub.s32 %v4973, %v4975
      %v4977 = vrot.slane %v4880, %v4976
      %v4979 = vunpack.c.l.s4 1983009808
      %v4980 = vunpack.c.0.s8 %v4979
      %v4981 = vlaneseq
      %v4982 = vshrl.u32 %v4981, 7
      %v4983 = vsub.s32 %v4980, %v4982
      %v4984 = vrot.slane %v4970, %v4983
      %v4985 = vcombine.high %v4977, %v4977
      %v4986 = vcombine.high %v4984, %v4984
      %v4987 = vcombine.high %v4883, %v4883
      %v4989 = vunpack.c.l.s4 1983009808
      %v4990 = vunpack.c.0.s8 %v4989
      %v4991 = vlaneseq
      %v4992 = vshrl.u32 %v4991, 7
      %v4993 = vsub.s32 %v4990, %v4992
      %v4994 = vrot.slane %v4883, %v4993
      %v4996 = vunpack.c.l.s4 1983009808
      %v4997 = vunpack.c.0.s8 %v4996
      %v4998 = vlaneseq
      %v4999 = vshrl.u32 %v4998, 7
      %v5000 = vsub.s32 %v4997, %v4999
      %v5001 = vrot.slane %v4987, %v5000
      %v5002 = vcombine.high %v4994, %v4994
      %v5003 = vcombine.high %v5001, %v5001
      %v5004 = vcombine.high %v4886, %v4886
      %v5006 = vunpack.c.l.s4 1983009808
      %v5007 = vunpack.c.0.s8 %v5006
      %v5008 = vlaneseq
      %v5009 = vshrl.u32 %v5008, 7
      %v5010 = vsub.s32 %v5007, %v5009
      %v5011 = vrot.slane %v4886, %v5010
      %v5013 = vunpack.c.l.s4 1983009808
      %v5014 = vunpack.c.0.s8 %v5013
      %v5015 = vlaneseq
      %v5016 = vshrl.u32 %v5015, 7
      %v5017 = vsub.s32 %v5014, %v5016
      %v5018 = vrot.slane %v5004, %v5017
      %v5019 = vcombine.high %v5011, %v5011
      %v5020 = vcombine.high %v5018, %v5018
      %v5021 = vcombine.high %v4889, %v4889
      %v5023 = vunpack.c.l.s4 1983009808
      %v5024 = vunpack.c.0.s8 %v5023
      %v5025 = vlaneseq
      %v5026 = vshrl.u32 %v5025, 7
      %v5027 = vsub.s32 %v5024, %v5026
      %v5028 = vrot.slane %v4889, %v5027
      %v5030 = vunpack.c.l.s4 1983009808
      %v5031 = vunpack.c.0.s8 %v5030
      %v5032 = vlaneseq
      %v5033 = vshrl.u32 %v5032, 7
      %v5034 = vsub.s32 %v5031, %v5033
      %v5035 = vrot.slane %v5021, %v5034
      %v5036 = vcombine.high %v5028, %v5028
      %v5037 = vcombine.high %v5035, %v5035
      %v5038 = vcombine.high %v4892, %v4892
      %v5040 = vunpack.c.l.s4 1983009808
      %v5041 = vunpack.c.0.s8 %v5040
      %v5042 = vlaneseq
      %v5043 = vshrl.u32 %v5042, 7
      %v5044 = vsub.s32 %v5041, %v5043
      %v5045 = vrot.slane %v4892, %v5044
      %v5047 = vunpack.c.l.s4 1983009808
      %v5048 = vunpack.c.0.s8 %v5047
      %v5049 = vlaneseq
      %v5050 = vshrl.u32 %v5049, 7
      %v5051 = vsub.s32 %v5048, %v5050
      %v5052 = vrot.slane %v5038, %v5051
      %v5053 = vcombine.high %v5045, %v5045
      %v5054 = vcombine.high %v5052, %v5052
      %v5055 = vcombine.high %v4895, %v4895
      %v5057 = vunpack.c.l.s4 1983009808
      %v5058 = vunpack.c.0.s8 %v5057
      %v5059 = vlaneseq
      %v5060 = vshrl.u32 %v5059, 7
      %v5061 = vsub.s32 %v5058, %v5060
      %v5062 = vrot.slane %v4895, %v5061
      %v5064 = vunpack.c.l.s4 1983009808
      %v5065 = vunpack.c.0.s8 %v5064
      %v5066 = vlaneseq
      %v5067 = vshrl.u32 %v5066, 7
      %v5068 = vsub.s32 %v5065, %v5067
      %v5069 = vrot.slane %v5055, %v5068
      %v5070 = vcombine.high %v5062, %v5062
      %v5071 = vcombine.high %v5069, %v5069
      %v5072 = vcombine.high %v4898, %v4898
      %v5074 = vunpack.c.l.s4 1983009808
      %v5075 = vunpack.c.0.s8 %v5074
      %v5076 = vlaneseq
      %v5077 = vshrl.u32 %v5076, 7
      %v5078 = vsub.s32 %v5075, %v5077
      %v5079 = vrot.slane %v4898, %v5078
      %v5081 = vunpack.c.l.s4 1983009808
      %v5082 = vunpack.c.0.s8 %v5081
      %v5083 = vlaneseq
      %v5084 = vshrl.u32 %v5083, 7
      %v5085 = vsub.s32 %v5082, %v5084
      %v5086 = vrot.slane %v5072, %v5085
      %v5087 = vcombine.high %v5079, %v5079
      %v5088 = vcombine.high %v5086, %v5086
      %v5089 = vcombine.high %v4901, %v4901
      %v5091 = vunpack.c.l.s4 1983009808
      %v5092 = vunpack.c.0.s8 %v5091
      %v5093 = vlaneseq
      %v5094 = vshrl.u32 %v5093, 7
      %v5095 = vsub.s32 %v5092, %v5094
      %v5096 = vrot.slane %v4901, %v5095
      %v5098 = vunpack.c.l.s4 1983009808
      %v5099 = vunpack.c.0.s8 %v5098
      %v5100 = vlaneseq
      %v5101 = vshrl.u32 %v5100, 7
      %v5102 = vsub.s32 %v5099, %v5101
      %v5103 = vrot.slane %v5089, %v5102
      %v5104 = vcombine.high %v5096, %v5096
      %v5105 = vcombine.high %v5103, %v5103
      %v5106 = vcombine.high %v4904, %v4904
      %v5108 = vunpack.c.l.s4 1983009808
      %v5109 = vunpack.c.0.s8 %v5108
      %v5110 = vlaneseq
      %v5111 = vshrl.u32 %v5110, 7
      %v5112 = vsub.s32 %v5109, %v5111
      %v5113 = vrot.slane %v4904, %v5112
      %v5115 = vunpack.c.l.s4 1983009808
      %v5116 = vunpack.c.0.s8 %v5115
      %v5117 = vlaneseq
      %v5118 = vshrl.u32 %v5117, 7
      %v5119 = vsub.s32 %v5116, %v5118
      %v5120 = vrot.slane %v5106, %v5119
      %v5121 = vcombine.high %v5113, %v5113
      %v5122 = vcombine.high %v5120, %v5120
      %v5123 = vcombine.high %v4907, %v4907
      %v5125 = vunpack.c.l.s4 1983009808
      %v5126 = vunpack.c.0.s8 %v5125
      %v5127 = vlaneseq
      %v5128 = vshrl.u32 %v5127, 7
      %v5129 = vsub.s32 %v5126, %v5128
      %v5130 = vrot.slane %v4907, %v5129
      %v5132 = vunpack.c.l.s4 1983009808
      %v5133 = vunpack.c.0.s8 %v5132
      %v5134 = vlaneseq
      %v5135 = vshrl.u32 %v5134, 7
      %v5136 = vsub.s32 %v5133, %v5135
      %v5137 = vrot.slane %v5123, %v5136
      %v5138 = vcombine.high %v5130, %v5130
      %v5139 = vcombine.high %v5137, %v5137
      %v5140 = vcombine.high %v4910, %v4910
      %v5142 = vunpack.c.l.s4 1983009808
      %v5143 = vunpack.c.0.s8 %v5142
      %v5144 = vlaneseq
      %v5145 = vshrl.u32 %v5144, 7
      %v5146 = vsub.s32 %v5143, %v5145
      %v5147 = vrot.slane %v4910, %v5146
      %v5149 = vunpack.c.l.s4 1983009808
      %v5150 = vunpack.c.0.s8 %v5149
      %v5151 = vlaneseq
      %v5152 = vshrl.u32 %v5151, 7
      %v5153 = vsub.s32 %v5150, %v5152
      %v5154 = vrot.slane %v5140, %v5153
      %v5155 = vcombine.high %v5147, %v5147
      %v5156 = vcombine.high %v5154, %v5154
      %v5157 = vcombine.high %v4913, %v4913
      %v5159 = vunpack.c.l.s4 1983009808
      %v5160 = vunpack.c.0.s8 %v5159
      %v5161 = vlaneseq
      %v5162 = vshrl.u32 %v5161, 7
      %v5163 = vsub.s32 %v5160, %v5162
      %v5164 = vrot.slane %v4913, %v5163
      %v5166 = vunpack.c.l.s4 1983009808
      %v5167 = vunpack.c.0.s8 %v5166
      %v5168 = vlaneseq
      %v5169 = vshrl.u32 %v5168, 7
      %v5170 = vsub.s32 %v5167, %v5169
      %v5171 = vrot.slane %v5157, %v5170
      %v5172 = vcombine.high %v5164, %v5164
      %v5173 = vcombine.high %v5171, %v5171
      %v5174 = vcombine.high %v4916, %v4916
      %v5176 = vunpack.c.l.s4 1983009808
      %v5177 = vunpack.c.0.s8 %v5176
      %v5178 = vlaneseq
      %v5179 = vshrl.u32 %v5178, 7
      %v5180 = vsub.s32 %v5177, %v5179
      %v5181 = vrot.slane %v4916, %v5180
      %v5183 = vunpack.c.l.s4 1983009808
      %v5184 = vunpack.c.0.s8 %v5183
      %v5185 = vlaneseq
      %v5186 = vshrl.u32 %v5185, 7
      %v5187 = vsub.s32 %v5184, %v5186
      %v5188 = vrot.slane %v5174, %v5187
      %v5189 = vcombine.high %v5181, %v5181
      %v5190 = vcombine.high %v5188, %v5188
      %v5191 = vcombine.high %v4919, %v4919
      %v5193 = vunpack.c.l.s4 1983009808
      %v5194 = vunpack.c.0.s8 %v5193
      %v5195 = vlaneseq
      %v5196 = vshrl.u32 %v5195, 7
      %v5197 = vsub.s32 %v5194, %v5196
      %v5198 = vrot.slane %v4919, %v5197
      %v5200 = vunpack.c.l.s4 1983009808
      %v5201 = vunpack.c.0.s8 %v5200
      %v5202 = vlaneseq
      %v5203 = vshrl.u32 %v5202, 7
      %v5204 = vsub.s32 %v5201, %v5203
      %v5205 = vrot.slane %v5191, %v5204
      %v5206 = vcombine.high %v5198, %v5198
      %v5207 = vcombine.high %v5205, %v5205
      %vm5272 = vcmask 58368
      %v5273 = vsel %vm5272, %v4943, -inf
      %v5274 = vrot.slane %v5273, 4
      %v5275 = vmax.f32 %v5273, %v5274
      %v5276 = vrot.slane %v5275, 2
      %v5277 = vmax.f32 %v5275, %v5276
      %v5278 = vrot.slane %v5277, 1
      %v5279 = vmax.f32 %v5277, %v5278
      %v5280 = vsel %vm5272, %v4951, -inf
      %v5281 = vrot.slane %v5280, 4
      %v5282 = vmax.f32 %v5280, %v5281
      %v5283 = vrot.slane %v5282, 2
      %v5284 = vmax.f32 %v5282, %v5283
      %v5285 = vrot.slane %v5284, 1
      %v5286 = vmax.f32 %v5284, %v5285
      %v5287 = vsel %vm5272, %v4950, -inf
      %v5288 = vrot.slane %v5287, 4
      %v5289 = vmax.f32 %v5287, %v5288
      %v5290 = vrot.slane %v5289, 2
      %v5291 = vmax.f32 %v5289, %v5290
      %v5292 = vrot.slane %v5291, 1
      %v5293 = vmax.f32 %v5291, %v5292
      %v5294 = vsel %vm5272, %v4952, -inf
      %v5295 = vrot.slane %v5294, 4
      %v5296 = vmax.f32 %v5294, %v5295
      %v5297 = vrot.slane %v5296, 2
      %v5298 = vmax.f32 %v5296, %v5297
      %v5299 = vrot.slane %v5298, 1
      %v5300 = vmax.f32 %v5298, %v5299
      %v5301 = vsel %vm5272, %v4960, -inf
      %v5302 = vrot.slane %v5301, 4
      %v5303 = vmax.f32 %v5301, %v5302
      %v5304 = vrot.slane %v5303, 2
      %v5305 = vmax.f32 %v5303, %v5304
      %v5306 = vrot.slane %v5305, 1
      %v5307 = vmax.f32 %v5305, %v5306
      %v5308 = vsel %vm5272, %v4968, -inf
      %v5309 = vrot.slane %v5308, 4
      %v5310 = vmax.f32 %v5308, %v5309
      %v5311 = vrot.slane %v5310, 2
      %v5312 = vmax.f32 %v5310, %v5311
      %v5313 = vrot.slane %v5312, 1
      %v5314 = vmax.f32 %v5312, %v5313
      %v5315 = vsel %vm5272, %v4967, -inf
      %v5316 = vrot.slane %v5315, 4
      %v5317 = vmax.f32 %v5315, %v5316
      %v5318 = vrot.slane %v5317, 2
      %v5319 = vmax.f32 %v5317, %v5318
      %v5320 = vrot.slane %v5319, 1
      %v5321 = vmax.f32 %v5319, %v5320
      %v5322 = vsel %vm5272, %v4969, -inf
      %v5323 = vrot.slane %v5322, 4
      %v5324 = vmax.f32 %v5322, %v5323
      %v5325 = vrot.slane %v5324, 2
      %v5326 = vmax.f32 %v5324, %v5325
      %v5327 = vrot.slane %v5326, 1
      %v5328 = vmax.f32 %v5326, %v5327
      %v5329 = vsel %vm5272, %v4977, -inf
      %v5330 = vrot.slane %v5329, 4
      %v5331 = vmax.f32 %v5329, %v5330
      %v5332 = vrot.slane %v5331, 2
      %v5333 = vmax.f32 %v5331, %v5332
      %v5334 = vrot.slane %v5333, 1
      %v5335 = vmax.f32 %v5333, %v5334
      %v5336 = vsel %vm5272, %v4985, -inf
      %v5337 = vrot.slane %v5336, 4
      %v5338 = vmax.f32 %v5336, %v5337
      %v5339 = vrot.slane %v5338, 2
      %v5340 = vmax.f32 %v5338, %v5339
      %v5341 = vrot.slane %v5340, 1
      %v5342 = vmax.f32 %v5340, %v5341
      %v5343 = vsel %vm5272, %v4984, -inf
      %v5344 = vrot.slane %v5343, 4
      %v5345 = vmax.f32 %v5343, %v5344
      %v5346 = vrot.slane %v5345, 2
      %v5347 = vmax.f32 %v5345, %v5346
      %v5348 = vrot.slane %v5347, 1
      %v5349 = vmax.f32 %v5347, %v5348
      %v5350 = vsel %vm5272, %v4986, -inf
      %v5351 = vrot.slane %v5350, 4
      %v5352 = vmax.f32 %v5350, %v5351
      %v5353 = vrot.slane %v5352, 2
      %v5354 = vmax.f32 %v5352, %v5353
      %v5355 = vrot.slane %v5354, 1
      %v5356 = vmax.f32 %v5354, %v5355
      %v5357 = vsel %vm5272, %v4994, -inf
      %v5358 = vrot.slane %v5357, 4
      %v5359 = vmax.f32 %v5357, %v5358
      %v5360 = vrot.slane %v5359, 2
      %v5361 = vmax.f32 %v5359, %v5360
      %v5362 = vrot.slane %v5361, 1
      %v5363 = vmax.f32 %v5361, %v5362
      %v5364 = vsel %vm5272, %v5002, -inf
      %v5365 = vrot.slane %v5364, 4
      %v5366 = vmax.f32 %v5364, %v5365
      %v5367 = vrot.slane %v5366, 2
      %v5368 = vmax.f32 %v5366, %v5367
      %v5369 = vrot.slane %v5368, 1
      %v5370 = vmax.f32 %v5368, %v5369
      %v5371 = vsel %vm5272, %v5001, -inf
      %v5372 = vrot.slane %v5371, 4
      %v5373 = vmax.f32 %v5371, %v5372
      %v5374 = vrot.slane %v5373, 2
      %v5375 = vmax.f32 %v5373, %v5374
      %v5376 = vrot.slane %v5375, 1
      %v5377 = vmax.f32 %v5375, %v5376
      %v5378 = vsel %vm5272, %v5003, -inf
      %v5379 = vrot.slane %v5378, 4
      %v5380 = vmax.f32 %v5378, %v5379
      %v5381 = vrot.slane %v5380, 2
      %v5382 = vmax.f32 %v5380, %v5381
      %v5383 = vrot.slane %v5382, 1
      %v5384 = vmax.f32 %v5382, %v5383
      %v5385 = vsel %vm5272, %v5011, -inf
      %v5386 = vrot.slane %v5385, 4
      %v5387 = vmax.f32 %v5385, %v5386
      %v5388 = vrot.slane %v5387, 2
      %v5389 = vmax.f32 %v5387, %v5388
      %v5390 = vrot.slane %v5389, 1
      %v5391 = vmax.f32 %v5389, %v5390
      %v5392 = vsel %vm5272, %v5019, -inf
      %v5393 = vrot.slane %v5392, 4
      %v5394 = vmax.f32 %v5392, %v5393
      %v5395 = vrot.slane %v5394, 2
      %v5396 = vmax.f32 %v5394, %v5395
      %v5397 = vrot.slane %v5396, 1
      %v5398 = vmax.f32 %v5396, %v5397
      %v5399 = vsel %vm5272, %v5018, -inf
      %v5400 = vrot.slane %v5399, 4
      %v5401 = vmax.f32 %v5399, %v5400
      %v5402 = vrot.slane %v5401, 2
      %v5403 = vmax.f32 %v5401, %v5402
      %v5404 = vrot.slane %v5403, 1
      %v5405 = vmax.f32 %v5403, %v5404
      %v5406 = vsel %vm5272, %v5020, -inf
      %v5407 = vrot.slane %v5406, 4
      %v5408 = vmax.f32 %v5406, %v5407
      %v5409 = vrot.slane %v5408, 2
      %v5410 = vmax.f32 %v5408, %v5409
      %v5411 = vrot.slane %v5410, 1
      %v5412 = vmax.f32 %v5410, %v5411
      %v5413 = vsel %vm5272, %v5028, -inf
      %v5414 = vrot.slane %v5413, 4
      %v5415 = vmax.f32 %v5413, %v5414
      %v5416 = vrot.slane %v5415, 2
      %v5417 = vmax.f32 %v5415, %v5416
      %v5418 = vrot.slane %v5417, 1
      %v5419 = vmax.f32 %v5417, %v5418
      %v5420 = vsel %vm5272, %v5036, -inf
      %v5421 = vrot.slane %v5420, 4
      %v5422 = vmax.f32 %v5420, %v5421
      %v5423 = vrot.slane %v5422, 2
      %v5424 = vmax.f32 %v5422, %v5423
      %v5425 = vrot.slane %v5424, 1
      %v5426 = vmax.f32 %v5424, %v5425
      %v5427 = vsel %vm5272, %v5035, -inf
      %v5428 = vrot.slane %v5427, 4
      %v5429 = vmax.f32 %v5427, %v5428
      %v5430 = vrot.slane %v5429, 2
      %v5431 = vmax.f32 %v5429, %v5430
      %v5432 = vrot.slane %v5431, 1
      %v5433 = vmax.f32 %v5431, %v5432
      %v5434 = vsel %vm5272, %v5037, -inf
      %v5435 = vrot.slane %v5434, 4
      %v5436 = vmax.f32 %v5434, %v5435
      %v5437 = vrot.slane %v5436, 2
      %v5438 = vmax.f32 %v5436, %v5437
      %v5439 = vrot.slane %v5438, 1
      %v5440 = vmax.f32 %v5438, %v5439
      %v5441 = vsel %vm5272, %v5045, -inf
      %v5442 = vrot.slane %v5441, 4
      %v5443 = vmax.f32 %v5441, %v5442
      %v5444 = vrot.slane %v5443, 2
      %v5445 = vmax.f32 %v5443, %v5444
      %v5446 = vrot.slane %v5445, 1
      %v5447 = vmax.f32 %v5445, %v5446
      %v5448 = vsel %vm5272, %v5053, -inf
      %v5449 = vrot.slane %v5448, 4
      %v5450 = vmax.f32 %v5448, %v5449
      %v5451 = vrot.slane %v5450, 2
      %v5452 = vmax.f32 %v5450, %v5451
      %v5453 = vrot.slane %v5452, 1
      %v5454 = vmax.f32 %v5452, %v5453
      %v5455 = vsel %vm5272, %v5052, -inf
      %v5456 = vrot.slane %v5455, 4
      %v5457 = vmax.f32 %v5455, %v5456
      %v5458 = vrot.slane %v5457, 2
      %v5459 = vmax.f32 %v5457, %v5458
      %v5460 = vrot.slane %v5459, 1
      %v5461 = vmax.f32 %v5459, %v5460
      %v5462 = vsel %vm5272, %v5054, -inf
      %v5463 = vrot.slane %v5462, 4
      %v5464 = vmax.f32 %v5462, %v5463
      %v5465 = vrot.slane %v5464, 2
      %v5466 = vmax.f32 %v5464, %v5465
      %v5467 = vrot.slane %v5466, 1
      %v5468 = vmax.f32 %v5466, %v5467
      %v5469 = vsel %vm5272, %v5062, -inf
      %v5470 = vrot.slane %v5469, 4
      %v5471 = vmax.f32 %v5469, %v5470
      %v5472 = vrot.slane %v5471, 2
      %v5473 = vmax.f32 %v5471, %v5472
      %v5474 = vrot.slane %v5473, 1
      %v5475 = vmax.f32 %v5473, %v5474
      %v5476 = vsel %vm5272, %v5070, -inf
      %v5477 = vrot.slane %v5476, 4
      %v5478 = vmax.f32 %v5476, %v5477
      %v5479 = vrot.slane %v5478, 2
      %v5480 = vmax.f32 %v5478, %v5479
      %v5481 = vrot.slane %v5480, 1
      %v5482 = vmax.f32 %v5480, %v5481
      %v5483 = vsel %vm5272, %v5069, -inf
      %v5484 = vrot.slane %v5483, 4
      %v5485 = vmax.f32 %v5483, %v5484
      %v5486 = vrot.slane %v5485, 2
      %v5487 = vmax.f32 %v5485, %v5486
      %v5488 = vrot.slane %v5487, 1
      %v5489 = vmax.f32 %v5487, %v5488
      %v5490 = vsel %vm5272, %v5071, -inf
      %v5491 = vrot.slane %v5490, 4
      %v5492 = vmax.f32 %v5490, %v5491
      %v5493 = vrot.slane %v5492, 2
      %v5494 = vmax.f32 %v5492, %v5493
      %v5495 = vrot.slane %v5494, 1
      %v5496 = vmax.f32 %v5494, %v5495
      %v5497 = vsel %vm5272, %v5079, -inf
      %v5498 = vrot.slane %v5497, 4
      %v5499 = vmax.f32 %v5497, %v5498
      %v5500 = vrot.slane %v5499, 2
      %v5501 = vmax.f32 %v5499, %v5500
      %v5502 = vrot.slane %v5501, 1
      %v5503 = vmax.f32 %v5501, %v5502
      %v5504 = vsel %vm5272, %v5087, -inf
      %v5505 = vrot.slane %v5504, 4
      %v5506 = vmax.f32 %v5504, %v5505
      %v5507 = vrot.slane %v5506, 2
      %v5508 = vmax.f32 %v5506, %v5507
      %v5509 = vrot.slane %v5508, 1
      %v5510 = vmax.f32 %v5508, %v5509
      %v5511 = vsel %vm5272, %v5086, -inf
      %v5512 = vrot.slane %v5511, 4
      %v5513 = vmax.f32 %v5511, %v5512
      %v5514 = vrot.slane %v5513, 2
      %v5515 = vmax.f32 %v5513, %v5514
      %v5516 = vrot.slane %v5515, 1
      %v5517 = vmax.f32 %v5515, %v5516
      %v5518 = vsel %vm5272, %v5088, -inf
      %v5519 = vrot.slane %v5518, 4
      %v5520 = vmax.f32 %v5518, %v5519
      %v5521 = vrot.slane %v5520, 2
      %v5522 = vmax.f32 %v5520, %v5521
      %v5523 = vrot.slane %v5522, 1
      %v5524 = vmax.f32 %v5522, %v5523
      %v5525 = vsel %vm5272, %v5096, -inf
      %v5526 = vrot.slane %v5525, 4
      %v5527 = vmax.f32 %v5525, %v5526
      %v5528 = vrot.slane %v5527, 2
      %v5529 = vmax.f32 %v5527, %v5528
      %v5530 = vrot.slane %v5529, 1
      %v5531 = vmax.f32 %v5529, %v5530
      %v5532 = vsel %vm5272, %v5104, -inf
      %v5533 = vrot.slane %v5532, 4
      %v5534 = vmax.f32 %v5532, %v5533
      %v5535 = vrot.slane %v5534, 2
      %v5536 = vmax.f32 %v5534, %v5535
      %v5537 = vrot.slane %v5536, 1
      %v5538 = vmax.f32 %v5536, %v5537
      %v5539 = vsel %vm5272, %v5103, -inf
      %v5540 = vrot.slane %v5539, 4
      %v5541 = vmax.f32 %v5539, %v5540
      %v5542 = vrot.slane %v5541, 2
      %v5543 = vmax.f32 %v5541, %v5542
      %v5544 = vrot.slane %v5543, 1
      %v5545 = vmax.f32 %v5543, %v5544
      %v5546 = vsel %vm5272, %v5105, -inf
      %v5547 = vrot.slane %v5546, 4
      %v5548 = vmax.f32 %v5546, %v5547
      %v5549 = vrot.slane %v5548, 2
      %v5550 = vmax.f32 %v5548, %v5549
      %v5551 = vrot.slane %v5550, 1
      %v5552 = vmax.f32 %v5550, %v5551
      %v5553 = vsel %vm5272, %v5113, -inf
      %v5554 = vrot.slane %v5553, 4
      %v5555 = vmax.f32 %v5553, %v5554
      %v5556 = vrot.slane %v5555, 2
      %v5557 = vmax.f32 %v5555, %v5556
      %v5558 = vrot.slane %v5557, 1
      %v5559 = vmax.f32 %v5557, %v5558
      %v5560 = vsel %vm5272, %v5121, -inf
      %v5561 = vrot.slane %v5560, 4
      %v5562 = vmax.f32 %v5560, %v5561
      %v5563 = vrot.slane %v5562, 2
      %v5564 = vmax.f32 %v5562, %v5563
      %v5565 = vrot.slane %v5564, 1
      %v5566 = vmax.f32 %v5564, %v5565
      %v5567 = vsel %vm5272, %v5120, -inf
      %v5568 = vrot.slane %v5567, 4
      %v5569 = vmax.f32 %v5567, %v5568
      %v5570 = vrot.slane %v5569, 2
      %v5571 = vmax.f32 %v5569, %v5570
      %v5572 = vrot.slane %v5571, 1
      %v5573 = vmax.f32 %v5571, %v5572
      %v5574 = vsel %vm5272, %v5122, -inf
      %v5575 = vrot.slane %v5574, 4
      %v5576 = vmax.f32 %v5574, %v5575
      %v5577 = vrot.slane %v5576, 2
      %v5578 = vmax.f32 %v5576, %v5577
      %v5579 = vrot.slane %v5578, 1
      %v5580 = vmax.f32 %v5578, %v5579
      %v5581 = vsel %vm5272, %v5130, -inf
      %v5582 = vrot.slane %v5581, 4
      %v5583 = vmax.f32 %v5581, %v5582
      %v5584 = vrot.slane %v5583, 2
      %v5585 = vmax.f32 %v5583, %v5584
      %v5586 = vrot.slane %v5585, 1
      %v5587 = vmax.f32 %v5585, %v5586
      %v5588 = vsel %vm5272, %v5138, -inf
      %v5589 = vrot.slane %v5588, 4
      %v5590 = vmax.f32 %v5588, %v5589
      %v5591 = vrot.slane %v5590, 2
      %v5592 = vmax.f32 %v5590, %v5591
      %v5593 = vrot.slane %v5592, 1
      %v5594 = vmax.f32 %v5592, %v5593
      %v5595 = vsel %vm5272, %v5137, -inf
      %v5596 = vrot.slane %v5595, 4
      %v5597 = vmax.f32 %v5595, %v5596
      %v5598 = vrot.slane %v5597, 2
      %v5599 = vmax.f32 %v5597, %v5598
      %v5600 = vrot.slane %v5599, 1
      %v5601 = vmax.f32 %v5599, %v5600
      %v5602 = vsel %vm5272, %v5139, -inf
      %v5603 = vrot.slane %v5602, 4
      %v5604 = vmax.f32 %v5602, %v5603
      %v5605 = vrot.slane %v5604, 2
      %v5606 = vmax.f32 %v5604, %v5605
      %v5607 = vrot.slane %v5606, 1
      %v5608 = vmax.f32 %v5606, %v5607
      %v5609 = vsel %vm5272, %v5147, -inf
      %v5610 = vrot.slane %v5609, 4
      %v5611 = vmax.f32 %v5609, %v5610
      %v5612 = vrot.slane %v5611, 2
      %v5613 = vmax.f32 %v5611, %v5612
      %v5614 = vrot.slane %v5613, 1
      %v5615 = vmax.f32 %v5613, %v5614
      %v5616 = vsel %vm5272, %v5155, -inf
      %v5617 = vrot.slane %v5616, 4
      %v5618 = vmax.f32 %v5616, %v5617
      %v5619 = vrot.slane %v5618, 2
      %v5620 = vmax.f32 %v5618, %v5619
      %v5621 = vrot.slane %v5620, 1
      %v5622 = vmax.f32 %v5620, %v5621
      %v5623 = vsel %vm5272, %v5154, -inf
      %v5624 = vrot.slane %v5623, 4
      %v5625 = vmax.f32 %v5623, %v5624
      %v5626 = vrot.slane %v5625, 2
      %v5627 = vmax.f32 %v5625, %v5626
      %v5628 = vrot.slane %v5627, 1
      %v5629 = vmax.f32 %v5627, %v5628
      %v5630 = vsel %vm5272, %v5156, -inf
      %v5631 = vrot.slane %v5630, 4
      %v5632 = vmax.f32 %v5630, %v5631
      %v5633 = vrot.slane %v5632, 2
      %v5634 = vmax.f32 %v5632, %v5633
      %v5635 = vrot.slane %v5634, 1
      %v5636 = vmax.f32 %v5634, %v5635
      %v5637 = vsel %vm5272, %v5164, -inf
      %v5638 = vrot.slane %v5637, 4
      %v5639 = vmax.f32 %v5637, %v5638
      %v5640 = vrot.slane %v5639, 2
      %v5641 = vmax.f32 %v5639, %v5640
      %v5642 = vrot.slane %v5641, 1
      %v5643 = vmax.f32 %v5641, %v5642
      %v5644 = vsel %vm5272, %v5172, -inf
      %v5645 = vrot.slane %v5644, 4
      %v5646 = vmax.f32 %v5644, %v5645
      %v5647 = vrot.slane %v5646, 2
      %v5648 = vmax.f32 %v5646, %v5647
      %v5649 = vrot.slane %v5648, 1
      %v5650 = vmax.f32 %v5648, %v5649
      %v5651 = vsel %vm5272, %v5171, -inf
      %v5652 = vrot.slane %v5651, 4
      %v5653 = vmax.f32 %v5651, %v5652
      %v5654 = vrot.slane %v5653, 2
      %v5655 = vmax.f32 %v5653, %v5654
      %v5656 = vrot.slane %v5655, 1
      %v5657 = vmax.f32 %v5655, %v5656
      %v5658 = vsel %vm5272, %v5173, -inf
      %v5659 = vrot.slane %v5658, 4
      %v5660 = vmax.f32 %v5658, %v5659
      %v5661 = vrot.slane %v5660, 2
      %v5662 = vmax.f32 %v5660, %v5661
      %v5663 = vrot.slane %v5662, 1
      %v5664 = vmax.f32 %v5662, %v5663
      %v5665 = vsel %vm5272, %v5181, -inf
      %v5666 = vrot.slane %v5665, 4
      %v5667 = vmax.f32 %v5665, %v5666
      %v5668 = vrot.slane %v5667, 2
      %v5669 = vmax.f32 %v5667, %v5668
      %v5670 = vrot.slane %v5669, 1
      %v5671 = vmax.f32 %v5669, %v5670
      %v5672 = vsel %vm5272, %v5189, -inf
      %v5673 = vrot.slane %v5672, 4
      %v5674 = vmax.f32 %v5672, %v5673
      %v5675 = vrot.slane %v5674, 2
      %v5676 = vmax.f32 %v5674, %v5675
      %v5677 = vrot.slane %v5676, 1
      %v5678 = vmax.f32 %v5676, %v5677
      %v5679 = vsel %vm5272, %v5188, -inf
      %v5680 = vrot.slane %v5679, 4
      %v5681 = vmax.f32 %v5679, %v5680
      %v5682 = vrot.slane %v5681, 2
      %v5683 = vmax.f32 %v5681, %v5682
      %v5684 = vrot.slane %v5683, 1
      %v5685 = vmax.f32 %v5683, %v5684
      %v5686 = vsel %vm5272, %v5190, -inf
      %v5687 = vrot.slane %v5686, 4
      %v5688 = vmax.f32 %v5686, %v5687
      %v5689 = vrot.slane %v5688, 2
      %v5690 = vmax.f32 %v5688, %v5689
      %v5691 = vrot.slane %v5690, 1
      %v5692 = vmax.f32 %v5690, %v5691
      %v5693 = vsel %vm5272, %v5198, -inf
      %v5694 = vrot.slane %v5693, 4
      %v5695 = vmax.f32 %v5693, %v5694
      %v5696 = vrot.slane %v5695, 2
      %v5697 = vmax.f32 %v5695, %v5696
      %v5698 = vrot.slane %v5697, 1
      %v5699 = vmax.f32 %v5697, %v5698
      %v5700 = vsel %vm5272, %v5206, -inf
      %v5701 = vrot.slane %v5700, 4
      %v5702 = vmax.f32 %v5700, %v5701
      %v5703 = vrot.slane %v5702, 2
      %v5704 = vmax.f32 %v5702, %v5703
      %v5705 = vrot.slane %v5704, 1
      %v5706 = vmax.f32 %v5704, %v5705
      %v5707 = vsel %vm5272, %v5205, -inf
      %v5708 = vrot.slane %v5707, 4
      %v5709 = vmax.f32 %v5707, %v5708
      %v5710 = vrot.slane %v5709, 2
      %v5711 = vmax.f32 %v5709, %v5710
      %v5712 = vrot.slane %v5711, 1
      %v5713 = vmax.f32 %v5711, %v5712
      %v5714 = vsel %vm5272, %v5207, -inf
      %v5715 = vrot.slane %v5714, 4
      %v5716 = vmax.f32 %v5714, %v5715
      %v5717 = vrot.slane %v5716, 2
      %v5718 = vmax.f32 %v5716, %v5717
      %v5719 = vrot.slane %v5718, 1
      %v5720 = vmax.f32 %v5718, %v5719
      %vm5785 = vcmask 1041409
      %v5786 = vsel %vm5785, %v5286, %v5279
      %vm5787 = vcmask 1042434
      %v5788 = vsel %vm5787, %v5293, %v5786
      %vm5789 = vcmask 1043459
      %v5790 = vsel %vm5789, %v5300, %v5788
      %vm5791 = vcmask 1044484
      %v5792 = vsel %vm5791, %v5307, %v5790
      %vm5793 = vcmask 1045509
      %v5794 = vsel %vm5793, %v5314, %v5792
      %vm5795 = vcmask 1046534
      %v5796 = vsel %vm5795, %v5321, %v5794
      %vm5797 = vcmask 1047559
      %v5798 = vsel %vm5797, %v5328, %v5796
      %v5799 = vsel %vm5785, %v5342, %v5335
      %v5800 = vsel %vm5787, %v5349, %v5799
      %v5801 = vsel %vm5789, %v5356, %v5800
      %v5802 = vsel %vm5791, %v5363, %v5801
      %v5803 = vsel %vm5793, %v5370, %v5802
      %v5804 = vsel %vm5795, %v5377, %v5803
      %v5805 = vsel %vm5797, %v5384, %v5804
      %v5806 = vsel %vm5785, %v5398, %v5391
      %v5807 = vsel %vm5787, %v5405, %v5806
      %v5808 = vsel %vm5789, %v5412, %v5807
      %v5809 = vsel %vm5791, %v5419, %v5808
      %v5810 = vsel %vm5793, %v5426, %v5809
      %v5811 = vsel %vm5795, %v5433, %v5810
      %v5812 = vsel %vm5797, %v5440, %v5811
      %v5813 = vsel %vm5785, %v5454, %v5447
      %v5814 = vsel %vm5787, %v5461, %v5813
      %v5815 = vsel %vm5789, %v5468, %v5814
      %v5816 = vsel %vm5791, %v5475, %v5815
      %v5817 = vsel %vm5793, %v5482, %v5816
      %v5818 = vsel %vm5795, %v5489, %v5817
      %v5819 = vsel %vm5797, %v5496, %v5818
      %v5820 = vsel %vm5785, %v5510, %v5503
      %v5821 = vsel %vm5787, %v5517, %v5820
      %v5822 = vsel %vm5789, %v5524, %v5821
      %v5823 = vsel %vm5791, %v5531, %v5822
      %v5824 = vsel %vm5793, %v5538, %v5823
      %v5825 = vsel %vm5795, %v5545, %v5824
      %v5826 = vsel %vm5797, %v5552, %v5825
      %v5827 = vsel %vm5785, %v5566, %v5559
      %v5828 = vsel %vm5787, %v5573, %v5827
      %v5829 = vsel %vm5789, %v5580, %v5828
      %v5830 = vsel %vm5791, %v5587, %v5829
      %v5831 = vsel %vm5793, %v5594, %v5830
      %v5832 = vsel %vm5795, %v5601, %v5831
      %v5833 = vsel %vm5797, %v5608, %v5832
      %v5834 = vsel %vm5785, %v5622, %v5615
      %v5835 = vsel %vm5787, %v5629, %v5834
      %v5836 = vsel %vm5789, %v5636, %v5835
      %v5837 = vsel %vm5791, %v5643, %v5836
      %v5838 = vsel %vm5793, %v5650, %v5837
      %v5839 = vsel %vm5795, %v5657, %v5838
      %v5840 = vsel %vm5797, %v5664, %v5839
      %v5841 = vsel %vm5785, %v5678, %v5671
      %v5842 = vsel %vm5787, %v5685, %v5841
      %v5843 = vsel %vm5789, %v5692, %v5842
      %v5844 = vsel %vm5791, %v5699, %v5843
      %v5845 = vsel %vm5793, %v5706, %v5844
      %v5846 = vsel %vm5795, %v5713, %v5845
      %v5847 = vsel %vm5797, %v5720, %v5846
      %5856 = vst.msk [vmem:[%s313] sm:$0xff] %vm1995, %v5798
      %5857 = vst.msk [vmem:[%s313 + $0x8] sm:$0xff] %vm1995, %v5805
      %5858 = vst.msk [vmem:[%s313 + $0x10] sm:$0xff] %vm1995, %v5812
      %5859 = vst.msk [vmem:[%s313 + $0x18] sm:$0xff] %vm1995, %v5819
      %5860 = vst.msk [vmem:[%s313 + $0x20] sm:$0xff] %vm1995, %v5826
      %5861 = vst.msk [vmem:[%s313 + $0x28] sm:$0xff] %vm1995, %v5833
      %5862 = vst.msk [vmem:[%s313 + $0x30] sm:$0xff] %vm1995, %v5840
      %5863 = vst.msk [vmem:[%s313 + $0x38] sm:$0xff] %vm1995, %v5847
      %p5864 = scmp.lt.s32.totalorder %s20, 1
      %s5865 = scalar_select %p5864, %s20, 1
      %s5866 = smul.addr %s5865, 8
      %s5867 = smul.addr %s5866, 8
      %s5868 = scalar_lea.vmem %s7, %s5867
      %p5869 = scmp.lt.s32.totalorder %s20, 1
      %s5870 = scalar_select %p5869, %s20, 1
      %s5871 = smul.addr %s5870, 32
      %s5872 = smul.addr %s5871, 8
      %s5873 = scalar_lea.vmem %s8, %s5872
      // Predicated region
      $region49: #{downblock_forward.1} parent=47 // pred_check
        %p5874 = pneg %p190
      $region50: #{downblock_forward.1} parent=47 // pred_check_branch
        %5876 = sbr.rel (%p5874) target = $region52
      $region51: #{downblock_forward.1} parent=47 // pred_region
        _
      $region52: #{downblock_forward.1} parent=47 // pred_fallthru
        _
      // Predicated region
      $region53: #{downblock_forward.1} parent=47 // pred_check
        %p5877 = pneg %p216
      $region54: #{downblock_forward.1} parent=47 // pred_check_branch
        %5879 = sbr.rel (%p5877) target = $region56
      $region55: #{downblock_forward.1} parent=47 // pred_region
        _
      $region56: #{downblock_forward.1} parent=47 // pred_fallthru
        _
    $region48: #{downblock_forward.1} parent=5 // pred_fallthru
      _
    %p5880 = scmp.le.s32.totalorder 2, %s15
    // Predicated region
    $region57: #{downblock_forward.1} parent=5 // pred_check
      %p5881 = pneg %p5880
    $region58: #{downblock_forward.1} parent=5 // pred_check_branch
      %5883 = sbr.rel (%p5881) target = $region60
    $region59: #{downblock_forward.1} parent=5 // pred_region
      %s5884 = ssub.s32 %s15, 2
      // Predicated region
      $region61: #{downblock_forward.1} parent=59 // pred_check
        %p5885 = pneg %p196
      $region62: #{downblock_forward.1} parent=59 // pred_check_branch
        %5887 = sbr.rel (%p5885) target = $region64
      $region63: #{downblock_forward.1} parent=59 // pred_region
        %p5888 = scmp.lt.s32.totalorder %s21, 1
        %s5889 = scalar_select %p5888, %s21, 1
        %s5890 = smul.addr %s5889, 8
        %s5891 = smul.addr %s5890, 8
        %s5892 = scalar_lea.vmem %s7, %s5891
      $region64: #{downblock_forward.1} parent=59 // pred_fallthru
        _
      // Predicated region
      $region65: #{downblock_forward.1} parent=59 // pred_check
        %p5893 = pneg %p222
      $region66: #{downblock_forward.1} parent=59 // pred_check_branch
        %5895 = sbr.rel (%p5893) target = $region68
      $region67: #{downblock_forward.1} parent=59 // pred_region
        %p5896 = scmp.lt.s32.totalorder %s21, 1
        %s5897 = scalar_select %p5896, %s21, 1
        %s5898 = smul.addr %s5897, 32
        %s5899 = smul.addr %s5898, 8
        %s5900 = scalar_lea.vmem %s8, %s5899
      $region68: #{downblock_forward.1} parent=59 // pred_fallthru
        _
    $region60: #{downblock_forward.1} parent=5 // pred_fallthru
      _
  $region6: #{downblock_forward.1} parent=0 // loop_footer
    %s19 = sadd.s32 1, %s15
  $region7: #{downblock_forward.1} parent=0 // loop_footer_branch
    %14 = sbr.rel target = $region3
  $region8: #{downblock_forward.1} parent=0 // loop_exit
    _

</llo_original>
